<compile_context>
chip_gen: v7x
topology: tpu7x:2x2x1
jax: 0.10.0
libtpu: 0.0.40
codegen_flags: <defaults>
</compile_context>

<pallas_src>
import numpy as np
import jax
import jax.numpy as jnp
from jax.experimental import pallas as pl
from jax.experimental.pallas import tpu as pltpu


def _vmem_spec():
    return pl.BlockSpec(memory_space=pltpu.MemorySpace.VMEM)


# ----------------------------- Pallas kernels ------------------------------

def _conv_bn_relu_kernel(a_ref, w_ref, g_ref, b_ref, o_ref):
    # a: (M, K) bf16 im2col patches, w: (K, Cout) bf16, g/b: (1, Cout) f32.
    y = jnp.dot(a_ref[...], w_ref[...], preferred_element_type=jnp.float32)
    # BatchNorm2d in training mode: biased batch stats over all N*H*W rows,
    # computed in f32; output activation stored bf16.
    mean = jnp.mean(y, axis=0, keepdims=True)
    cent = y - mean
    var = jnp.mean(cent * cent, axis=0, keepdims=True)
    y_hat = cent * jax.lax.rsqrt(var + 1e-5)
    out = jnp.maximum(y_hat * g_ref[...] + b_ref[...], 0.0)
    o_ref[...] = out.astype(o_ref.dtype)


def _decoder_kernel(x5_ref, x3_ref, x2_ref, x1_ref,
                    wm3_ref, wm2_ref, wm1_ref, wf_ref,
                    bm3_ref, bm2_ref, bm1_ref, bf_ref,
                    ut4_ref, ut3_ref, ut2_ref, ut1_ref,
                    o_ref):
    # One batch element; transposed layout: every feature map is (C, h*w),
    # spatial flattened row-major on lanes.  Each stage exploits linearity:
    #   match(upsample(x)) + skip == upsample(matchW @ x + matchB) + skip
    # (valid because every upsample row sums to 1 and match is a 1x1 conv).
    def stage(y_bf16, wt_ref, b_ref, ut_ref, skip_ref):
        y = jnp.dot(wt_ref[...], y_bf16,
                    preferred_element_type=jnp.float32) + b_ref[...]   # (Cout, hw)
        up = jnp.dot(y.astype(jnp.bfloat16), ut_ref[...],
                     preferred_element_type=jnp.float32)               # (Cout, 4hw)
        return up + skip_ref[...]

    y = stage(x5_ref[...], wm3_ref, bm3_ref, ut4_ref, x3_ref)                 # (64, 16)
    y = stage(y.astype(jnp.bfloat16), wm2_ref, bm2_ref, ut3_ref, x2_ref)      # (32, 64)
    y = stage(y.astype(jnp.bfloat16), wm1_ref, bm1_ref, ut2_ref, x1_ref)      # (16, 256)

    # final_conv (Cin -> 1) + scalar bias (SMEM), last 2x upsample, sigmoid.
    z = jnp.dot(wf_ref[...], y.astype(jnp.bfloat16),
                preferred_element_type=jnp.float32) + bf_ref[0, 0]            # (1, 256)
    z = jnp.dot(z.astype(jnp.bfloat16), ut1_ref[...],
                preferred_element_type=jnp.float32)                           # (1, 4hw)
    # Exact sigmoid (divide keeps the output strictly in [0, 1]);
    # pl.reciprocal(approx=True) would ride the EUP but may overshoot 1.0.
    o_ref[...] = 1.0 / (1.0 + jnp.exp(-z))


# ------------------------------ JAX wrappers --------------------------------

def _extract_patches(x, ksize, stride, pad):
    # x: (N, H, W, C) -> (N, Ho, Wo, ksize*ksize*C); patch order (kh, kw, cin)
    # matches the weight reshape below (cross-correlation like nn.Conv2d).
    # TODO(synk): at real resolutions this im2col should move in-kernel as a
    # 9-tap shifted-slice accumulation to avoid the 9x HBM expansion.
    xp = jnp.pad(x, ((0, 0), (pad, pad), (pad, pad), (0, 0)))
    _, Hp, Wp, _ = xp.shape
    Ho = (Hp - ksize) // stride + 1
    Wo = (Wp - ksize) // stride + 1
    cols = []
    for di in range(ksize):
        for dj in range(ksize):
            cols.append(
                xp[:, di:di + stride * Ho:stride, dj:dj + stride * Wo:stride, :])
    return jnp.concatenate(cols, axis=-1), Ho, Wo


def conv3x3_bn_relu(x, w_hwio, gamma, beta, stride):
    # x: (N, H, W, Cin) f32/bf16 -> (N, Ho, Wo, Cout) bf16.
    N, H, W, Cin = x.shape
    kh, kw, _, Cout = w_hwio.shape
    patches, Ho, Wo = _extract_patches(x, kh, stride, 1)
    M = N * Ho * Wo
    K = kh * kw * Cin
    a = patches.reshape(M, K).astype(jnp.bfloat16)
    wm = w_hwio.reshape(K, Cout).astype(jnp.bfloat16)
    # Pad skinny K (layer 1: 27) straight to one full 128-lane tile; wider Ks
    # (144/288/576/1152) are already sublane-aligned.
    Kp = 128 if K < 128 else ((K + 7) // 8) * 8
    if Kp != K:
        a = jnp.pad(a, ((0, 0), (0, Kp - K)))
        wm = jnp.pad(wm, ((0, Kp - K), (0, 0)))
    out = pl.pallas_call(
        _conv_bn_relu_kernel,
        out_shape=jax.ShapeDtypeStruct((M, Cout), jnp.bfloat16),
        in_specs=[_vmem_spec() for _ in range(4)],
        out_specs=_vmem_spec(),
    )(a, wm,
      gamma.reshape(1, Cout).astype(jnp.float32),
      beta.reshape(1, Cout).astype(jnp.float32))
    return out.reshape(N, Ho, Wo, Cout)


def _up1d(s):
    # (2s, s) matrix of nn.Upsample(scale=2, bilinear, align_corners=False).
    u = np.zeros((2 * s, s), dtype=np.float32)
    for o in range(2 * s):
        src = (o + 0.5) * 0.5 - 0.5
        f = int(np.floor(src))
        frac = src - f
        i0 = min(max(f, 0), s - 1)
        i1 = min(max(f + 1, 0), s - 1)
        u[o, i0] += 1.0 - frac
        u[o, i1] += frac
    return u


def _up2d(h, w):
    # Separable bilinear as one operator on the flattened (h, w) dim.
    u = np.kron(_up1d(h), _up1d(w))      # (4hw, hw)
    # The conv-before-upsample / bias-after-upsample commute requires every
    # output pixel's interpolation weights to sum to 1.
    assert np.allclose(u.sum(axis=1), 1.0)
    return u


def fused_decoder(x5, x3, x2, x1, p):
    # Whole decoder in one pallas_call, grid=(N,), transposed (C, h*w) layout.
    # x5: (N,2,2,128), x3: (N,4,4,64), x2: (N,8,8,32), x1: (N,16,16,16) bf16.
    # Returns NCHW (N, 1, 2*H1, 2*W1) f32 probabilities.
    N, h5, w5, c5 = x5.shape
    _, h3, w3, c3 = x3.shape
    _, h2, w2, c2 = x2.shape
    _, h1, w1, c1 = x1.shape
    assert (h3, w3) == (2 * h5, 2 * w5)
    assert (h2, w2) == (2 * h3, 2 * w3)
    assert (h1, w1) == (2 * h2, 2 * w2)

    def to_chw(t):
        # (N, H, W, C) -> (N, C, H*W).  Tiny XLA glue at these shapes.
        # TODO(synk): at real sizes emit this layout straight from the conv kernel.
        n, h, w, c = t.shape
        return jnp.transpose(t.reshape(n, h * w, c), (0, 2, 1))

    x5t, x3t, x2t, x1t = map(to_chw, (x5, x3, x2, x1))

    # Transposed upsample operators (hw, 4hw); interp weights exact in bf16.
    ut4 = jnp.asarray(_up2d(h5, w5).T, jnp.bfloat16)
    ut3 = jnp.asarray(_up2d(h3, w3).T, jnp.bfloat16)
    ut2 = jnp.asarray(_up2d(h2, w2).T, jnp.bfloat16)
    ut1 = jnp.asarray(_up2d(h1, w1).T, jnp.bfloat16)

    wm3t = p["wm3"].T.astype(jnp.bfloat16)          # (64, 128)
    wm2t = p["wm2"].T.astype(jnp.bfloat16)          # (32, 64)
    wm1t = p["wm1"].T.astype(jnp.bfloat16)          # (16, 32)
    wft = p["wf"].T.astype(jnp.bfloat16)            # (1, 16)
    bm3 = p["bm3"].reshape(c3, 1).astype(jnp.float32)
    bm2 = p["bm2"].reshape(c2, 1).astype(jnp.float32)
    bm1 = p["bm1"].reshape(c1, 1).astype(jnp.float32)
    bf = p["bf"].reshape(1, 1).astype(jnp.float32)  # scalar -> SMEM

    spatial_out = 4 * h1 * w1

    def vspec(shape):
        return pl.BlockSpec(shape, lambda n: (0, 0))

    out = pl.pallas_call(
        _decoder_kernel,
        out_shape=jax.ShapeDtypeStruct((N, 1, spatial_out), jnp.float32),
        grid=(N,),
        in_specs=[
            pl.BlockSpec((None, c5, h5 * w5), lambda n: (n, 0, 0)),
            pl.BlockSpec((None, c3, h3 * w3), lambda n: (n, 0, 0)),
            pl.BlockSpec((None, c2, h2 * w2), lambda n: (n, 0, 0)),
            pl.BlockSpec((None, c1, h1 * w1), lambda n: (n, 0, 0)),
            vspec((c3, c5)), vspec((c2, c3)), vspec((c1, c2)), vspec((1, c1)),
            vspec((c3, 1)), vspec((c2, 1)), vspec((c1, 1)),
            pl.BlockSpec(memory_space=pltpu.MemorySpace.SMEM),
            vspec((h5 * w5, 4 * h5 * w5)),
            vspec((h3 * w3, 4 * h3 * w3)),
            vspec((h2 * w2, 4 * h2 * w2)),
            vspec((h1 * w1, 4 * h1 * w1)),
        ],
        out_specs=pl.BlockSpec((None, 1, spatial_out), lambda n: (n, 0, 0)),
        compiler_params=pltpu.CompilerParams(
            dimension_semantics=("parallel",)),
    )(x5t, x3t, x2t, x1t, wm3t, wm2t, wm1t, wft, bm3, bm2, bm1, bf,
      ut4, ut3, ut2, ut1)
    # Flattened spatial is (2*h1, 2*w1) row-major; this reshape is free and
    # the result is already NCHW.
    return out.reshape(N, 1, 2 * h1, 2 * w1)


def bisenetv2_forward(x_nchw, p):
    x = jnp.transpose(x_nchw, (0, 2, 3, 1)).astype(jnp.float32)   # -> NHWC
    x1 = conv3x3_bn_relu(x,  p["w1"], p["g1"], p["b1"], stride=2)
    x2 = conv3x3_bn_relu(x1, p["w2"], p["g2"], p["b2"], stride=2)
    x3 = conv3x3_bn_relu(x2, p["w3"], p["g3"], p["b3"], stride=2)
    x4 = conv3x3_bn_relu(x3, p["w4"], p["g4"], p["b4"], stride=2)
    x5 = conv3x3_bn_relu(x4, p["w5"], p["g5"], p["b5"], stride=1)
    # One fused kernel for the whole decoder (3 match stages + final stage).
    return fused_decoder(x5, x3, x2, x1, p)


# ------------------------- deterministic parameters -------------------------

def init_params(key):
    ks = iter(jax.random.split(key, 32))
    p = {}
    convs = [(3, 16), (16, 32), (32, 64), (64, 128), (128, 128)]
    for n, (cin, cout) in enumerate(convs, start=1):
        p[f"w{n}"] = (jax.random.normal(next(ks), (3, 3, cin, cout), jnp.float32)
                      / jnp.sqrt(9.0 * cin))
        p[f"g{n}"] = 1.0 + 0.1 * jax.random.normal(next(ks), (cout,), jnp.float32)
        p[f"b{n}"] = 0.1 * jax.random.normal(next(ks), (cout,), jnp.float32)
    for name, cin, cout in [("m3", 128, 64), ("m2", 64, 32), ("m1", 32, 16)]:
        p[f"w{name}"] = (jax.random.normal(next(ks), (cin, cout), jnp.float32)
                         / jnp.sqrt(float(cin)))
        p[f"b{name}"] = 0.1 * jax.random.normal(next(ks), (cout,), jnp.float32)
    p["wf"] = jax.random.normal(next(ks), (16, 1), jnp.float32) / 4.0
    p["bf"] = 0.1 * jax.random.normal(next(ks), (1,), jnp.float32)
    return p


if __name__ == "__main__":
    key = jax.random.PRNGKey(0)
    pkey, xkey = jax.random.split(key)
    params = init_params(pkey)
    # Input must have 3 channels (layer1 is Conv2d(3, ...)); 32x32 spatial so
    # the four stride-2 convs give 16 -> 8 -> 4 -> 2 feature maps.
    x = jax.random.normal(xkey, (2, 3, 32, 32), jnp.float32)   # NCHW like PyTorch

    fwd = jax.jit(bisenetv2_forward)
    out = fwd(x, params)
    jax.block_until_ready(out)

    assert out.shape == (2, 1, 32, 32), out.shape
    assert out.dtype == jnp.float32
    assert bool(jnp.all(jnp.isfinite(out)))
    assert bool(jnp.all((out >= 0.0) & (out <= 1.0)))
    print("KERNEL_OK")
</pallas_src>

<mosaic_0001>
module attributes {stable_mosaic.version = 11 : i64} {
  func.func @_conv_bn_relu_kernel(%arg0: memref<512x128xbf16, #tpu.memory_space<vmem>>, %arg1: memref<128x16xbf16, #tpu.memory_space<vmem>>, %arg2: memref<1x16xf32, #tpu.memory_space<vmem>>, %arg3: memref<1x16xf32, #tpu.memory_space<vmem>>, %arg4: memref<512x16xbf16, #tpu.memory_space<vmem>>) attributes {dimension_semantics = [], scalar_prefetch = 0 : i64, scratch_operands = 0 : i64, tpu.core_type = #tpu.core_type<tc>} {
    %c0 = arith.constant 0 : index
    %c0_0 = arith.constant 0 : index
    %0 = vector.load %arg0[%c0, %c0_0] : memref<512x128xbf16, #tpu.memory_space<vmem>>, vector<512x128xbf16>
    %c0_1 = arith.constant 0 : index
    %c0_2 = arith.constant 0 : index
    %1 = vector.load %arg1[%c0_1, %c0_2] : memref<128x16xbf16, #tpu.memory_space<vmem>>, vector<128x16xbf16>
    %cst = arith.constant dense<0.000000e+00> : vector<512x16xf32>
    %2 = tpu.matmul %0, %1, %cst {dimension_numbers = #tpu.dot_dimension_numbers<[1], [0], [0], [1], [0, 0, 1, 1], [], []>} : vector<512x128xbf16>, vector<128x16xbf16>, vector<512x16xf32> -> vector<512x16xf32>
    %cst_3 = arith.constant dense<0.000000e+00> : vector<16xf32>
    %3 = vector.multi_reduction <add>, %2, %cst_3 [0] : vector<512x16xf32> to vector<16xf32>
    %4 = vector.shape_cast %3 : vector<16xf32> to vector<1x16xf32>
    %cst_4 = arith.constant 5.120000e+02 : f32
    %5 = vector.broadcast %cst_4 : f32 to vector<1x16xf32>
    %6 = arith.divf %4, %5 : vector<1x16xf32>
    %7 = vector.broadcast %6 : vector<1x16xf32> to vector<512x16xf32>
    %8 = arith.subf %2, %7 : vector<512x16xf32>
    %9 = arith.mulf %8, %8 : vector<512x16xf32>
    %cst_5 = arith.constant dense<0.000000e+00> : vector<16xf32>
    %10 = vector.multi_reduction <add>, %9, %cst_5 [0] : vector<512x16xf32> to vector<16xf32>
    %11 = vector.shape_cast %10 : vector<16xf32> to vector<1x16xf32>
    %cst_6 = arith.constant 5.120000e+02 : f32
    %12 = vector.broadcast %cst_6 : f32 to vector<1x16xf32>
    %13 = arith.divf %11, %12 : vector<1x16xf32>
    %cst_7 = arith.constant 9.99999974E-6 : f32
    %14 = vector.broadcast %cst_7 : f32 to vector<1x16xf32>
    %15 = arith.addf %13, %14 : vector<1x16xf32>
    %16 = math.rsqrt %15 : vector<1x16xf32>
    %17 = vector.broadcast %16 : vector<1x16xf32> to vector<512x16xf32>
    %18 = arith.mulf %8, %17 : vector<512x16xf32>
    %c0_8 = arith.constant 0 : index
    %c0_9 = arith.constant 0 : index
    %19 = vector.load %arg2[%c0_8, %c0_9] : memref<1x16xf32, #tpu.memory_space<vmem>>, vector<1x16xf32>
    %20 = vector.broadcast %19 : vector<1x16xf32> to vector<512x16xf32>
    %21 = arith.mulf %18, %20 : vector<512x16xf32>
    %c0_10 = arith.constant 0 : index
    %c0_11 = arith.constant 0 : index
    %22 = vector.load %arg3[%c0_10, %c0_11] : memref<1x16xf32, #tpu.memory_space<vmem>>, vector<1x16xf32>
    %23 = vector.broadcast %22 : vector<1x16xf32> to vector<512x16xf32>
    %24 = arith.addf %21, %23 : vector<512x16xf32>
    %cst_12 = arith.constant 0.000000e+00 : f32
    %25 = vector.broadcast %cst_12 : f32 to vector<512x16xf32>
    %26 = arith.maximumf %24, %25 : vector<512x16xf32>
    %27 = arith.truncf %26 : vector<512x16xf32> to vector<512x16xbf16>
    %c0_13 = arith.constant 0 : index
    %c0_14 = arith.constant 0 : index
    %28 = vector.load %arg4[%c0_13, %c0_14] : memref<512x16xbf16, #tpu.memory_space<vmem>>, vector<512x16xbf16>
    tpu.vector_store %arg4[%c0_13, %c0_14], %27 {strides = array<i32>} : memref<512x16xbf16, #tpu.memory_space<vmem>>, vector<512x16xbf16>,
    return
  }
}

module attributes {stable_mosaic.version = 11 : i64} {
  func.func @_conv_bn_relu_kernel(%arg0: memref<128x144xbf16, #tpu.memory_space<vmem>>, %arg1: memref<144x32xbf16, #tpu.memory_space<vmem>>, %arg2: memref<1x32xf32, #tpu.memory_space<vmem>>, %arg3: memref<1x32xf32, #tpu.memory_space<vmem>>, %arg4: memref<128x32xbf16, #tpu.memory_space<vmem>>) attributes {dimension_semantics = [], scalar_prefetch = 0 : i64, scratch_operands = 0 : i64, tpu.core_type = #tpu.core_type<tc>} {
    %c0 = arith.constant 0 : index
    %c0_0 = arith.constant 0 : index
    %0 = vector.load %arg0[%c0, %c0_0] : memref<128x144xbf16, #tpu.memory_space<vmem>>, vector<128x144xbf16>
    %c0_1 = arith.constant 0 : index
    %c0_2 = arith.constant 0 : index
    %1 = vector.load %arg1[%c0_1, %c0_2] : memref<144x32xbf16, #tpu.memory_space<vmem>>, vector<144x32xbf16>
    %cst = arith.constant dense<0.000000e+00> : vector<128x32xf32>
    %2 = tpu.matmul %0, %1, %cst {dimension_numbers = #tpu.dot_dimension_numbers<[1], [0], [0], [1], [0, 0, 1, 1], [], []>} : vector<128x144xbf16>, vector<144x32xbf16>, vector<128x32xf32> -> vector<128x32xf32>
    %cst_3 = arith.constant dense<0.000000e+00> : vector<32xf32>
    %3 = vector.multi_reduction <add>, %2, %cst_3 [0] : vector<128x32xf32> to vector<32xf32>
    %4 = vector.shape_cast %3 : vector<32xf32> to vector<1x32xf32>
    %cst_4 = arith.constant 1.280000e+02 : f32
    %5 = vector.broadcast %cst_4 : f32 to vector<1x32xf32>
    %6 = arith.divf %4, %5 : vector<1x32xf32>
    %7 = vector.broadcast %6 : vector<1x32xf32> to vector<128x32xf32>
    %8 = arith.subf %2, %7 : vector<128x32xf32>
    %9 = arith.mulf %8, %8 : vector<128x32xf32>
    %cst_5 = arith.constant dense<0.000000e+00> : vector<32xf32>
    %10 = vector.multi_reduction <add>, %9, %cst_5 [0] : vector<128x32xf32> to vector<32xf32>
    %11 = vector.shape_cast %10 : vector<32xf32> to vector<1x32xf32>
    %cst_6 = arith.constant 1.280000e+02 : f32
    %12 = vector.broadcast %cst_6 : f32 to vector<1x32xf32>
    %13 = arith.divf %11, %12 : vector<1x32xf32>
    %cst_7 = arith.constant 9.99999974E-6 : f32
    %14 = vector.broadcast %cst_7 : f32 to vector<1x32xf32>
    %15 = arith.addf %13, %14 : vector<1x32xf32>
    %16 = math.rsqrt %15 : vector<1x32xf32>
    %17 = vector.broadcast %16 : vector<1x32xf32> to vector<128x32xf32>
    %18 = arith.mulf %8, %17 : vector<128x32xf32>
    %c0_8 = arith.constant 0 : index
    %c0_9 = arith.constant 0 : index
    %19 = vector.load %arg2[%c0_8, %c0_9] : memref<1x32xf32, #tpu.memory_space<vmem>>, vector<1x32xf32>
    %20 = vector.broadcast %19 : vector<1x32xf32> to vector<128x32xf32>
    %21 = arith.mulf %18, %20 : vector<128x32xf32>
    %c0_10 = arith.constant 0 : index
    %c0_11 = arith.constant 0 : index
    %22 = vector.load %arg3[%c0_10, %c0_11] : memref<1x32xf32, #tpu.memory_space<vmem>>, vector<1x32xf32>
    %23 = vector.broadcast %22 : vector<1x32xf32> to vector<128x32xf32>
    %24 = arith.addf %21, %23 : vector<128x32xf32>
    %cst_12 = arith.constant 0.000000e+00 : f32
    %25 = vector.broadcast %cst_12 : f32 to vector<128x32xf32>
    %26 = arith.maximumf %24, %25 : vector<128x32xf32>
    %27 = arith.truncf %26 : vector<128x32xf32> to vector<128x32xbf16>
    %c0_13 = arith.constant 0 : index
    %c0_14 = arith.constant 0 : index
    %28 = vector.load %arg4[%c0_13, %c0_14] : memref<128x32xbf16, #tpu.memory_space<vmem>>, vector<128x32xbf16>
    tpu.vector_store %arg4[%c0_13, %c0_14], %27 {strides = array<i32>} : memref<128x32xbf16, #tpu.memory_space<vmem>>, vector<128x32xbf16>,
    return
  }
}

module attributes {stable_mosaic.version = 11 : i64} {
  func.func @_conv_bn_relu_kernel(%arg0: memref<32x288xbf16, #tpu.memory_space<vmem>>, %arg1: memref<288x64xbf16, #tpu.memory_space<vmem>>, %arg2: memref<1x64xf32, #tpu.memory_space<vmem>>, %arg3: memref<1x64xf32, #tpu.memory_space<vmem>>, %arg4: memref<32x64xbf16, #tpu.memory_space<vmem>>) attributes {dimension_semantics = [], scalar_prefetch = 0 : i64, scratch_operands = 0 : i64, tpu.core_type = #tpu.core_type<tc>} {
    %c0 = arith.constant 0 : index
    %c0_0 = arith.constant 0 : index
    %0 = vector.load %arg0[%c0, %c0_0] : memref<32x288xbf16, #tpu.memory_space<vmem>>, vector<32x288xbf16>
    %c0_1 = arith.constant 0 : index
    %c0_2 = arith.constant 0 : index
    %1 = vector.load %arg1[%c0_1, %c0_2] : memref<288x64xbf16, #tpu.memory_space<vmem>>, vector<288x64xbf16>
    %cst = arith.constant dense<0.000000e+00> : vector<32x64xf32>
    %2 = tpu.matmul %0, %1, %cst {dimension_numbers = #tpu.dot_dimension_numbers<[1], [0], [0], [1], [0, 0, 1, 1], [], []>} : vector<32x288xbf16>, vector<288x64xbf16>, vector<32x64xf32> -> vector<32x64xf32>
    %cst_3 = arith.constant dense<0.000000e+00> : vector<64xf32>
    %3 = vector.multi_reduction <add>, %2, %cst_3 [0] : vector<32x64xf32> to vector<64xf32>
    %4 = vector.shape_cast %3 : vector<64xf32> to vector<1x64xf32>
    %cst_4 = arith.constant 3.200000e+01 : f32
    %5 = vector.broadcast %cst_4 : f32 to vector<1x64xf32>
    %6 = arith.divf %4, %5 : vector<1x64xf32>
    %7 = vector.broadcast %6 : vector<1x64xf32> to vector<32x64xf32>
    %8 = arith.subf %2, %7 : vector<32x64xf32>
    %9 = arith.mulf %8, %8 : vector<32x64xf32>
    %cst_5 = arith.constant dense<0.000000e+00> : vector<64xf32>
    %10 = vector.multi_reduction <add>, %9, %cst_5 [0] : vector<32x64xf32> to vector<64xf32>
    %11 = vector.shape_cast %10 : vector<64xf32> to vector<1x64xf32>
    %cst_6 = arith.constant 3.200000e+01 : f32
    %12 = vector.broadcast %cst_6 : f32 to vector<1x64xf32>
    %13 = arith.divf %11, %12 : vector<1x64xf32>
    %cst_7 = arith.constant 9.99999974E-6 : f32
    %14 = vector.broadcast %cst_7 : f32 to vector<1x64xf32>
    %15 = arith.addf %13, %14 : vector<1x64xf32>
    %16 = math.rsqrt %15 : vector<1x64xf32>
    %17 = vector.broadcast %16 : vector<1x64xf32> to vector<32x64xf32>
    %18 = arith.mulf %8, %17 : vector<32x64xf32>
    %c0_8 = arith.constant 0 : index
    %c0_9 = arith.constant 0 : index
    %19 = vector.load %arg2[%c0_8, %c0_9] : memref<1x64xf32, #tpu.memory_space<vmem>>, vector<1x64xf32>
    %20 = vector.broadcast %19 : vector<1x64xf32> to vector<32x64xf32>
    %21 = arith.mulf %18, %20 : vector<32x64xf32>
    %c0_10 = arith.constant 0 : index
    %c0_11 = arith.constant 0 : index
    %22 = vector.load %arg3[%c0_10, %c0_11] : memref<1x64xf32, #tpu.memory_space<vmem>>, vector<1x64xf32>
    %23 = vector.broadcast %22 : vector<1x64xf32> to vector<32x64xf32>
    %24 = arith.addf %21, %23 : vector<32x64xf32>
    %cst_12 = arith.constant 0.000000e+00 : f32
    %25 = vector.broadcast %cst_12 : f32 to vector<32x64xf32>
    %26 = arith.maximumf %24, %25 : vector<32x64xf32>
    %27 = arith.truncf %26 : vector<32x64xf32> to vector<32x64xbf16>
    %c0_13 = arith.constant 0 : index
    %c0_14 = arith.constant 0 : index
    %28 = vector.load %arg4[%c0_13, %c0_14] : memref<32x64xbf16, #tpu.memory_space<vmem>>, vector<32x64xbf16>
    tpu.vector_store %arg4[%c0_13, %c0_14], %27 {strides = array<i32>} : memref<32x64xbf16, #tpu.memory_space<vmem>>, vector<32x64xbf16>,
    return
  }
}

module attributes {stable_mosaic.version = 11 : i64} {
  func.func @_conv_bn_relu_kernel(%arg0: memref<8x576xbf16, #tpu.memory_space<vmem>>, %arg1: memref<576x128xbf16, #tpu.memory_space<vmem>>, %arg2: memref<1x128xf32, #tpu.memory_space<vmem>>, %arg3: memref<1x128xf32, #tpu.memory_space<vmem>>, %arg4: memref<8x128xbf16, #tpu.memory_space<vmem>>) attributes {dimension_semantics = [], scalar_prefetch = 0 : i64, scratch_operands = 0 : i64, tpu.core_type = #tpu.core_type<tc>} {
    %c0 = arith.constant 0 : index
    %c0_0 = arith.constant 0 : index
    %0 = vector.load %arg0[%c0, %c0_0] : memref<8x576xbf16, #tpu.memory_space<vmem>>, vector<8x576xbf16>
    %c0_1 = arith.constant 0 : index
    %c0_2 = arith.constant 0 : index
    %1 = vector.load %arg1[%c0_1, %c0_2] : memref<576x128xbf16, #tpu.memory_space<vmem>>, vector<576x128xbf16>
    %cst = arith.constant dense<0.000000e+00> : vector<8x128xf32>
    %2 = tpu.matmul %0, %1, %cst {dimension_numbers = #tpu.dot_dimension_numbers<[1], [0], [0], [1], [0, 0, 1, 1], [], []>} : vector<8x576xbf16>, vector<576x128xbf16>, vector<8x128xf32> -> vector<8x128xf32>
    %cst_3 = arith.constant dense<0.000000e+00> : vector<128xf32>
    %3 = vector.multi_reduction <add>, %2, %cst_3 [0] : vector<8x128xf32> to vector<128xf32>
    %4 = vector.shape_cast %3 : vector<128xf32> to vector<1x128xf32>
    %cst_4 = arith.constant 8.000000e+00 : f32
    %5 = vector.broadcast %cst_4 : f32 to vector<1x128xf32>
    %6 = arith.divf %4, %5 : vector<1x128xf32>
    %7 = vector.broadcast %6 : vector<1x128xf32> to vector<8x128xf32>
    %8 = arith.subf %2, %7 : vector<8x128xf32>
    %9 = arith.mulf %8, %8 : vector<8x128xf32>
    %cst_5 = arith.constant dense<0.000000e+00> : vector<128xf32>
    %10 = vector.multi_reduction <add>, %9, %cst_5 [0] : vector<8x128xf32> to vector<128xf32>
    %11 = vector.shape_cast %10 : vector<128xf32> to vector<1x128xf32>
    %cst_6 = arith.constant 8.000000e+00 : f32
    %12 = vector.broadcast %cst_6 : f32 to vector<1x128xf32>
    %13 = arith.divf %11, %12 : vector<1x128xf32>
    %cst_7 = arith.constant 9.99999974E-6 : f32
    %14 = vector.broadcast %cst_7 : f32 to vector<1x128xf32>
    %15 = arith.addf %13, %14 : vector<1x128xf32>
    %16 = math.rsqrt %15 : vector<1x128xf32>
    %17 = vector.broadcast %16 : vector<1x128xf32> to vector<8x128xf32>
    %18 = arith.mulf %8, %17 : vector<8x128xf32>
    %c0_8 = arith.constant 0 : index
    %c0_9 = arith.constant 0 : index
    %19 = vector.load %arg2[%c0_8, %c0_9] : memref<1x128xf32, #tpu.memory_space<vmem>>, vector<1x128xf32>
    %20 = vector.broadcast %19 : vector<1x128xf32> to vector<8x128xf32>
    %21 = arith.mulf %18, %20 : vector<8x128xf32>
    %c0_10 = arith.constant 0 : index
    %c0_11 = arith.constant 0 : index
    %22 = vector.load %arg3[%c0_10, %c0_11] : memref<1x128xf32, #tpu.memory_space<vmem>>, vector<1x128xf32>
    %23 = vector.broadcast %22 : vector<1x128xf32> to vector<8x128xf32>
    %24 = arith.addf %21, %23 : vector<8x128xf32>
    %cst_12 = arith.constant 0.000000e+00 : f32
    %25 = vector.broadcast %cst_12 : f32 to vector<8x128xf32>
    %26 = arith.maximumf %24, %25 : vector<8x128xf32>
    %27 = arith.truncf %26 : vector<8x128xf32> to vector<8x128xbf16>
    %c0_13 = arith.constant 0 : index
    %c0_14 = arith.constant 0 : index
    %28 = vector.load %arg4[%c0_13, %c0_14] : memref<8x128xbf16, #tpu.memory_space<vmem>>, vector<8x128xbf16>
    tpu.vector_store %arg4[%c0_13, %c0_14], %27 {strides = array<i32>} : memref<8x128xbf16, #tpu.memory_space<vmem>>, vector<8x128xbf16>,
    return
  }
}

module attributes {stable_mosaic.version = 11 : i64} {
  func.func @_conv_bn_relu_kernel(%arg0: memref<8x1152xbf16, #tpu.memory_space<vmem>>, %arg1: memref<1152x128xbf16, #tpu.memory_space<vmem>>, %arg2: memref<1x128xf32, #tpu.memory_space<vmem>>, %arg3: memref<1x128xf32, #tpu.memory_space<vmem>>, %arg4: memref<8x128xbf16, #tpu.memory_space<vmem>>) attributes {dimension_semantics = [], scalar_prefetch = 0 : i64, scratch_operands = 0 : i64, tpu.core_type = #tpu.core_type<tc>} {
    %c0 = arith.constant 0 : index
    %c0_0 = arith.constant 0 : index
    %0 = vector.load %arg0[%c0, %c0_0] : memref<8x1152xbf16, #tpu.memory_space<vmem>>, vector<8x1152xbf16>
    %c0_1 = arith.constant 0 : index
    %c0_2 = arith.constant 0 : index
    %1 = vector.load %arg1[%c0_1, %c0_2] : memref<1152x128xbf16, #tpu.memory_space<vmem>>, vector<1152x128xbf16>
    %cst = arith.constant dense<0.000000e+00> : vector<8x128xf32>
    %2 = tpu.matmul %0, %1, %cst {dimension_numbers = #tpu.dot_dimension_numbers<[1], [0], [0], [1], [0, 0, 1, 1], [], []>} : vector<8x1152xbf16>, vector<1152x128xbf16>, vector<8x128xf32> -> vector<8x128xf32>
    %cst_3 = arith.constant dense<0.000000e+00> : vector<128xf32>
    %3 = vector.multi_reduction <add>, %2, %cst_3 [0] : vector<8x128xf32> to vector<128xf32>
    %4 = vector.shape_cast %3 : vector<128xf32> to vector<1x128xf32>
    %cst_4 = arith.constant 8.000000e+00 : f32
    %5 = vector.broadcast %cst_4 : f32 to vector<1x128xf32>
    %6 = arith.divf %4, %5 : vector<1x128xf32>
    %7 = vector.broadcast %6 : vector<1x128xf32> to vector<8x128xf32>
    %8 = arith.subf %2, %7 : vector<8x128xf32>
    %9 = arith.mulf %8, %8 : vector<8x128xf32>
    %cst_5 = arith.constant dense<0.000000e+00> : vector<128xf32>
    %10 = vector.multi_reduction <add>, %9, %cst_5 [0] : vector<8x128xf32> to vector<128xf32>
    %11 = vector.shape_cast %10 : vector<128xf32> to vector<1x128xf32>
    %cst_6 = arith.constant 8.000000e+00 : f32
    %12 = vector.broadcast %cst_6 : f32 to vector<1x128xf32>
    %13 = arith.divf %11, %12 : vector<1x128xf32>
    %cst_7 = arith.constant 9.99999974E-6 : f32
    %14 = vector.broadcast %cst_7 : f32 to vector<1x128xf32>
    %15 = arith.addf %13, %14 : vector<1x128xf32>
    %16 = math.rsqrt %15 : vector<1x128xf32>
    %17 = vector.broadcast %16 : vector<1x128xf32> to vector<8x128xf32>
    %18 = arith.mulf %8, %17 : vector<8x128xf32>
    %c0_8 = arith.constant 0 : index
    %c0_9 = arith.constant 0 : index
    %19 = vector.load %arg2[%c0_8, %c0_9] : memref<1x128xf32, #tpu.memory_space<vmem>>, vector<1x128xf32>
    %20 = vector.broadcast %19 : vector<1x128xf32> to vector<8x128xf32>
    %21 = arith.mulf %18, %20 : vector<8x128xf32>
    %c0_10 = arith.constant 0 : index
    %c0_11 = arith.constant 0 : index
    %22 = vector.load %arg3[%c0_10, %c0_11] : memref<1x128xf32, #tpu.memory_space<vmem>>, vector<1x128xf32>
    %23 = vector.broadcast %22 : vector<1x128xf32> to vector<8x128xf32>
    %24 = arith.addf %21, %23 : vector<8x128xf32>
    %cst_12 = arith.constant 0.000000e+00 : f32
    %25 = vector.broadcast %cst_12 : f32 to vector<8x128xf32>
    %26 = arith.maximumf %24, %25 : vector<8x128xf32>
    %27 = arith.truncf %26 : vector<8x128xf32> to vector<8x128xbf16>
    %c0_13 = arith.constant 0 : index
    %c0_14 = arith.constant 0 : index
    %28 = vector.load %arg4[%c0_13, %c0_14] : memref<8x128xbf16, #tpu.memory_space<vmem>>, vector<8x128xbf16>
    tpu.vector_store %arg4[%c0_13, %c0_14], %27 {strides = array<i32>} : memref<8x128xbf16, #tpu.memory_space<vmem>>, vector<8x128xbf16>,
    return
  }
}

module attributes {stable_mosaic.version = 11 : i64} {
  func.func @_decoder_kernel(%arg0: i32, %arg1: memref<1x128x4xbf16, #tpu.memory_space<vmem>>, %arg2: memref<1x64x16xbf16, #tpu.memory_space<vmem>>, %arg3: memref<1x32x64xbf16, #tpu.memory_space<vmem>>, %arg4: memref<1x16x256xbf16, #tpu.memory_space<vmem>>, %arg5: memref<64x128xbf16, #tpu.memory_space<vmem>>, %arg6: memref<32x64xbf16, #tpu.memory_space<vmem>>, %arg7: memref<16x32xbf16, #tpu.memory_space<vmem>>, %arg8: memref<1x16xbf16, #tpu.memory_space<vmem>>, %arg9: memref<64x1xf32, #tpu.memory_space<vmem>>, %arg10: memref<32x1xf32, #tpu.memory_space<vmem>>, %arg11: memref<16x1xf32, #tpu.memory_space<vmem>>, %arg12: memref<1x1xf32, #tpu.memory_space<smem>>, %arg13: memref<4x16xbf16, #tpu.memory_space<vmem>>, %arg14: memref<16x64xbf16, #tpu.memory_space<vmem>>, %arg15: memref<64x256xbf16, #tpu.memory_space<vmem>>, %arg16: memref<256x1024xbf16, #tpu.memory_space<vmem>>, %arg17: memref<1x1x1024xf32, #tpu.memory_space<vmem>>) attributes {dimension_semantics = [#tpu.dimension_semantics<parallel>], iteration_bounds = array<i64: 2>, scalar_prefetch = 0 : i64, scratch_operands = 0 : i64, tpu.core_type = #tpu.core_type<tc>, window_params = [{transform_indices = @transform_0, window_bounds = array<i64: 1, 128, 4>}, {transform_indices = @transform_1, window_bounds = array<i64: 1, 64, 16>}, {transform_indices = @transform_2, window_bounds = array<i64: 1, 32, 64>}, {transform_indices = @transform_3, window_bounds = array<i64: 1, 16, 256>}, {pipeline_mode = #tpu.pipeline_mode<synchronous>, transform_indices = @transform_4, window_bounds = array<i64: 64, 128>}, {pipeline_mode = #tpu.pipeline_mode<synchronous>, transform_indices = @transform_5, window_bounds = array<i64: 32, 64>}, {pipeline_mode = #tpu.pipeline_mode<synchronous>, transform_indices = @transform_6, window_bounds = array<i64: 16, 32>}, {pipeline_mode = #tpu.pipeline_mode<synchronous>, transform_indices = @transform_7, window_bounds = array<i64: 1, 16>}, {pipeline_mode = #tpu.pipeline_mode<synchronous>, transform_indices = @transform_8, window_bounds = array<i64: 64, 1>}, {pipeline_mode = #tpu.pipeline_mode<synchronous>, transform_indices = @transform_9, window_bounds = array<i64: 32, 1>}, {pipeline_mode = #tpu.pipeline_mode<synchronous>, transform_indices = @transform_10, window_bounds = array<i64: 16, 1>}, {transform_indices = @transform_11, window_bounds = array<i64: 1, 1>}, {pipeline_mode = #tpu.pipeline_mode<synchronous>, transform_indices = @transform_12, window_bounds = array<i64: 4, 16>}, {pipeline_mode = #tpu.pipeline_mode<synchronous>, transform_indices = @transform_13, window_bounds = array<i64: 16, 64>}, {pipeline_mode = #tpu.pipeline_mode<synchronous>, transform_indices = @transform_14, window_bounds = array<i64: 64, 256>}, {pipeline_mode = #tpu.pipeline_mode<synchronous>, transform_indices = @transform_15, window_bounds = array<i64: 256, 1024>}, {transform_indices = @transform_16, window_bounds = array<i64: 1, 1, 1024>}]} {
    %c0 = arith.constant 0 : index
    %c0_0 = arith.constant 0 : index
    %c0_1 = arith.constant 0 : index
    %0 = vector.load %arg1[%c0, %c0_0, %c0_1] : memref<1x128x4xbf16, #tpu.memory_space<vmem>>, vector<1x128x4xbf16>
    %1 = vector.shape_cast %0 : vector<1x128x4xbf16> to vector<128x4xbf16>
    %c0_2 = arith.constant 0 : index
    %c0_3 = arith.constant 0 : index
    %2 = vector.load %arg5[%c0_2, %c0_3] : memref<64x128xbf16, #tpu.memory_space<vmem>>, vector<64x128xbf16>
    %cst = arith.constant dense<0.000000e+00> : vector<64x4xf32>
    %3 = tpu.matmul %2, %1, %cst {dimension_numbers = #tpu.dot_dimension_numbers<[1], [0], [0], [1], [0, 0, 1, 1], [], []>} : vector<64x128xbf16>, vector<128x4xbf16>, vector<64x4xf32> -> vector<64x4xf32>
    %c0_4 = arith.constant 0 : index
    %c0_5 = arith.constant 0 : index
    %4 = vector.load %arg9[%c0_4, %c0_5] : memref<64x1xf32, #tpu.memory_space<vmem>>, vector<64x1xf32>
    %5 = vector.broadcast %4 : vector<64x1xf32> to vector<64x4xf32>
    %6 = arith.addf %3, %5 : vector<64x4xf32>
    %7 = arith.truncf %6 : vector<64x4xf32> to vector<64x4xbf16>
    %c0_6 = arith.constant 0 : index
    %c0_7 = arith.constant 0 : index
    %8 = vector.load %arg13[%c0_6, %c0_7] : memref<4x16xbf16, #tpu.memory_space<vmem>>, vector<4x16xbf16>
    %cst_8 = arith.constant dense<0.000000e+00> : vector<64x16xf32>
    %9 = tpu.matmul %7, %8, %cst_8 {dimension_numbers = #tpu.dot_dimension_numbers<[1], [0], [0], [1], [0, 0, 1, 1], [], []>} : vector<64x4xbf16>, vector<4x16xbf16>, vector<64x16xf32> -> vector<64x16xf32>
    %c0_9 = arith.constant 0 : index
    %c0_10 = arith.constant 0 : index
    %c0_11 = arith.constant 0 : index
    %10 = vector.load %arg2[%c0_9, %c0_10, %c0_11] : memref<1x64x16xbf16, #tpu.memory_space<vmem>>, vector<1x64x16xbf16>
    %11 = vector.shape_cast %10 : vector<1x64x16xbf16> to vector<64x16xbf16>
    %12 = arith.extf %11 : vector<64x16xbf16> to vector<64x16xf32>
    %13 = arith.addf %9, %12 : vector<64x16xf32>
    %14 = arith.truncf %13 : vector<64x16xf32> to vector<64x16xbf16>
    %c0_12 = arith.constant 0 : index
    %c0_13 = arith.constant 0 : index
    %15 = vector.load %arg6[%c0_12, %c0_13] : memref<32x64xbf16, #tpu.memory_space<vmem>>, vector<32x64xbf16>
    %cst_14 = arith.constant dense<0.000000e+00> : vector<32x16xf32>
    %16 = tpu.matmul %15, %14, %cst_14 {dimension_numbers = #tpu.dot_dimension_numbers<[1], [0], [0], [1], [0, 0, 1, 1], [], []>} : vector<32x64xbf16>, vector<64x16xbf16>, vector<32x16xf32> -> vector<32x16xf32>
    %c0_15 = arith.constant 0 : index
    %c0_16 = arith.constant 0 : index
    %17 = vector.load %arg10[%c0_15, %c0_16] : memref<32x1xf32, #tpu.memory_space<vmem>>, vector<32x1xf32>
    %18 = vector.broadcast %17 : vector<32x1xf32> to vector<32x16xf32>
    %19 = arith.addf %16, %18 : vector<32x16xf32>
    %20 = arith.truncf %19 : vector<32x16xf32> to vector<32x16xbf16>
    %c0_17 = arith.constant 0 : index
    %c0_18 = arith.constant 0 : index
    %21 = vector.load %arg14[%c0_17, %c0_18] : memref<16x64xbf16, #tpu.memory_space<vmem>>, vector<16x64xbf16>
    %cst_19 = arith.constant dense<0.000000e+00> : vector<32x64xf32>
    %22 = tpu.matmul %20, %21, %cst_19 {dimension_numbers = #tpu.dot_dimension_numbers<[1], [0], [0], [1], [0, 0, 1, 1], [], []>} : vector<32x16xbf16>, vector<16x64xbf16>, vector<32x64xf32> -> vector<32x64xf32>
    %c0_20 = arith.constant 0 : index
    %c0_21 = arith.constant 0 : index
    %c0_22 = arith.constant 0 : index
    %23 = vector.load %arg3[%c0_20, %c0_21, %c0_22] : memref<1x32x64xbf16, #tpu.memory_space<vmem>>, vector<1x32x64xbf16>
    %24 = vector.shape_cast %23 : vector<1x32x64xbf16> to vector<32x64xbf16>
    %25 = arith.extf %24 : vector<32x64xbf16> to vector<32x64xf32>
    %26 = arith.addf %22, %25 : vector<32x64xf32>
    %27 = arith.truncf %26 : vector<32x64xf32> to vector<32x64xbf16>
    %c0_23 = arith.constant 0 : index
    %c0_24 = arith.constant 0 : index
    %28 = vector.load %arg7[%c0_23, %c0_24] : memref<16x32xbf16, #tpu.memory_space<vmem>>, vector<16x32xbf16>
    %cst_25 = arith.constant dense<0.000000e+00> : vector<16x64xf32>
    %29 = tpu.matmul %28, %27, %cst_25 {dimension_numbers = #tpu.dot_dimension_numbers<[1], [0], [0], [1], [0, 0, 1, 1], [], []>} : vector<16x32xbf16>, vector<32x64xbf16>, vector<16x64xf32> -> vector<16x64xf32>
    %c0_26 = arith.constant 0 : index
    %c0_27 = arith.constant 0 : index
    %30 = vector.load %arg11[%c0_26, %c0_27] : memref<16x1xf32, #tpu.memory_space<vmem>>, vector<16x1xf32>
    %31 = vector.broadcast %30 : vector<16x1xf32> to vector<16x64xf32>
    %32 = arith.addf %29, %31 : vector<16x64xf32>
    %33 = arith.truncf %32 : vector<16x64xf32> to vector<16x64xbf16>
    %c0_28 = arith.constant 0 : index
    %c0_29 = arith.constant 0 : index
    %34 = vector.load %arg15[%c0_28, %c0_29] : memref<64x256xbf16, #tpu.memory_space<vmem>>, vector<64x256xbf16>
    %cst_30 = arith.constant dense<0.000000e+00> : vector<16x256xf32>
    %35 = tpu.matmul %33, %34, %cst_30 {dimension_numbers = #tpu.dot_dimension_numbers<[1], [0], [0], [1], [0, 0, 1, 1], [], []>} : vector<16x64xbf16>, vector<64x256xbf16>, vector<16x256xf32> -> vector<16x256xf32>
    %c0_31 = arith.constant 0 : index
    %c0_32 = arith.constant 0 : index
    %c0_33 = arith.constant 0 : index
    %36 = vector.load %arg4[%c0_31, %c0_32, %c0_33] : memref<1x16x256xbf16, #tpu.memory_space<vmem>>, vector<1x16x256xbf16>
    %37 = vector.shape_cast %36 : vector<1x16x256xbf16> to vector<16x256xbf16>
    %38 = arith.extf %37 : vector<16x256xbf16> to vector<16x256xf32>
    %39 = arith.addf %35, %38 : vector<16x256xf32>
    %c0_34 = arith.constant 0 : index
    %c0_35 = arith.constant 0 : index
    %40 = vector.load %arg8[%c0_34, %c0_35] : memref<1x16xbf16, #tpu.memory_space<vmem>>, vector<1x16xbf16>
    %41 = arith.truncf %39 : vector<16x256xf32> to vector<16x256xbf16>
    %cst_36 = arith.constant dense<0.000000e+00> : vector<1x256xf32>
    %42 = tpu.matmul %40, %41, %cst_36 {dimension_numbers = #tpu.dot_dimension_numbers<[1], [0], [0], [1], [0, 0, 1, 1], [], []>} : vector<1x16xbf16>, vector<16x256xbf16>, vector<1x256xf32> -> vector<1x256xf32>
    %c0_37 = arith.constant 0 : index
    %c0_38 = arith.constant 0 : index
    %43 = memref.load %arg12[%c0_37, %c0_38] : memref<1x1xf32, #tpu.memory_space<smem>>
    %44 = vector.broadcast %43 : f32 to vector<1x256xf32>
    %45 = arith.addf %42, %44 : vector<1x256xf32>
    %46 = arith.truncf %45 : vector<1x256xf32> to vector<1x256xbf16>
    %c0_39 = arith.constant 0 : index
    %c0_40 = arith.constant 0 : index
    %47 = vector.load %arg16[%c0_39, %c0_40] : memref<256x1024xbf16, #tpu.memory_space<vmem>>, vector<256x1024xbf16>
    %cst_41 = arith.constant dense<0.000000e+00> : vector<1x1024xf32>
    %48 = tpu.matmul %46, %47, %cst_41 {dimension_numbers = #tpu.dot_dimension_numbers<[1], [0], [0], [1], [0, 0, 1, 1], [], []>} : vector<1x256xbf16>, vector<256x1024xbf16>, vector<1x1024xf32> -> vector<1x1024xf32>
    %cst_42 = arith.constant 0.000000e+00 : f32
    %49 = vector.broadcast %cst_42 : f32 to vector<1x1024xf32>
    %50 = arith.subf %49, %48 : vector<1x1024xf32>
    %51 = math.exp %50 : vector<1x1024xf32>
    %cst_43 = arith.constant 1.000000e+00 : f32
    %52 = vector.broadcast %cst_43 : f32 to vector<1x1024xf32>
    %53 = arith.addf %52, %51 : vector<1x1024xf32>
    %cst_44 = arith.constant 1.000000e+00 : f32
    %54 = vector.broadcast %cst_44 : f32 to vector<1x1024xf32>
    %55 = arith.divf %54, %53 : vector<1x1024xf32>
    %c0_45 = arith.constant 0 : index
    %c0_46 = arith.constant 0 : index
    %c0_47 = arith.constant 0 : index
    %56 = vector.load %arg17[%c0_45, %c0_46, %c0_47] : memref<1x1x1024xf32, #tpu.memory_space<vmem>>, vector<1x1x1024xf32>
    %57 = vector.shape_cast %56 : vector<1x1x1024xf32> to vector<1x1024xf32>
    %58 = vector.shape_cast %55 : vector<1x1024xf32> to vector<1x1x1024xf32>
    tpu.vector_store %arg17[%c0_45, %c0_46, %c0_47], %58 {strides = array<i32>} : memref<1x1x1024xf32, #tpu.memory_space<vmem>>, vector<1x1x1024xf32>,
    return
  }
  func.func @transform_0(%arg0: i32) -> (i32, i32, i32) {
    %c0_i32 = arith.constant 0 : i32
    %c0_i32_0 = arith.constant 0 : i32
    %c0_i32_1 = arith.constant 0 : i32
    return %arg0, %c0_i32, %c0_i32_0 : i32, i32, i32
  }
  func.func @transform_1(%arg0: i32) -> (i32, i32, i32) {
    %c0_i32 = arith.constant 0 : i32
    %c0_i32_0 = arith.constant 0 : i32
    %c0_i32_1 = arith.constant 0 : i32
    return %arg0, %c0_i32, %c0_i32_0 : i32, i32, i32
  }
  func.func @transform_2(%arg0: i32) -> (i32, i32, i32) {
    %c0_i32 = arith.constant 0 : i32
    %c0_i32_0 = arith.constant 0 : i32
    %c0_i32_1 = arith.constant 0 : i32
    return %arg0, %c0_i32, %c0_i32_0 : i32, i32, i32
  }
  func.func @transform_3(%arg0: i32) -> (i32, i32, i32) {
    %c0_i32 = arith.constant 0 : i32
    %c0_i32_0 = arith.constant 0 : i32
    %c0_i32_1 = arith.constant 0 : i32
    return %arg0, %c0_i32, %c0_i32_0 : i32, i32, i32
  }
  func.func @transform_4(%arg0: i32) -> (i32, i32) {
    %c0_i32 = arith.constant 0 : i32
    %c0_i32_0 = arith.constant 0 : i32
    %c0_i32_1 = arith.constant 0 : i32
    return %c0_i32, %c0_i32_0 : i32, i32
  }
  func.func @transform_5(%arg0: i32) -> (i32, i32) {
    %c0_i32 = arith.constant 0 : i32
    %c0_i32_0 = arith.constant 0 : i32
    %c0_i32_1 = arith.constant 0 : i32
    return %c0_i32, %c0_i32_0 : i32, i32
  }
  func.func @transform_6(%arg0: i32) -> (i32, i32) {
    %c0_i32 = arith.constant 0 : i32
    %c0_i32_0 = arith.constant 0 : i32
    %c0_i32_1 = arith.constant 0 : i32
    return %c0_i32, %c0_i32_0 : i32, i32
  }
  func.func @transform_7(%arg0: i32) -> (i32, i32) {
    %c0_i32 = arith.constant 0 : i32
    %c0_i32_0 = arith.constant 0 : i32
    %c0_i32_1 = arith.constant 0 : i32
    return %c0_i32, %c0_i32_0 : i32, i32
  }
  func.func @transform_8(%arg0: i32) -> (i32, i32) {
    %c0_i32 = arith.constant 0 : i32
    %c0_i32_0 = arith.constant 0 : i32
    %c0_i32_1 = arith.constant 0 : i32
    return %c0_i32, %c0_i32_0 : i32, i32
  }
  func.func @transform_9(%arg0: i32) -> (i32, i32) {
    %c0_i32 = arith.constant 0 : i32
    %c0_i32_0 = arith.constant 0 : i32
    %c0_i32_1 = arith.constant 0 : i32
    return %c0_i32, %c0_i32_0 : i32, i32
  }
  func.func @transform_10(%arg0: i32) -> (i32, i32) {
    %c0_i32 = arith.constant 0 : i32
    %c0_i32_0 = arith.constant 0 : i32
    %c0_i32_1 = arith.constant 0 : i32
    return %c0_i32, %c0_i32_0 : i32, i32
  }
  func.func @transform_11(%arg0: i32) -> (i32, i32) {
    %c0_i32 = arith.constant 0 : i32
    %c0_i32_0 = arith.constant 0 : i32
    %c0_i32_1 = arith.constant 0 : i32
    return %c0_i32, %c0_i32_0 : i32, i32
  }
  func.func @transform_12(%arg0: i32) -> (i32, i32) {
    %c0_i32 = arith.constant 0 : i32
    %c0_i32_0 = arith.constant 0 : i32
    %c0_i32_1 = arith.constant 0 : i32
    return %c0_i32, %c0_i32_0 : i32, i32
  }
  func.func @transform_13(%arg0: i32) -> (i32, i32) {
    %c0_i32 = arith.constant 0 : i32
    %c0_i32_0 = arith.constant 0 : i32
    %c0_i32_1 = arith.constant 0 : i32
    return %c0_i32, %c0_i32_0 : i32, i32
  }
  func.func @transform_14(%arg0: i32) -> (i32, i32) {
    %c0_i32 = arith.constant 0 : i32
    %c0_i32_0 = arith.constant 0 : i32
    %c0_i32_1 = arith.constant 0 : i32
    return %c0_i32, %c0_i32_0 : i32, i32
  }
  func.func @transform_15(%arg0: i32) -> (i32, i32) {
    %c0_i32 = arith.constant 0 : i32
    %c0_i32_0 = arith.constant 0 : i32
    %c0_i32_1 = arith.constant 0 : i32
    return %c0_i32, %c0_i32_0 : i32, i32
  }
  func.func @transform_16(%arg0: i32) -> (i32, i32, i32) {
    %c0_i32 = arith.constant 0 : i32
    %c0_i32_0 = arith.constant 0 : i32
    %c0_i32_1 = arith.constant 0 : i32
    return %arg0, %c0_i32, %c0_i32_0 : i32, i32, i32
  }
}

</mosaic_0001>

<llo_original>
// kernel: bisenetv2_forward.6
$region0: #{bisenetv2_forward.6}
  #allocation0 [shape = 'u32[]', space=smem, size = 0x4, offset = 0x4, fixed_abs, tag = 'smem constant byte address 0x4 - core index']
  #allocation1 [shape = 'u32[144,128]{1,0:T(1,128)}', space=vmem, size = 0x12000, scoped, tag = 'internal scratch']
  %s0 = inlined_call_operand.vmem [shape: bf16[512,128], index: 0, kind: input, shape index: {}]
  %s1 = inlined_call_operand.vmem [shape: bf16[128,16], index: 1, kind: input, shape index: {}]
  %s2 = inlined_call_operand.vmem [shape: f32[1,16], index: 2, kind: input, shape index: {}]
  %s3 = inlined_call_operand.vmem [shape: f32[1,16], index: 3, kind: input, shape index: {}]
  %s4 = inlined_call_operand.vmem [shape: bf16[512,16], index: 4, kind: output, shape index: {}]
  %s5 = sld [smem:[#allocation0]]
  $region26: #{bisenetv2_forward.6} parent=0
    _
  %s7 = ssub.s32 1, %s5
  %s8 = scalar_select 0, %s7, %s5
  // Predicated region
  $region2: #{bisenetv2_forward.6} parent=0 // pred_check
    _
  $region3: #{bisenetv2_forward.6} parent=0 // pred_check_branch
    %10 = sbr.rel (0) target = $region5
  $region4: #{bisenetv2_forward.6} parent=0 // pred_region
    _
  $region5: #{bisenetv2_forward.6} parent=0 // pred_fallthru
    _
  // Predicated region
  $region6: #{bisenetv2_forward.6} parent=0 // pred_check
    _
  $region7: #{bisenetv2_forward.6} parent=0 // pred_check_branch
    %12 = sbr.rel (0) target = $region9
  $region8: #{bisenetv2_forward.6} parent=0 // pred_region
    _
  $region9: #{bisenetv2_forward.6} parent=0 // pred_fallthru
    _
  // Predicated region
  $region10: #{bisenetv2_forward.6} parent=0 // pred_check
    _
  $region11: #{bisenetv2_forward.6} parent=0 // pred_check_branch
    %14 = sbr.rel (0) target = $region13
  $region12: #{bisenetv2_forward.6} parent=0 // pred_region
    _
  $region13: #{bisenetv2_forward.6} parent=0 // pred_fallthru
    _
  // Predicated region
  $region14: #{bisenetv2_forward.6} parent=0 // pred_check
    _
  $region15: #{bisenetv2_forward.6} parent=0 // pred_check_branch
    %16 = sbr.rel (0) target = $region17
  $region16: #{bisenetv2_forward.6} parent=0 // pred_region
    _
  $region17: #{bisenetv2_forward.6} parent=0 // pred_fallthru
    _
  %v18 = vld [vmem:[%s0] sm:$0xf]
  %v19 = vld [vmem:[%s0 + $0x4] sm:$0xf]
  %v20 = vld [vmem:[%s0 + $0x8] sm:$0xf]
  %v21 = vld [vmem:[%s0 + $0xc] sm:$0xf]
  %v22 = vld [vmem:[%s0 + $0x10] sm:$0xf]
  %v23 = vld [vmem:[%s0 + $0x14] sm:$0xf]
  %v24 = vld [vmem:[%s0 + $0x18] sm:$0xf]
  %v25 = vld [vmem:[%s0 + $0x1c] sm:$0xf]
  %v26 = vld [vmem:[%s0 + $0x20] sm:$0xf]
  %v27 = vld [vmem:[%s0 + $0x24] sm:$0xf]
  %v28 = vld [vmem:[%s0 + $0x28] sm:$0xf]
  %v29 = vld [vmem:[%s0 + $0x2c] sm:$0xf]
  %v30 = vld [vmem:[%s0 + $0x30] sm:$0xf]
  %v31 = vld [vmem:[%s0 + $0x34] sm:$0xf]
  %v32 = vld [vmem:[%s0 + $0x38] sm:$0xf]
  %v33 = vld [vmem:[%s0 + $0x3c] sm:$0xf]
  %v34 = vld [vmem:[%s0 + $0x40] sm:$0xf]
  %v35 = vld [vmem:[%s0 + $0x44] sm:$0xf]
  %v36 = vld [vmem:[%s0 + $0x48] sm:$0xf]
  %v37 = vld [vmem:[%s0 + $0x4c] sm:$0xf]
  %v38 = vld [vmem:[%s0 + $0x50] sm:$0xf]
  %v39 = vld [vmem:[%s0 + $0x54] sm:$0xf]
  %v40 = vld [vmem:[%s0 + $0x58] sm:$0xf]
  %v41 = vld [vmem:[%s0 + $0x5c] sm:$0xf]
  %v42 = vld [vmem:[%s0 + $0x60] sm:$0xf]
  %v43 = vld [vmem:[%s0 + $0x64] sm:$0xf]
  %v44 = vld [vmem:[%s0 + $0x68] sm:$0xf]
  %v45 = vld [vmem:[%s0 + $0x6c] sm:$0xf]
  %v46 = vld [vmem:[%s0 + $0x70] sm:$0xf]
  %v47 = vld [vmem:[%s0 + $0x74] sm:$0xf]
  %v48 = vld [vmem:[%s0 + $0x78] sm:$0xf]
  %v49 = vld [vmem:[%s0 + $0x7c] sm:$0xf]
  %v50 = vld [vmem:[%s0 + $0x80] sm:$0xf]
  %v51 = vld [vmem:[%s0 + $0x84] sm:$0xf]
  %v52 = vld [vmem:[%s0 + $0x88] sm:$0xf]
  %v53 = vld [vmem:[%s0 + $0x8c] sm:$0xf]
  %v54 = vld [vmem:[%s0 + $0x90] sm:$0xf]
  %v55 = vld [vmem:[%s0 + $0x94] sm:$0xf]
  %v56 = vld [vmem:[%s0 + $0x98] sm:$0xf]
  %v57 = vld [vmem:[%s0 + $0x9c] sm:$0xf]
  %v58 = vld [vmem:[%s0 + $0xa0] sm:$0xf]
  %v59 = vld [vmem:[%s0 + $0xa4] sm:$0xf]
  %v60 = vld [vmem:[%s0 + $0xa8] sm:$0xf]
  %v61 = vld [vmem:[%s0 + $0xac] sm:$0xf]
  %v62 = vld [vmem:[%s0 + $0xb0] sm:$0xf]
  %v63 = vld [vmem:[%s0 + $0xb4] sm:$0xf]
  %v64 = vld [vmem:[%s0 + $0xb8] sm:$0xf]
  %v65 = vld [vmem:[%s0 + $0xbc] sm:$0xf]
  %v66 = vld [vmem:[%s0 + $0xc0] sm:$0xf]
  %v67 = vld [vmem:[%s0 + $0xc4] sm:$0xf]
  %v68 = vld [vmem:[%s0 + $0xc8] sm:$0xf]
  %v69 = vld [vmem:[%s0 + $0xcc] sm:$0xf]
  %v70 = vld [vmem:[%s0 + $0xd0] sm:$0xf]
  %v71 = vld [vmem:[%s0 + $0xd4] sm:$0xf]
  %v72 = vld [vmem:[%s0 + $0xd8] sm:$0xf]
  %v73 = vld [vmem:[%s0 + $0xdc] sm:$0xf]
  %v74 = vld [vmem:[%s0 + $0xe0] sm:$0xf]
  %v75 = vld [vmem:[%s0 + $0xe4] sm:$0xf]
  %v76 = vld [vmem:[%s0 + $0xe8] sm:$0xf]
  %v77 = vld [vmem:[%s0 + $0xec] sm:$0xf]
  %v78 = vld [vmem:[%s0 + $0xf0] sm:$0xf]
  %v79 = vld [vmem:[%s0 + $0xf4] sm:$0xf]
  %v80 = vld [vmem:[%s0 + $0xf8] sm:$0xf]
  %v81 = vld [vmem:[%s0 + $0xfc] sm:$0xf]
  %v82 = vld [vmem:[%s1] sm:$0xf]
  %v83 = vld [vmem:[%s1 + $0x4] sm:$0xf]
  %v84 = vld [vmem:[%s1 + $0x8] sm:$0xf]
  %v85 = vld [vmem:[%s1 + $0xc] sm:$0xf]
  %v86 = vld [vmem:[%s1 + $0x10] sm:$0xf]
  %v87 = vld [vmem:[%s1 + $0x14] sm:$0xf]
  %v88 = vld [vmem:[%s1 + $0x18] sm:$0xf]
  %v89 = vld [vmem:[%s1 + $0x1c] sm:$0xf]
  %v90 = vld [vmem:[%s1 + $0x20] sm:$0xf]
  %v91 = vld [vmem:[%s1 + $0x24] sm:$0xf]
  %v92 = vld [vmem:[%s1 + $0x28] sm:$0xf]
  %v93 = vld [vmem:[%s1 + $0x2c] sm:$0xf]
  %v94 = vld [vmem:[%s1 + $0x30] sm:$0xf]
  %v95 = vld [vmem:[%s1 + $0x34] sm:$0xf]
  %v96 = vld [vmem:[%s1 + $0x38] sm:$0xf]
  %v97 = vld [vmem:[%s1 + $0x3c] sm:$0xf]
  %v162 = vunpack.c.l.b16 %v18
  %v163 = vunpack.c.l.b16 %v19
  %v164 = vunpack.c.l.b16 %v20
  %v165 = vunpack.c.l.b16 %v21
  %v166 = vunpack.c.l.b16 %v22
  %v167 = vunpack.c.l.b16 %v23
  %v168 = vunpack.c.l.b16 %v24
  %v169 = vunpack.c.l.b16 %v25
  %v170 = vunpack.c.l.b16 %v26
  %v171 = vunpack.c.l.b16 %v27
  %v172 = vunpack.c.l.b16 %v28
  %v173 = vunpack.c.l.b16 %v29
  %v174 = vunpack.c.l.b16 %v30
  %v175 = vunpack.c.l.b16 %v31
  %v176 = vunpack.c.l.b16 %v32
  %v177 = vunpack.c.l.b16 %v33
  %v178 = vunpack.c.l.b16 %v34
  %v179 = vunpack.c.l.b16 %v35
  %v180 = vunpack.c.l.b16 %v36
  %v181 = vunpack.c.l.b16 %v37
  %v182 = vunpack.c.l.b16 %v38
  %v183 = vunpack.c.l.b16 %v39
  %v184 = vunpack.c.l.b16 %v40
  %v185 = vunpack.c.l.b16 %v41
  %v186 = vunpack.c.l.b16 %v42
  %v187 = vunpack.c.l.b16 %v43
  %v188 = vunpack.c.l.b16 %v44
  %v189 = vunpack.c.l.b16 %v45
  %v190 = vunpack.c.l.b16 %v46
  %v191 = vunpack.c.l.b16 %v47
  %v192 = vunpack.c.l.b16 %v48
  %v193 = vunpack.c.l.b16 %v49
  %v194 = vunpack.c.l.b16 %v50
  %v195 = vunpack.c.l.b16 %v51
  %v196 = vunpack.c.l.b16 %v52
  %v197 = vunpack.c.l.b16 %v53
  %v198 = vunpack.c.l.b16 %v54
  %v199 = vunpack.c.l.b16 %v55
  %v200 = vunpack.c.l.b16 %v56
  %v201 = vunpack.c.l.b16 %v57
  %v202 = vunpack.c.l.b16 %v58
  %v203 = vunpack.c.l.b16 %v59
  %v204 = vunpack.c.l.b16 %v60
  %v205 = vunpack.c.l.b16 %v61
  %v206 = vunpack.c.l.b16 %v62
  %v207 = vunpack.c.l.b16 %v63
  %v208 = vunpack.c.l.b16 %v64
  %v209 = vunpack.c.l.b16 %v65
  %v210 = vunpack.c.l.b16 %v66
  %v211 = vunpack.c.l.b16 %v67
  %v212 = vunpack.c.l.b16 %v68
  %v213 = vunpack.c.l.b16 %v69
  %v214 = vunpack.c.l.b16 %v70
  %v215 = vunpack.c.l.b16 %v71
  %v216 = vunpack.c.l.b16 %v72
  %v217 = vunpack.c.l.b16 %v73
  %v218 = vunpack.c.l.b16 %v74
  %v219 = vunpack.c.l.b16 %v75
  %v220 = vunpack.c.l.b16 %v76
  %v221 = vunpack.c.l.b16 %v77
  %v222 = vunpack.c.l.b16 %v78
  %v223 = vunpack.c.l.b16 %v79
  %v224 = vunpack.c.l.b16 %v80
  %v225 = vunpack.c.l.b16 %v81
  %v226 = vpack.c.b16 %v163, %v162
  %v227 = vpack.c.b16 %v165, %v164
  %v228 = vpack.c.b16 %v167, %v166
  %v229 = vpack.c.b16 %v169, %v168
  %v230 = vpack.c.b16 %v171, %v170
  %v231 = vpack.c.b16 %v173, %v172
  %v232 = vpack.c.b16 %v175, %v174
  %v233 = vpack.c.b16 %v177, %v176
  %v234 = vpack.c.b16 %v179, %v178
  %v235 = vpack.c.b16 %v181, %v180
  %v236 = vpack.c.b16 %v183, %v182
  %v237 = vpack.c.b16 %v185, %v184
  %v238 = vpack.c.b16 %v187, %v186
  %v239 = vpack.c.b16 %v189, %v188
  %v240 = vpack.c.b16 %v191, %v190
  %v241 = vpack.c.b16 %v193, %v192
  %v242 = vpack.c.b16 %v195, %v194
  %v243 = vpack.c.b16 %v197, %v196
  %v244 = vpack.c.b16 %v199, %v198
  %v245 = vpack.c.b16 %v201, %v200
  %v246 = vpack.c.b16 %v203, %v202
  %v247 = vpack.c.b16 %v205, %v204
  %v248 = vpack.c.b16 %v207, %v206
  %v249 = vpack.c.b16 %v209, %v208
  %v250 = vpack.c.b16 %v211, %v210
  %v251 = vpack.c.b16 %v213, %v212
  %v252 = vpack.c.b16 %v215, %v214
  %v253 = vpack.c.b16 %v217, %v216
  %v254 = vpack.c.b16 %v219, %v218
  %v255 = vpack.c.b16 %v221, %v220
  %v256 = vpack.c.b16 %v223, %v222
  %v257 = vpack.c.b16 %v225, %v224
  %v306 = vunpack.c.l.b16 %v82
  %v307 = vunpack.c.l.b16 %v83
  %v308 = vunpack.c.l.b16 %v84
  %v309 = vunpack.c.l.b16 %v85
  %v310 = vunpack.c.l.b16 %v86
  %v311 = vunpack.c.l.b16 %v87
  %v312 = vunpack.c.l.b16 %v88
  %v313 = vunpack.c.l.b16 %v89
  %v314 = vunpack.c.l.b16 %v90
  %v315 = vunpack.c.l.b16 %v91
  %v316 = vunpack.c.l.b16 %v92
  %v317 = vunpack.c.l.b16 %v93
  %v318 = vunpack.c.l.b16 %v94
  %v319 = vunpack.c.l.b16 %v95
  %v320 = vunpack.c.l.b16 %v96
  %v321 = vunpack.c.l.b16 %v97
  %v322 = vpack.c.b16 %v307, %v306
  %v323 = vpack.c.b16 %v309, %v308
  %v324 = vpack.c.b16 %v311, %v310
  %v325 = vpack.c.b16 %v313, %v312
  %v326 = vpack.c.b16 %v315, %v314
  %v327 = vpack.c.b16 %v317, %v316
  %v328 = vpack.c.b16 %v319, %v318
  %v329 = vpack.c.b16 %v321, %v320
  %338 = vmatprep.subr.bf16.mxu0 0
  %339 = vmatpush1.bf16.msra.mxu0 %v322
  %340 = vmatprep.subr.bf16.mxu0 0
  %341 = vmatpush1.bf16.msra.mxu0 %v323
  %342 = vmatprep.subr.bf16.mxu0 0
  %343 = vmatpush1.bf16.msra.mxu0 %v324
  %344 = vmatprep.subr.bf16.mxu0 0
  %345 = vmatpush1.bf16.msra.mxu0 %v325
  %346 = vmatprep.subr.bf16.mxu0 0
  %347 = vmatpush1.bf16.msra.mxu0 %v326
  %348 = vmatprep.subr.bf16.mxu0 0
  %349 = vmatpush1.bf16.msra.mxu0 %v327
  %350 = vmatprep.subr.bf16.mxu0 0
  %351 = vmatpush1.bf16.msra.mxu0 %v328
  %352 = vmatprep.subr.bf16.mxu0 0
  %353 = vmatpush1.bf16.msra.mxu0 %v329
  %354 = vmatprep.subr.bf16.mxu0 0
  %355 = vmatpush1.bf16.msra.mxu0 0
  %356 = vmatprep.subr.bf16.mxu0 0
  %357 = vmatpush1.bf16.msra.mxu0 0
  %358 = vmatprep.subr.bf16.mxu0 0
  %359 = vmatpush1.bf16.msra.mxu0 0
  %360 = vmatprep.subr.bf16.mxu0 0
  %361 = vmatpush1.bf16.msra.mxu0 0
  %362 = vmatprep.subr.bf16.mxu0 0
  %363 = vmatpush1.bf16.msra.mxu0 0
  %364 = vmatprep.subr.bf16.mxu0 0
  %365 = vmatpush1.bf16.msra.mxu0 0
  %366 = vmatprep.subr.bf16.mxu0 0
  %367 = vmatpush1.bf16.msra.mxu0 0
  %368 = vmatprep.subr.bf16.mxu0 0
  %369 = vmatpush1.bf16.msra.mxu0 0
  %370 = vmatprep.mubr.bf16.mxu0 0
  %371 = vmatmul.mubr.bf16.gmra.mrb[0].mxu0 %v226
  %v372 = vpop.f32.mrb[0].mxu0
  %v373 = vadd.f32 0.0, %v372
  %v374 = vpop.f32.mrb[0].mxu0
  %v375 = vpop.f32.mrb[0].mxu0
  %v376 = vadd.f32 0.0, %v375
  %v377 = vpop.f32.mrb[0].mxu0
  %378 = vmatprep.mubr.bf16.mxu0 0
  %379 = vmatmul.mubr.bf16.gmra.mrb[0].mxu0 %v227
  %v380 = vpop.f32.mrb[0].mxu0
  %v381 = vadd.f32 0.0, %v380
  %v382 = vpop.f32.mrb[0].mxu0
  %v383 = vpop.f32.mrb[0].mxu0
  %v384 = vadd.f32 0.0, %v383
  %v385 = vpop.f32.mrb[0].mxu0
  %386 = vmatprep.mubr.bf16.mxu0 0
  %387 = vmatmul.mubr.bf16.gmra.mrb[0].mxu0 %v228
  %v388 = vpop.f32.mrb[0].mxu0
  %v389 = vadd.f32 0.0, %v388
  %v390 = vpop.f32.mrb[0].mxu0
  %v391 = vpop.f32.mrb[0].mxu0
  %v392 = vadd.f32 0.0, %v391
  %v393 = vpop.f32.mrb[0].mxu0
  %394 = vmatprep.mubr.bf16.mxu0 0
  %395 = vmatmul.mubr.bf16.gmra.mrb[0].mxu0 %v229
  %v396 = vpop.f32.mrb[0].mxu0
  %v397 = vadd.f32 0.0, %v396
  %v398 = vpop.f32.mrb[0].mxu0
  %v399 = vpop.f32.mrb[0].mxu0
  %v400 = vadd.f32 0.0, %v399
  %v401 = vpop.f32.mrb[0].mxu0
  %402 = vmatprep.mubr.bf16.mxu0 0
  %403 = vmatmul.mubr.bf16.gmra.mrb[0].mxu0 %v230
  %v404 = vpop.f32.mrb[0].mxu0
  %v405 = vadd.f32 0.0, %v404
  %v406 = vpop.f32.mrb[0].mxu0
  %v407 = vpop.f32.mrb[0].mxu0
  %v408 = vadd.f32 0.0, %v407
  %v409 = vpop.f32.mrb[0].mxu0
  %410 = vmatprep.mubr.bf16.mxu0 0
  %411 = vmatmul.mubr.bf16.gmra.mrb[0].mxu0 %v231
  %v412 = vpop.f32.mrb[0].mxu0
  %v413 = vadd.f32 0.0, %v412
  %v414 = vpop.f32.mrb[0].mxu0
  %v415 = vpop.f32.mrb[0].mxu0
  %v416 = vadd.f32 0.0, %v415
  %v417 = vpop.f32.mrb[0].mxu0
  %418 = vmatprep.mubr.bf16.mxu0 0
  %419 = vmatmul.mubr.bf16.gmra.mrb[0].mxu0 %v232
  %v420 = vpop.f32.mrb[0].mxu0
  %v421 = vadd.f32 0.0, %v420
  %v422 = vpop.f32.mrb[0].mxu0
  %v423 = vpop.f32.mrb[0].mxu0
  %v424 = vadd.f32 0.0, %v423
  %v425 = vpop.f32.mrb[0].mxu0
  %426 = vmatprep.mubr.bf16.mxu0 0
  %427 = vmatmul.mubr.bf16.gmra.mrb[0].mxu0 %v233
  %v428 = vpop.f32.mrb[0].mxu0
  %v429 = vadd.f32 0.0, %v428
  %v430 = vpop.f32.mrb[0].mxu0
  %v431 = vpop.f32.mrb[0].mxu0
  %v432 = vadd.f32 0.0, %v431
  %v433 = vpop.f32.mrb[0].mxu0
  %434 = vmatprep.mubr.bf16.mxu0 0
  %435 = vmatmul.mubr.bf16.gmra.mrb[0].mxu0 %v234
  %v436 = vpop.f32.mrb[0].mxu0
  %v437 = vadd.f32 0.0, %v436
  %v438 = vpop.f32.mrb[0].mxu0
  %v439 = vpop.f32.mrb[0].mxu0
  %v440 = vadd.f32 0.0, %v439
  %v441 = vpop.f32.mrb[0].mxu0
  %442 = vmatprep.mubr.bf16.mxu0 0
  %443 = vmatmul.mubr.bf16.gmra.mrb[0].mxu0 %v235
  %v444 = vpop.f32.mrb[0].mxu0
  %v445 = vadd.f32 0.0, %v444
  %v446 = vpop.f32.mrb[0].mxu0
  %v447 = vpop.f32.mrb[0].mxu0
  %v448 = vadd.f32 0.0, %v447
  %v449 = vpop.f32.mrb[0].mxu0
  %450 = vmatprep.mubr.bf16.mxu0 0
  %451 = vmatmul.mubr.bf16.gmra.mrb[0].mxu0 %v236
  %v452 = vpop.f32.mrb[0].mxu0
  %v453 = vadd.f32 0.0, %v452
  %v454 = vpop.f32.mrb[0].mxu0
  %v455 = vpop.f32.mrb[0].mxu0
  %v456 = vadd.f32 0.0, %v455
  %v457 = vpop.f32.mrb[0].mxu0
  %458 = vmatprep.mubr.bf16.mxu0 0
  %459 = vmatmul.mubr.bf16.gmra.mrb[0].mxu0 %v237
  %v460 = vpop.f32.mrb[0].mxu0
  %v461 = vadd.f32 0.0, %v460
  %v462 = vpop.f32.mrb[0].mxu0
  %v463 = vpop.f32.mrb[0].mxu0
  %v464 = vadd.f32 0.0, %v463
  %v465 = vpop.f32.mrb[0].mxu0
  %466 = vmatprep.mubr.bf16.mxu0 0
  %467 = vmatmul.mubr.bf16.gmra.mrb[0].mxu0 %v238
  %v468 = vpop.f32.mrb[0].mxu0
  %v469 = vadd.f32 0.0, %v468
  %v470 = vpop.f32.mrb[0].mxu0
  %v471 = vpop.f32.mrb[0].mxu0
  %v472 = vadd.f32 0.0, %v471
  %v473 = vpop.f32.mrb[0].mxu0
  %474 = vmatprep.mubr.bf16.mxu0 0
  %475 = vmatmul.mubr.bf16.gmra.mrb[0].mxu0 %v239
  %v476 = vpop.f32.mrb[0].mxu0
  %v477 = vadd.f32 0.0, %v476
  %v478 = vpop.f32.mrb[0].mxu0
  %v479 = vpop.f32.mrb[0].mxu0
  %v480 = vadd.f32 0.0, %v479
  %v481 = vpop.f32.mrb[0].mxu0
  %482 = vmatprep.mubr.bf16.mxu0 0
  %483 = vmatmul.mubr.bf16.gmra.mrb[0].mxu0 %v240
  %v484 = vpop.f32.mrb[0].mxu0
  %v485 = vadd.f32 0.0, %v484
  %v486 = vpop.f32.mrb[0].mxu0
  %v487 = vpop.f32.mrb[0].mxu0
  %v488 = vadd.f32 0.0, %v487
  %v489 = vpop.f32.mrb[0].mxu0
  %490 = vmatprep.mubr.bf16.mxu0 0
  %491 = vmatmul.mubr.bf16.gmra.mrb[0].mxu0 %v241
  %v492 = vpop.f32.mrb[0].mxu0
  %v493 = vadd.f32 0.0, %v492
  %v494 = vpop.f32.mrb[0].mxu0
  %v495 = vpop.f32.mrb[0].mxu0
  %v496 = vadd.f32 0.0, %v495
  %v497 = vpop.f32.mrb[0].mxu0
  %498 = vmatprep.mubr.bf16.mxu0 0
  %499 = vmatmul.mubr.bf16.gmra.mrb[0].mxu0 %v242
  %v500 = vpop.f32.mrb[0].mxu0
  %v501 = vadd.f32 0.0, %v500
  %v502 = vpop.f32.mrb[0].mxu0
  %v503 = vpop.f32.mrb[0].mxu0
  %v504 = vadd.f32 0.0, %v503
  %v505 = vpop.f32.mrb[0].mxu0
  %506 = vmatprep.mubr.bf16.mxu0 0
  %507 = vmatmul.mubr.bf16.gmra.mrb[0].mxu0 %v243
  %v508 = vpop.f32.mrb[0].mxu0
  %v509 = vadd.f32 0.0, %v508
  %v510 = vpop.f32.mrb[0].mxu0
  %v511 = vpop.f32.mrb[0].mxu0
  %v512 = vadd.f32 0.0, %v511
  %v513 = vpop.f32.mrb[0].mxu0
  %514 = vmatprep.mubr.bf16.mxu0 0
  %515 = vmatmul.mubr.bf16.gmra.mrb[0].mxu0 %v244
  %v516 = vpop.f32.mrb[0].mxu0
  %v517 = vadd.f32 0.0, %v516
  %v518 = vpop.f32.mrb[0].mxu0
  %v519 = vpop.f32.mrb[0].mxu0
  %v520 = vadd.f32 0.0, %v519
  %v521 = vpop.f32.mrb[0].mxu0
  %522 = vmatprep.mubr.bf16.mxu0 0
  %523 = vmatmul.mubr.bf16.gmra.mrb[0].mxu0 %v245
  %v524 = vpop.f32.mrb[0].mxu0
  %v525 = vadd.f32 0.0, %v524
  %v526 = vpop.f32.mrb[0].mxu0
  %v527 = vpop.f32.mrb[0].mxu0
  %v528 = vadd.f32 0.0, %v527
  %v529 = vpop.f32.mrb[0].mxu0
  %530 = vmatprep.mubr.bf16.mxu0 0
  %531 = vmatmul.mubr.bf16.gmra.mrb[0].mxu0 %v246
  %v532 = vpop.f32.mrb[0].mxu0
  %v533 = vadd.f32 0.0, %v532
  %v534 = vpop.f32.mrb[0].mxu0
  %v535 = vpop.f32.mrb[0].mxu0
  %v536 = vadd.f32 0.0, %v535
  %v537 = vpop.f32.mrb[0].mxu0
  %538 = vmatprep.mubr.bf16.mxu0 0
  %539 = vmatmul.mubr.bf16.gmra.mrb[0].mxu0 %v247
  %v540 = vpop.f32.mrb[0].mxu0
  %v541 = vadd.f32 0.0, %v540
  %v542 = vpop.f32.mrb[0].mxu0
  %v543 = vpop.f32.mrb[0].mxu0
  %v544 = vadd.f32 0.0, %v543
  %v545 = vpop.f32.mrb[0].mxu0
  %546 = vmatprep.mubr.bf16.mxu0 0
  %547 = vmatmul.mubr.bf16.gmra.mrb[0].mxu0 %v248
  %v548 = vpop.f32.mrb[0].mxu0
  %v549 = vadd.f32 0.0, %v548
  %v550 = vpop.f32.mrb[0].mxu0
  %v551 = vpop.f32.mrb[0].mxu0
  %v552 = vadd.f32 0.0, %v551
  %v553 = vpop.f32.mrb[0].mxu0
  %554 = vmatprep.mubr.bf16.mxu0 0
  %555 = vmatmul.mubr.bf16.gmra.mrb[0].mxu0 %v249
  %v556 = vpop.f32.mrb[0].mxu0
  %v557 = vadd.f32 0.0, %v556
  %v558 = vpop.f32.mrb[0].mxu0
  %v559 = vpop.f32.mrb[0].mxu0
  %v560 = vadd.f32 0.0, %v559
  %v561 = vpop.f32.mrb[0].mxu0
  %562 = vmatprep.mubr.bf16.mxu0 0
  %563 = vmatmul.mubr.bf16.gmra.mrb[0].mxu0 %v250
  %v564 = vpop.f32.mrb[0].mxu0
  %v565 = vadd.f32 0.0, %v564
  %v566 = vpop.f32.mrb[0].mxu0
  %v567 = vpop.f32.mrb[0].mxu0
  %v568 = vadd.f32 0.0, %v567
  %v569 = vpop.f32.mrb[0].mxu0
  %570 = vmatprep.mubr.bf16.mxu0 0
  %571 = vmatmul.mubr.bf16.gmra.mrb[0].mxu0 %v251
  %v572 = vpop.f32.mrb[0].mxu0
  %v573 = vadd.f32 0.0, %v572
  %v574 = vpop.f32.mrb[0].mxu0
  %v575 = vpop.f32.mrb[0].mxu0
  %v576 = vadd.f32 0.0, %v575
  %v577 = vpop.f32.mrb[0].mxu0
  %578 = vmatprep.mubr.bf16.mxu0 0
  %579 = vmatmul.mubr.bf16.gmra.mrb[0].mxu0 %v252
  %v580 = vpop.f32.mrb[0].mxu0
  %v581 = vadd.f32 0.0, %v580
  %v582 = vpop.f32.mrb[0].mxu0
  %v583 = vpop.f32.mrb[0].mxu0
  %v584 = vadd.f32 0.0, %v583
  %v585 = vpop.f32.mrb[0].mxu0
  %586 = vmatprep.mubr.bf16.mxu0 0
  %587 = vmatmul.mubr.bf16.gmra.mrb[0].mxu0 %v253
  %v588 = vpop.f32.mrb[0].mxu0
  %v589 = vadd.f32 0.0, %v588
  %v590 = vpop.f32.mrb[0].mxu0
  %v591 = vpop.f32.mrb[0].mxu0
  %v592 = vadd.f32 0.0, %v591
  %v593 = vpop.f32.mrb[0].mxu0
  %594 = vmatprep.mubr.bf16.mxu0 0
  %595 = vmatmul.mubr.bf16.gmra.mrb[0].mxu0 %v254
  %v596 = vpop.f32.mrb[0].mxu0
  %v597 = vadd.f32 0.0, %v596
  %v598 = vpop.f32.mrb[0].mxu0
  %v599 = vpop.f32.mrb[0].mxu0
  %v600 = vadd.f32 0.0, %v599
  %v601 = vpop.f32.mrb[0].mxu0
  %602 = vmatprep.mubr.bf16.mxu0 0
  %603 = vmatmul.mubr.bf16.gmra.mrb[0].mxu0 %v255
  %v604 = vpop.f32.mrb[0].mxu0
  %v605 = vadd.f32 0.0, %v604
  %v606 = vpop.f32.mrb[0].mxu0
  %v607 = vpop.f32.mrb[0].mxu0
  %v608 = vadd.f32 0.0, %v607
  %v609 = vpop.f32.mrb[0].mxu0
  %610 = vmatprep.mubr.bf16.mxu0 0
  %611 = vmatmul.mubr.bf16.gmra.mrb[0].mxu0 %v256
  %v612 = vpop.f32.mrb[0].mxu0
  %v613 = vadd.f32 0.0, %v612
  %v614 = vpop.f32.mrb[0].mxu0
  %v615 = vpop.f32.mrb[0].mxu0
  %v616 = vadd.f32 0.0, %v615
  %v617 = vpop.f32.mrb[0].mxu0
  %618 = vmatprep.mubr.bf16.mxu0 0
  %619 = vmatmul.mubr.bf16.gmra.mrb[0].mxu0 %v257
  %v620 = vpop.f32.mrb[0].mxu0
  %v621 = vadd.f32 0.0, %v620
  %v622 = vpop.f32.mrb[0].mxu0
  %v623 = vpop.f32.mrb[0].mxu0
  %v624 = vadd.f32 0.0, %v623
  %v625 = vpop.f32.mrb[0].mxu0
  %626 = vdwg.mxu0
  %vm627 = vcmask 130048
  %v628 = vsel %vm627, %v373, 0.0
  %v629 = vsel %vm627, %v376, 0.0
  %v630 = vadd.f32 %v628, %v629
  %v631 = vsel %vm627, %v381, 0.0
  %v632 = vadd.f32 %v630, %v631
  %v633 = vsel %vm627, %v384, 0.0
  %v634 = vadd.f32 %v632, %v633
  %v635 = vsel %vm627, %v389, 0.0
  %v636 = vadd.f32 %v634, %v635
  %v637 = vsel %vm627, %v392, 0.0
  %v638 = vadd.f32 %v636, %v637
  %v639 = vsel %vm627, %v397, 0.0
  %v640 = vadd.f32 %v638, %v639
  %v641 = vsel %vm627, %v400, 0.0
  %v642 = vadd.f32 %v640, %v641
  %v643 = vsel %vm627, %v405, 0.0
  %v644 = vadd.f32 %v642, %v643
  %v645 = vsel %vm627, %v408, 0.0
  %v646 = vadd.f32 %v644, %v645
  %v647 = vsel %vm627, %v413, 0.0
  %v648 = vadd.f32 %v646, %v647
  %v649 = vsel %vm627, %v416, 0.0
  %v650 = vadd.f32 %v648, %v649
  %v651 = vsel %vm627, %v421, 0.0
  %v652 = vadd.f32 %v650, %v651
  %v653 = vsel %vm627, %v424, 0.0
  %v654 = vadd.f32 %v652, %v653
  %v655 = vsel %vm627, %v429, 0.0
  %v656 = vadd.f32 %v654, %v655
  %v657 = vsel %vm627, %v432, 0.0
  %v658 = vadd.f32 %v656, %v657
  %v659 = vsel %vm627, %v437, 0.0
  %v660 = vadd.f32 %v658, %v659
  %v661 = vsel %vm627, %v440, 0.0
  %v662 = vadd.f32 %v660, %v661
  %v663 = vsel %vm627, %v445, 0.0
  %v664 = vadd.f32 %v662, %v663
  %v665 = vsel %vm627, %v448, 0.0
  %v666 = vadd.f32 %v664, %v665
  %v667 = vsel %vm627, %v453, 0.0
  %v668 = vadd.f32 %v666, %v667
  %v669 = vsel %vm627, %v456, 0.0
  %v670 = vadd.f32 %v668, %v669
  %v671 = vsel %vm627, %v461, 0.0
  %v672 = vadd.f32 %v670, %v671
  %v673 = vsel %vm627, %v464, 0.0
  %v674 = vadd.f32 %v672, %v673
  %v675 = vsel %vm627, %v469, 0.0
  %v676 = vadd.f32 %v674, %v675
  %v677 = vsel %vm627, %v472, 0.0
  %v678 = vadd.f32 %v676, %v677
  %v679 = vsel %vm627, %v477, 0.0
  %v680 = vadd.f32 %v678, %v679
  %v681 = vsel %vm627, %v480, 0.0
  %v682 = vadd.f32 %v680, %v681
  %v683 = vsel %vm627, %v485, 0.0
  %v684 = vadd.f32 %v682, %v683
  %v685 = vsel %vm627, %v488, 0.0
  %v686 = vadd.f32 %v684, %v685
  %v687 = vsel %vm627, %v493, 0.0
  %v688 = vadd.f32 %v686, %v687
  %v689 = vsel %vm627, %v496, 0.0
  %v690 = vadd.f32 %v688, %v689
  %v691 = vsel %vm627, %v501, 0.0
  %v692 = vadd.f32 %v690, %v691
  %v693 = vsel %vm627, %v504, 0.0
  %v694 = vadd.f32 %v692, %v693
  %v695 = vsel %vm627, %v509, 0.0
  %v696 = vadd.f32 %v694, %v695
  %v697 = vsel %vm627, %v512, 0.0
  %v698 = vadd.f32 %v696, %v697
  %v699 = vsel %vm627, %v517, 0.0
  %v700 = vadd.f32 %v698, %v699
  %v701 = vsel %vm627, %v520, 0.0
  %v702 = vadd.f32 %v700, %v701
  %v703 = vsel %vm627, %v525, 0.0
  %v704 = vadd.f32 %v702, %v703
  %v705 = vsel %vm627, %v528, 0.0
  %v706 = vadd.f32 %v704, %v705
  %v707 = vsel %vm627, %v533, 0.0
  %v708 = vadd.f32 %v706, %v707
  %v709 = vsel %vm627, %v536, 0.0
  %v710 = vadd.f32 %v708, %v709
  %v711 = vsel %vm627, %v541, 0.0
  %v712 = vadd.f32 %v710, %v711
  %v713 = vsel %vm627, %v544, 0.0
  %v714 = vadd.f32 %v712, %v713
  %v715 = vsel %vm627, %v549, 0.0
  %v716 = vadd.f32 %v714, %v715
  %v717 = vsel %vm627, %v552, 0.0
  %v718 = vadd.f32 %v716, %v717
  %v719 = vsel %vm627, %v557, 0.0
  %v720 = vadd.f32 %v718, %v719
  %v721 = vsel %vm627, %v560, 0.0
  %v722 = vadd.f32 %v720, %v721
  %v723 = vsel %vm627, %v565, 0.0
  %v724 = vadd.f32 %v722, %v723
  %v725 = vsel %vm627, %v568, 0.0
  %v726 = vadd.f32 %v724, %v725
  %v727 = vsel %vm627, %v573, 0.0
  %v728 = vadd.f32 %v726, %v727
  %v729 = vsel %vm627, %v576, 0.0
  %v730 = vadd.f32 %v728, %v729
  %v731 = vsel %vm627, %v581, 0.0
  %v732 = vadd.f32 %v730, %v731
  %v733 = vsel %vm627, %v584, 0.0
  %v734 = vadd.f32 %v732, %v733
  %v735 = vsel %vm627, %v589, 0.0
  %v736 = vadd.f32 %v734, %v735
  %v737 = vsel %vm627, %v592, 0.0
  %v738 = vadd.f32 %v736, %v737
  %v739 = vsel %vm627, %v597, 0.0
  %v740 = vadd.f32 %v738, %v739
  %v741 = vsel %vm627, %v600, 0.0
  %v742 = vadd.f32 %v740, %v741
  %v743 = vsel %vm627, %v605, 0.0
  %v744 = vadd.f32 %v742, %v743
  %v745 = vsel %vm627, %v608, 0.0
  %v746 = vadd.f32 %v744, %v745
  %v747 = vsel %vm627, %v613, 0.0
  %v748 = vadd.f32 %v746, %v747
  %v749 = vsel %vm627, %v616, 0.0
  %v750 = vadd.f32 %v748, %v749
  %v751 = vsel %vm627, %v621, 0.0
  %v752 = vadd.f32 %v750, %v751
  %v753 = vsel %vm627, %v624, 0.0
  %v754 = vadd.f32 %v752, %v753
  %v755 = vrot.slane %v754, 4
  %v756 = vadd.f32 %v754, %v755
  %v757 = vrot.slane %v756, 2
  %v758 = vadd.f32 %v756, %v757
  %v759 = vrot.slane %v758, 1
  %v760 = vadd.f32 %v758, %v759
  %v761 = vrcp.pop 512.0
  %v762 = vmul.f32 %v760, %v761
  %v763 = vsub.f32 %v373, %v762
  %v764 = vsub.f32 %v376, %v762
  %v765 = vsub.f32 %v381, %v762
  %v766 = vsub.f32 %v384, %v762
  %v767 = vsub.f32 %v389, %v762
  %v768 = vsub.f32 %v392, %v762
  %v769 = vsub.f32 %v397, %v762
  %v770 = vsub.f32 %v400, %v762
  %v771 = vsub.f32 %v405, %v762
  %v772 = vsub.f32 %v408, %v762
  %v773 = vsub.f32 %v413, %v762
  %v774 = vsub.f32 %v416, %v762
  %v775 = vsub.f32 %v421, %v762
  %v776 = vsub.f32 %v424, %v762
  %v777 = vsub.f32 %v429, %v762
  %v778 = vsub.f32 %v432, %v762
  %v779 = vsub.f32 %v437, %v762
  %v780 = vsub.f32 %v440, %v762
  %v781 = vsub.f32 %v445, %v762
  %v782 = vsub.f32 %v448, %v762
  %v783 = vsub.f32 %v453, %v762
  %v784 = vsub.f32 %v456, %v762
  %v785 = vsub.f32 %v461, %v762
  %v786 = vsub.f32 %v464, %v762
  %v787 = vsub.f32 %v469, %v762
  %v788 = vsub.f32 %v472, %v762
  %v789 = vsub.f32 %v477, %v762
  %v790 = vsub.f32 %v480, %v762
  %v791 = vsub.f32 %v485, %v762
  %v792 = vsub.f32 %v488, %v762
  %v793 = vsub.f32 %v493, %v762
  %v794 = vsub.f32 %v496, %v762
  %v795 = vsub.f32 %v501, %v762
  %v796 = vsub.f32 %v504, %v762
  %v797 = vsub.f32 %v509, %v762
  %v798 = vsub.f32 %v512, %v762
  %v799 = vsub.f32 %v517, %v762
  %v800 = vsub.f32 %v520, %v762
  %v801 = vsub.f32 %v525, %v762
  %v802 = vsub.f32 %v528, %v762
  %v803 = vsub.f32 %v533, %v762
  %v804 = vsub.f32 %v536, %v762
  %v805 = vsub.f32 %v541, %v762
  %v806 = vsub.f32 %v544, %v762
  %v807 = vsub.f32 %v549, %v762
  %v808 = vsub.f32 %v552, %v762
  %v809 = vsub.f32 %v557, %v762
  %v810 = vsub.f32 %v560, %v762
  %v811 = vsub.f32 %v565, %v762
  %v812 = vsub.f32 %v568, %v762
  %v813 = vsub.f32 %v573, %v762
  %v814 = vsub.f32 %v576, %v762
  %v815 = vsub.f32 %v581, %v762
  %v816 = vsub.f32 %v584, %v762
  %v817 = vsub.f32 %v589, %v762
  %v818 = vsub.f32 %v592, %v762
  %v819 = vsub.f32 %v597, %v762
  %v820 = vsub.f32 %v600, %v762
  %v821 = vsub.f32 %v605, %v762
  %v822 = vsub.f32 %v608, %v762
  %v823 = vsub.f32 %v613, %v762
  %v824 = vsub.f32 %v616, %v762
  %v825 = vsub.f32 %v621, %v762
  %v826 = vsub.f32 %v624, %v762
  %v827 = vmul.f32 %v763, %v763
  %v828 = vmul.f32 %v764, %v764
  %v829 = vmul.f32 %v765, %v765
  %v830 = vmul.f32 %v766, %v766
  %v831 = vmul.f32 %v767, %v767
  %v832 = vmul.f32 %v768, %v768
  %v833 = vmul.f32 %v769, %v769
  %v834 = vmul.f32 %v770, %v770
  %v835 = vmul.f32 %v771, %v771
  %v836 = vmul.f32 %v772, %v772
  %v837 = vmul.f32 %v773, %v773
  %v838 = vmul.f32 %v774, %v774
  %v839 = vmul.f32 %v775, %v775
  %v840 = vmul.f32 %v776, %v776
  %v841 = vmul.f32 %v777, %v777
  %v842 = vmul.f32 %v778, %v778
  %v843 = vmul.f32 %v779, %v779
  %v844 = vmul.f32 %v780, %v780
  %v845 = vmul.f32 %v781, %v781
  %v846 = vmul.f32 %v782, %v782
  %v847 = vmul.f32 %v783, %v783
  %v848 = vmul.f32 %v784, %v784
  %v849 = vmul.f32 %v785, %v785
  %v850 = vmul.f32 %v786, %v786
  %v851 = vmul.f32 %v787, %v787
  %v852 = vmul.f32 %v788, %v788
  %v853 = vmul.f32 %v789, %v789
  %v854 = vmul.f32 %v790, %v790
  %v855 = vmul.f32 %v791, %v791
  %v856 = vmul.f32 %v792, %v792
  %v857 = vmul.f32 %v793, %v793
  %v858 = vmul.f32 %v794, %v794
  %v859 = vmul.f32 %v795, %v795
  %v860 = vmul.f32 %v796, %v796
  %v861 = vmul.f32 %v797, %v797
  %v862 = vmul.f32 %v798, %v798
  %v863 = vmul.f32 %v799, %v799
  %v864 = vmul.f32 %v800, %v800
  %v865 = vmul.f32 %v801, %v801
  %v866 = vmul.f32 %v802, %v802
  %v867 = vmul.f32 %v803, %v803
  %v868 = vmul.f32 %v804, %v804
  %v869 = vmul.f32 %v805, %v805
  %v870 = vmul.f32 %v806, %v806
  %v871 = vmul.f32 %v807, %v807
  %v872 = vmul.f32 %v808, %v808
  %v873 = vmul.f32 %v809, %v809
  %v874 = vmul.f32 %v810, %v810
  %v875 = vmul.f32 %v811, %v811
  %v876 = vmul.f32 %v812, %v812
  %v877 = vmul.f32 %v813, %v813
  %v878 = vmul.f32 %v814, %v814
  %v879 = vmul.f32 %v815, %v815
  %v880 = vmul.f32 %v816, %v816
  %v881 = vmul.f32 %v817, %v817
  %v882 = vmul.f32 %v818, %v818
  %v883 = vmul.f32 %v819, %v819
  %v884 = vmul.f32 %v820, %v820
  %v885 = vmul.f32 %v821, %v821
  %v886 = vmul.f32 %v822, %v822
  %v887 = vmul.f32 %v823, %v823
  %v888 = vmul.f32 %v824, %v824
  %v889 = vmul.f32 %v825, %v825
  %v890 = vmul.f32 %v826, %v826
  %v891 = vsel %vm627, %v827, 0.0
  %v892 = vsel %vm627, %v828, 0.0
  %v893 = vadd.f32 %v891, %v892
  %v894 = vsel %vm627, %v829, 0.0
  %v895 = vadd.f32 %v893, %v894
  %v896 = vsel %vm627, %v830, 0.0
  %v897 = vadd.f32 %v895, %v896
  %v898 = vsel %vm627, %v831, 0.0
  %v899 = vadd.f32 %v897, %v898
  %v900 = vsel %vm627, %v832, 0.0
  %v901 = vadd.f32 %v899, %v900
  %v902 = vsel %vm627, %v833, 0.0
  %v903 = vadd.f32 %v901, %v902
  %v904 = vsel %vm627, %v834, 0.0
  %v905 = vadd.f32 %v903, %v904
  %v906 = vsel %vm627, %v835, 0.0
  %v907 = vadd.f32 %v905, %v906
  %v908 = vsel %vm627, %v836, 0.0
  %v909 = vadd.f32 %v907, %v908
  %v910 = vsel %vm627, %v837, 0.0
  %v911 = vadd.f32 %v909, %v910
  %v912 = vsel %vm627, %v838, 0.0
  %v913 = vadd.f32 %v911, %v912
  %v914 = vsel %vm627, %v839, 0.0
  %v915 = vadd.f32 %v913, %v914
  %v916 = vsel %vm627, %v840, 0.0
  %v917 = vadd.f32 %v915, %v916
  %v918 = vsel %vm627, %v841, 0.0
  %v919 = vadd.f32 %v917, %v918
  %v920 = vsel %vm627, %v842, 0.0
  %v921 = vadd.f32 %v919, %v920
  %v922 = vsel %vm627, %v843, 0.0
  %v923 = vadd.f32 %v921, %v922
  %v924 = vsel %vm627, %v844, 0.0
  %v925 = vadd.f32 %v923, %v924
  %v926 = vsel %vm627, %v845, 0.0
  %v927 = vadd.f32 %v925, %v926
  %v928 = vsel %vm627, %v846, 0.0
  %v929 = vadd.f32 %v927, %v928
  %v930 = vsel %vm627, %v847, 0.0
  %v931 = vadd.f32 %v929, %v930
  %v932 = vsel %vm627, %v848, 0.0
  %v933 = vadd.f32 %v931, %v932
  %v934 = vsel %vm627, %v849, 0.0
  %v935 = vadd.f32 %v933, %v934
  %v936 = vsel %vm627, %v850, 0.0
  %v937 = vadd.f32 %v935, %v936
  %v938 = vsel %vm627, %v851, 0.0
  %v939 = vadd.f32 %v937, %v938
  %v940 = vsel %vm627, %v852, 0.0
  %v941 = vadd.f32 %v939, %v940
  %v942 = vsel %vm627, %v853, 0.0
  %v943 = vadd.f32 %v941, %v942
  %v944 = vsel %vm627, %v854, 0.0
  %v945 = vadd.f32 %v943, %v944
  %v946 = vsel %vm627, %v855, 0.0
  %v947 = vadd.f32 %v945, %v946
  %v948 = vsel %vm627, %v856, 0.0
  %v949 = vadd.f32 %v947, %v948
  %v950 = vsel %vm627, %v857, 0.0
  %v951 = vadd.f32 %v949, %v950
  %v952 = vsel %vm627, %v858, 0.0
  %v953 = vadd.f32 %v951, %v952
  %v954 = vsel %vm627, %v859, 0.0
  %v955 = vadd.f32 %v953, %v954
  %v956 = vsel %vm627, %v860, 0.0
  %v957 = vadd.f32 %v955, %v956
  %v958 = vsel %vm627, %v861, 0.0
  %v959 = vadd.f32 %v957, %v958
  %v960 = vsel %vm627, %v862, 0.0
  %v961 = vadd.f32 %v959, %v960
  %v962 = vsel %vm627, %v863, 0.0
  %v963 = vadd.f32 %v961, %v962
  %v964 = vsel %vm627, %v864, 0.0
  %v965 = vadd.f32 %v963, %v964
  %v966 = vsel %vm627, %v865, 0.0
  %v967 = vadd.f32 %v965, %v966
  %v968 = vsel %vm627, %v866, 0.0
  %v969 = vadd.f32 %v967, %v968
  %v970 = vsel %vm627, %v867, 0.0
  %v971 = vadd.f32 %v969, %v970
  %v972 = vsel %vm627, %v868, 0.0
  %v973 = vadd.f32 %v971, %v972
  %v974 = vsel %vm627, %v869, 0.0
  %v975 = vadd.f32 %v973, %v974
  %v976 = vsel %vm627, %v870, 0.0
  %v977 = vadd.f32 %v975, %v976
  %v978 = vsel %vm627, %v871, 0.0
  %v979 = vadd.f32 %v977, %v978
  %v980 = vsel %vm627, %v872, 0.0
  %v981 = vadd.f32 %v979, %v980
  %v982 = vsel %vm627, %v873, 0.0
  %v983 = vadd.f32 %v981, %v982
  %v984 = vsel %vm627, %v874, 0.0
  %v985 = vadd.f32 %v983, %v984
  %v986 = vsel %vm627, %v875, 0.0
  %v987 = vadd.f32 %v985, %v986
  %v988 = vsel %vm627, %v876, 0.0
  %v989 = vadd.f32 %v987, %v988
  %v990 = vsel %vm627, %v877, 0.0
  %v991 = vadd.f32 %v989, %v990
  %v992 = vsel %vm627, %v878, 0.0
  %v993 = vadd.f32 %v991, %v992
  %v994 = vsel %vm627, %v879, 0.0
  %v995 = vadd.f32 %v993, %v994
  %v996 = vsel %vm627, %v880, 0.0
  %v997 = vadd.f32 %v995, %v996
  %v998 = vsel %vm627, %v881, 0.0
  %v999 = vadd.f32 %v997, %v998
  %v1000 = vsel %vm627, %v882, 0.0
  %v1001 = vadd.f32 %v999, %v1000
  %v1002 = vsel %vm627, %v883, 0.0
  %v1003 = vadd.f32 %v1001, %v1002
  %v1004 = vsel %vm627, %v884, 0.0
  %v1005 = vadd.f32 %v1003, %v1004
  %v1006 = vsel %vm627, %v885, 0.0
  %v1007 = vadd.f32 %v1005, %v1006
  %v1008 = vsel %vm627, %v886, 0.0
  %v1009 = vadd.f32 %v1007, %v1008
  %v1010 = vsel %vm627, %v887, 0.0
  %v1011 = vadd.f32 %v1009, %v1010
  %v1012 = vsel %vm627, %v888, 0.0
  %v1013 = vadd.f32 %v1011, %v1012
  %v1014 = vsel %vm627, %v889, 0.0
  %v1015 = vadd.f32 %v1013, %v1014
  %v1016 = vsel %vm627, %v890, 0.0
  %v1017 = vadd.f32 %v1015, %v1016
  %v1018 = vrot.slane %v1017, 4
  %v1019 = vadd.f32 %v1017, %v1018
  %v1020 = vrot.slane %v1019, 2
  %v1021 = vadd.f32 %v1019, %v1020
  %v1022 = vrot.slane %v1021, 1
  %v1023 = vadd.f32 %v1021, %v1022
  %v1024 = vmul.f32 %v1023, %v761
  %v1025 = vadd.f32 %v1024, 1e-05
  %v1026 = vrsqrt.pop %v1025
  %v1027 = vmul.f32 %v763, %v1026
  %v1028 = vmul.f32 %v764, %v1026
  %v1029 = vmul.f32 %v765, %v1026
  %v1030 = vmul.f32 %v766, %v1026
  %v1031 = vmul.f32 %v767, %v1026
  %v1032 = vmul.f32 %v768, %v1026
  %v1033 = vmul.f32 %v769, %v1026
  %v1034 = vmul.f32 %v770, %v1026
  %v1035 = vmul.f32 %v771, %v1026
  %v1036 = vmul.f32 %v772, %v1026
  %v1037 = vmul.f32 %v773, %v1026
  %v1038 = vmul.f32 %v774, %v1026
  %v1039 = vmul.f32 %v775, %v1026
  %v1040 = vmul.f32 %v776, %v1026
  %v1041 = vmul.f32 %v777, %v1026
  %v1042 = vmul.f32 %v778, %v1026
  %v1043 = vmul.f32 %v779, %v1026
  %v1044 = vmul.f32 %v780, %v1026
  %v1045 = vmul.f32 %v781, %v1026
  %v1046 = vmul.f32 %v782, %v1026
  %v1047 = vmul.f32 %v783, %v1026
  %v1048 = vmul.f32 %v784, %v1026
  %v1049 = vmul.f32 %v785, %v1026
  %v1050 = vmul.f32 %v786, %v1026
  %v1051 = vmul.f32 %v787, %v1026
  %v1052 = vmul.f32 %v788, %v1026
  %v1053 = vmul.f32 %v789, %v1026
  %v1054 = vmul.f32 %v790, %v1026
  %v1055 = vmul.f32 %v791, %v1026
  %v1056 = vmul.f32 %v792, %v1026
  %v1057 = vmul.f32 %v793, %v1026
  %v1058 = vmul.f32 %v794, %v1026
  %v1059 = vmul.f32 %v795, %v1026
  %v1060 = vmul.f32 %v796, %v1026
  %v1061 = vmul.f32 %v797, %v1026
  %v1062 = vmul.f32 %v798, %v1026
  %v1063 = vmul.f32 %v799, %v1026
  %v1064 = vmul.f32 %v800, %v1026
  %v1065 = vmul.f32 %v801, %v1026
  %v1066 = vmul.f32 %v802, %v1026
  %v1067 = vmul.f32 %v803, %v1026
  %v1068 = vmul.f32 %v804, %v1026
  %v1069 = vmul.f32 %v805, %v1026
  %v1070 = vmul.f32 %v806, %v1026
  %v1071 = vmul.f32 %v807, %v1026
  %v1072 = vmul.f32 %v808, %v1026
  %v1073 = vmul.f32 %v809, %v1026
  %v1074 = vmul.f32 %v810, %v1026
  %v1075 = vmul.f32 %v811, %v1026
  %v1076 = vmul.f32 %v812, %v1026
  %v1077 = vmul.f32 %v813, %v1026
  %v1078 = vmul.f32 %v814, %v1026
  %v1079 = vmul.f32 %v815, %v1026
  %v1080 = vmul.f32 %v816, %v1026
  %v1081 = vmul.f32 %v817, %v1026
  %v1082 = vmul.f32 %v818, %v1026
  %v1083 = vmul.f32 %v819, %v1026
  %v1084 = vmul.f32 %v820, %v1026
  %v1085 = vmul.f32 %v821, %v1026
  %v1086 = vmul.f32 %v822, %v1026
  %v1087 = vmul.f32 %v823, %v1026
  %v1088 = vmul.f32 %v824, %v1026
  %v1089 = vmul.f32 %v825, %v1026
  %v1090 = vmul.f32 %v826, %v1026
  %v1091 = vld [vmem:[%s2] sm:$0x1]
  %v1093 = vlaneseq
  %v1094 = vshrl.u32 %v1093, 7
  %v1095 = vsub.s32 0, %v1094
  %v1096 = vrot.slane %v1091, %v1095
  %v1098 = vmul.f32 %v1027, %v1096
  %v1099 = vmul.f32 %v1028, %v1096
  %v1100 = vmul.f32 %v1029, %v1096
  %v1101 = vmul.f32 %v1030, %v1096
  %v1102 = vmul.f32 %v1031, %v1096
  %v1103 = vmul.f32 %v1032, %v1096
  %v1104 = vmul.f32 %v1033, %v1096
  %v1105 = vmul.f32 %v1034, %v1096
  %v1106 = vmul.f32 %v1035, %v1096
  %v1107 = vmul.f32 %v1036, %v1096
  %v1108 = vmul.f32 %v1037, %v1096
  %v1109 = vmul.f32 %v1038, %v1096
  %v1110 = vmul.f32 %v1039, %v1096
  %v1111 = vmul.f32 %v1040, %v1096
  %v1112 = vmul.f32 %v1041, %v1096
  %v1113 = vmul.f32 %v1042, %v1096
  %v1114 = vmul.f32 %v1043, %v1096
  %v1115 = vmul.f32 %v1044, %v1096
  %v1116 = vmul.f32 %v1045, %v1096
  %v1117 = vmul.f32 %v1046, %v1096
  %v1118 = vmul.f32 %v1047, %v1096
  %v1119 = vmul.f32 %v1048, %v1096
  %v1120 = vmul.f32 %v1049, %v1096
  %v1121 = vmul.f32 %v1050, %v1096
  %v1122 = vmul.f32 %v1051, %v1096
  %v1123 = vmul.f32 %v1052, %v1096
  %v1124 = vmul.f32 %v1053, %v1096
  %v1125 = vmul.f32 %v1054, %v1096
  %v1126 = vmul.f32 %v1055, %v1096
  %v1127 = vmul.f32 %v1056, %v1096
  %v1128 = vmul.f32 %v1057, %v1096
  %v1129 = vmul.f32 %v1058, %v1096
  %v1130 = vmul.f32 %v1059, %v1096
  %v1131 = vmul.f32 %v1060, %v1096
  %v1132 = vmul.f32 %v1061, %v1096
  %v1133 = vmul.f32 %v1062, %v1096
  %v1134 = vmul.f32 %v1063, %v1096
  %v1135 = vmul.f32 %v1064, %v1096
  %v1136 = vmul.f32 %v1065, %v1096
  %v1137 = vmul.f32 %v1066, %v1096
  %v1138 = vmul.f32 %v1067, %v1096
  %v1139 = vmul.f32 %v1068, %v1096
  %v1140 = vmul.f32 %v1069, %v1096
  %v1141 = vmul.f32 %v1070, %v1096
  %v1142 = vmul.f32 %v1071, %v1096
  %v1143 = vmul.f32 %v1072, %v1096
  %v1144 = vmul.f32 %v1073, %v1096
  %v1145 = vmul.f32 %v1074, %v1096
  %v1146 = vmul.f32 %v1075, %v1096
  %v1147 = vmul.f32 %v1076, %v1096
  %v1148 = vmul.f32 %v1077, %v1096
  %v1149 = vmul.f32 %v1078, %v1096
  %v1150 = vmul.f32 %v1079, %v1096
  %v1151 = vmul.f32 %v1080, %v1096
  %v1152 = vmul.f32 %v1081, %v1096
  %v1153 = vmul.f32 %v1082, %v1096
  %v1154 = vmul.f32 %v1083, %v1096
  %v1155 = vmul.f32 %v1084, %v1096
  %v1156 = vmul.f32 %v1085, %v1096
  %v1157 = vmul.f32 %v1086, %v1096
  %v1158 = vmul.f32 %v1087, %v1096
  %v1159 = vmul.f32 %v1088, %v1096
  %v1160 = vmul.f32 %v1089, %v1096
  %v1161 = vmul.f32 %v1090, %v1096
  %v1162 = vld [vmem:[%s3] sm:$0x1]
  %v1164 = vlaneseq
  %v1165 = vshrl.u32 %v1164, 7
  %v1166 = vsub.s32 0, %v1165
  %v1167 = vrot.slane %v1162, %v1166
  %v1169 = vadd.f32 %v1098, %v1167
  %v1170 = vadd.f32 %v1099, %v1167
  %v1171 = vadd.f32 %v1100, %v1167
  %v1172 = vadd.f32 %v1101, %v1167
  %v1173 = vadd.f32 %v1102, %v1167
  %v1174 = vadd.f32 %v1103, %v1167
  %v1175 = vadd.f32 %v1104, %v1167
  %v1176 = vadd.f32 %v1105, %v1167
  %v1177 = vadd.f32 %v1106, %v1167
  %v1178 = vadd.f32 %v1107, %v1167
  %v1179 = vadd.f32 %v1108, %v1167
  %v1180 = vadd.f32 %v1109, %v1167
  %v1181 = vadd.f32 %v1110, %v1167
  %v1182 = vadd.f32 %v1111, %v1167
  %v1183 = vadd.f32 %v1112, %v1167
  %v1184 = vadd.f32 %v1113, %v1167
  %v1185 = vadd.f32 %v1114, %v1167
  %v1186 = vadd.f32 %v1115, %v1167
  %v1187 = vadd.f32 %v1116, %v1167
  %v1188 = vadd.f32 %v1117, %v1167
  %v1189 = vadd.f32 %v1118, %v1167
  %v1190 = vadd.f32 %v1119, %v1167
  %v1191 = vadd.f32 %v1120, %v1167
  %v1192 = vadd.f32 %v1121, %v1167
  %v1193 = vadd.f32 %v1122, %v1167
  %v1194 = vadd.f32 %v1123, %v1167
  %v1195 = vadd.f32 %v1124, %v1167
  %v1196 = vadd.f32 %v1125, %v1167
  %v1197 = vadd.f32 %v1126, %v1167
  %v1198 = vadd.f32 %v1127, %v1167
  %v1199 = vadd.f32 %v1128, %v1167
  %v1200 = vadd.f32 %v1129, %v1167
  %v1201 = vadd.f32 %v1130, %v1167
  %v1202 = vadd.f32 %v1131, %v1167
  %v1203 = vadd.f32 %v1132, %v1167
  %v1204 = vadd.f32 %v1133, %v1167
  %v1205 = vadd.f32 %v1134, %v1167
  %v1206 = vadd.f32 %v1135, %v1167
  %v1207 = vadd.f32 %v1136, %v1167
  %v1208 = vadd.f32 %v1137, %v1167
  %v1209 = vadd.f32 %v1138, %v1167
  %v1210 = vadd.f32 %v1139, %v1167
  %v1211 = vadd.f32 %v1140, %v1167
  %v1212 = vadd.f32 %v1141, %v1167
  %v1213 = vadd.f32 %v1142, %v1167
  %v1214 = vadd.f32 %v1143, %v1167
  %v1215 = vadd.f32 %v1144, %v1167
  %v1216 = vadd.f32 %v1145, %v1167
  %v1217 = vadd.f32 %v1146, %v1167
  %v1218 = vadd.f32 %v1147, %v1167
  %v1219 = vadd.f32 %v1148, %v1167
  %v1220 = vadd.f32 %v1149, %v1167
  %v1221 = vadd.f32 %v1150, %v1167
  %v1222 = vadd.f32 %v1151, %v1167
  %v1223 = vadd.f32 %v1152, %v1167
  %v1224 = vadd.f32 %v1153, %v1167
  %v1225 = vadd.f32 %v1154, %v1167
  %v1226 = vadd.f32 %v1155, %v1167
  %v1227 = vadd.f32 %v1156, %v1167
  %v1228 = vadd.f32 %v1157, %v1167
  %v1229 = vadd.f32 %v1158, %v1167
  %v1230 = vadd.f32 %v1159, %v1167
  %v1231 = vadd.f32 %v1160, %v1167
  %v1232 = vadd.f32 %v1161, %v1167
  %v1233 = vmax.f32 %v1169, 0.0
  %v1234 = vmax.f32 %v1170, 0.0
  %v1235 = vmax.f32 %v1171, 0.0
  %v1236 = vmax.f32 %v1172, 0.0
  %v1237 = vmax.f32 %v1173, 0.0
  %v1238 = vmax.f32 %v1174, 0.0
  %v1239 = vmax.f32 %v1175, 0.0
  %v1240 = vmax.f32 %v1176, 0.0
  %v1241 = vmax.f32 %v1177, 0.0
  %v1242 = vmax.f32 %v1178, 0.0
  %v1243 = vmax.f32 %v1179, 0.0
  %v1244 = vmax.f32 %v1180, 0.0
  %v1245 = vmax.f32 %v1181, 0.0
  %v1246 = vmax.f32 %v1182, 0.0
  %v1247 = vmax.f32 %v1183, 0.0
  %v1248 = vmax.f32 %v1184, 0.0
  %v1249 = vmax.f32 %v1185, 0.0
  %v1250 = vmax.f32 %v1186, 0.0
  %v1251 = vmax.f32 %v1187, 0.0
  %v1252 = vmax.f32 %v1188, 0.0
  %v1253 = vmax.f32 %v1189, 0.0
  %v1254 = vmax.f32 %v1190, 0.0
  %v1255 = vmax.f32 %v1191, 0.0
  %v1256 = vmax.f32 %v1192, 0.0
  %v1257 = vmax.f32 %v1193, 0.0
  %v1258 = vmax.f32 %v1194, 0.0
  %v1259 = vmax.f32 %v1195, 0.0
  %v1260 = vmax.f32 %v1196, 0.0
  %v1261 = vmax.f32 %v1197, 0.0
  %v1262 = vmax.f32 %v1198, 0.0
  %v1263 = vmax.f32 %v1199, 0.0
  %v1264 = vmax.f32 %v1200, 0.0
  %v1265 = vmax.f32 %v1201, 0.0
  %v1266 = vmax.f32 %v1202, 0.0
  %v1267 = vmax.f32 %v1203, 0.0
  %v1268 = vmax.f32 %v1204, 0.0
  %v1269 = vmax.f32 %v1205, 0.0
  %v1270 = vmax.f32 %v1206, 0.0
  %v1271 = vmax.f32 %v1207, 0.0
  %v1272 = vmax.f32 %v1208, 0.0
  %v1273 = vmax.f32 %v1209, 0.0
  %v1274 = vmax.f32 %v1210, 0.0
  %v1275 = vmax.f32 %v1211, 0.0
  %v1276 = vmax.f32 %v1212, 0.0
  %v1277 = vmax.f32 %v1213, 0.0
  %v1278 = vmax.f32 %v1214, 0.0
  %v1279 = vmax.f32 %v1215, 0.0
  %v1280 = vmax.f32 %v1216, 0.0
  %v1281 = vmax.f32 %v1217, 0.0
  %v1282 = vmax.f32 %v1218, 0.0
  %v1283 = vmax.f32 %v1219, 0.0
  %v1284 = vmax.f32 %v1220, 0.0
  %v1285 = vmax.f32 %v1221, 0.0
  %v1286 = vmax.f32 %v1222, 0.0
  %v1287 = vmax.f32 %v1223, 0.0
  %v1288 = vmax.f32 %v1224, 0.0
  %v1289 = vmax.f32 %v1225, 0.0
  %v1290 = vmax.f32 %v1226, 0.0
  %v1291 = vmax.f32 %v1227, 0.0
  %v1292 = vmax.f32 %v1228, 0.0
  %v1293 = vmax.f32 %v1229, 0.0
  %v1294 = vmax.f32 %v1230, 0.0
  %v1295 = vmax.f32 %v1231, 0.0
  %v1296 = vmax.f32 %v1232, 0.0
  %v1297 = vpack.c.bf16 %v1234, %v1233
  %v1298 = vpack.c.bf16 %v1236, %v1235
  %v1299 = vpack.c.bf16 %v1238, %v1237
  %v1300 = vpack.c.bf16 %v1240, %v1239
  %v1301 = vpack.c.bf16 %v1242, %v1241
  %v1302 = vpack.c.bf16 %v1244, %v1243
  %v1303 = vpack.c.bf16 %v1246, %v1245
  %v1304 = vpack.c.bf16 %v1248, %v1247
  %v1305 = vpack.c.bf16 %v1250, %v1249
  %v1306 = vpack.c.bf16 %v1252, %v1251
  %v1307 = vpack.c.bf16 %v1254, %v1253
  %v1308 = vpack.c.bf16 %v1256, %v1255
  %v1309 = vpack.c.bf16 %v1258, %v1257
  %v1310 = vpack.c.bf16 %v1260, %v1259
  %v1311 = vpack.c.bf16 %v1262, %v1261
  %v1312 = vpack.c.bf16 %v1264, %v1263
  %v1313 = vpack.c.bf16 %v1266, %v1265
  %v1314 = vpack.c.bf16 %v1268, %v1267
  %v1315 = vpack.c.bf16 %v1270, %v1269
  %v1316 = vpack.c.bf16 %v1272, %v1271
  %v1317 = vpack.c.bf16 %v1274, %v1273
  %v1318 = vpack.c.bf16 %v1276, %v1275
  %v1319 = vpack.c.bf16 %v1278, %v1277
  %v1320 = vpack.c.bf16 %v1280, %v1279
  %v1321 = vpack.c.bf16 %v1282, %v1281
  %v1322 = vpack.c.bf16 %v1284, %v1283
  %v1323 = vpack.c.bf16 %v1286, %v1285
  %v1324 = vpack.c.bf16 %v1288, %v1287
  %v1325 = vpack.c.bf16 %v1290, %v1289
  %v1326 = vpack.c.bf16 %v1292, %v1291
  %v1327 = vpack.c.bf16 %v1294, %v1293
  %v1328 = vpack.c.bf16 %v1296, %v1295
  %v1361 = vunpack.c.l.b16 %v1297
  %v1362 = vunpack.c.h.b16 %v1297
  %v1363 = vunpack.c.l.b16 %v1298
  %v1364 = vunpack.c.h.b16 %v1298
  %v1365 = vunpack.c.l.b16 %v1299
  %v1366 = vunpack.c.h.b16 %v1299
  %v1367 = vunpack.c.l.b16 %v1300
  %v1368 = vunpack.c.h.b16 %v1300
  %v1369 = vunpack.c.l.b16 %v1301
  %v1370 = vunpack.c.h.b16 %v1301
  %v1371 = vunpack.c.l.b16 %v1302
  %v1372 = vunpack.c.h.b16 %v1302
  %v1373 = vunpack.c.l.b16 %v1303
  %v1374 = vunpack.c.h.b16 %v1303
  %v1375 = vunpack.c.l.b16 %v1304
  %v1376 = vunpack.c.h.b16 %v1304
  %v1377 = vunpack.c.l.b16 %v1305
  %v1378 = vunpack.c.h.b16 %v1305
  %v1379 = vunpack.c.l.b16 %v1306
  %v1380 = vunpack.c.h.b16 %v1306
  %v1381 = vunpack.c.l.b16 %v1307
  %v1382 = vunpack.c.h.b16 %v1307
  %v1383 = vunpack.c.l.b16 %v1308
  %v1384 = vunpack.c.h.b16 %v1308
  %v1385 = vunpack.c.l.b16 %v1309
  %v1386 = vunpack.c.h.b16 %v1309
  %v1387 = vunpack.c.l.b16 %v1310
  %v1388 = vunpack.c.h.b16 %v1310
  %v1389 = vunpack.c.l.b16 %v1311
  %v1390 = vunpack.c.h.b16 %v1311
  %v1391 = vunpack.c.l.b16 %v1312
  %v1392 = vunpack.c.h.b16 %v1312
  %v1393 = vunpack.c.l.b16 %v1313
  %v1394 = vunpack.c.h.b16 %v1313
  %v1395 = vunpack.c.l.b16 %v1314
  %v1396 = vunpack.c.h.b16 %v1314
  %v1397 = vunpack.c.l.b16 %v1315
  %v1398 = vunpack.c.h.b16 %v1315
  %v1399 = vunpack.c.l.b16 %v1316
  %v1400 = vunpack.c.h.b16 %v1316
  %v1401 = vunpack.c.l.b16 %v1317
  %v1402 = vunpack.c.h.b16 %v1317
  %v1403 = vunpack.c.l.b16 %v1318
  %v1404 = vunpack.c.h.b16 %v1318
  %v1405 = vunpack.c.l.b16 %v1319
  %v1406 = vunpack.c.h.b16 %v1319
  %v1407 = vunpack.c.l.b16 %v1320
  %v1408 = vunpack.c.h.b16 %v1320
  %v1409 = vunpack.c.l.b16 %v1321
  %v1410 = vunpack.c.h.b16 %v1321
  %v1411 = vunpack.c.l.b16 %v1322
  %v1412 = vunpack.c.h.b16 %v1322
  %v1413 = vunpack.c.l.b16 %v1323
  %v1414 = vunpack.c.h.b16 %v1323
  %v1415 = vunpack.c.l.b16 %v1324
  %v1416 = vunpack.c.h.b16 %v1324
  %v1417 = vunpack.c.l.b16 %v1325
  %v1418 = vunpack.c.h.b16 %v1325
  %v1419 = vunpack.c.l.b16 %v1326
  %v1420 = vunpack.c.h.b16 %v1326
  %v1421 = vunpack.c.l.b16 %v1327
  %v1422 = vunpack.c.h.b16 %v1327
  %v1423 = vunpack.c.l.b16 %v1328
  %v1424 = vunpack.c.h.b16 %v1328
  %v1425 = vpack.c.b16 %v1361, %v1361
  %v1426 = vpack.c.b16 %v1362, %v1362
  %v1427 = vpack.c.b16 %v1363, %v1363
  %v1428 = vpack.c.b16 %v1364, %v1364
  %v1429 = vpack.c.b16 %v1365, %v1365
  %v1430 = vpack.c.b16 %v1366, %v1366
  %v1431 = vpack.c.b16 %v1367, %v1367
  %v1432 = vpack.c.b16 %v1368, %v1368
  %v1433 = vpack.c.b16 %v1369, %v1369
  %v1434 = vpack.c.b16 %v1370, %v1370
  %v1435 = vpack.c.b16 %v1371, %v1371
  %v1436 = vpack.c.b16 %v1372, %v1372
  %v1437 = vpack.c.b16 %v1373, %v1373
  %v1438 = vpack.c.b16 %v1374, %v1374
  %v1439 = vpack.c.b16 %v1375, %v1375
  %v1440 = vpack.c.b16 %v1376, %v1376
  %v1441 = vpack.c.b16 %v1377, %v1377
  %v1442 = vpack.c.b16 %v1378, %v1378
  %v1443 = vpack.c.b16 %v1379, %v1379
  %v1444 = vpack.c.b16 %v1380, %v1380
  %v1445 = vpack.c.b16 %v1381, %v1381
  %v1446 = vpack.c.b16 %v1382, %v1382
  %v1447 = vpack.c.b16 %v1383, %v1383
  %v1448 = vpack.c.b16 %v1384, %v1384
  %v1449 = vpack.c.b16 %v1385, %v1385
  %v1450 = vpack.c.b16 %v1386, %v1386
  %v1451 = vpack.c.b16 %v1387, %v1387
  %v1452 = vpack.c.b16 %v1388, %v1388
  %v1453 = vpack.c.b16 %v1389, %v1389
  %v1454 = vpack.c.b16 %v1390, %v1390
  %v1455 = vpack.c.b16 %v1391, %v1391
  %v1456 = vpack.c.b16 %v1392, %v1392
  %v1457 = vpack.c.b16 %v1393, %v1393
  %v1458 = vpack.c.b16 %v1394, %v1394
  %v1459 = vpack.c.b16 %v1395, %v1395
  %v1460 = vpack.c.b16 %v1396, %v1396
  %v1461 = vpack.c.b16 %v1397, %v1397
  %v1462 = vpack.c.b16 %v1398, %v1398
  %v1463 = vpack.c.b16 %v1399, %v1399
  %v1464 = vpack.c.b16 %v1400, %v1400
  %v1465 = vpack.c.b16 %v1401, %v1401
  %v1466 = vpack.c.b16 %v1402, %v1402
  %v1467 = vpack.c.b16 %v1403, %v1403
  %v1468 = vpack.c.b16 %v1404, %v1404
  %v1469 = vpack.c.b16 %v1405, %v1405
  %v1470 = vpack.c.b16 %v1406, %v1406
  %v1471 = vpack.c.b16 %v1407, %v1407
  %v1472 = vpack.c.b16 %v1408, %v1408
  %v1473 = vpack.c.b16 %v1409, %v1409
  %v1474 = vpack.c.b16 %v1410, %v1410
  %v1475 = vpack.c.b16 %v1411, %v1411
  %v1476 = vpack.c.b16 %v1412, %v1412
  %v1477 = vpack.c.b16 %v1413, %v1413
  %v1478 = vpack.c.b16 %v1414, %v1414
  %v1479 = vpack.c.b16 %v1415, %v1415
  %v1480 = vpack.c.b16 %v1416, %v1416
  %v1481 = vpack.c.b16 %v1417, %v1417
  %v1482 = vpack.c.b16 %v1418, %v1418
  %v1483 = vpack.c.b16 %v1419, %v1419
  %v1484 = vpack.c.b16 %v1420, %v1420
  %v1485 = vpack.c.b16 %v1421, %v1421
  %v1486 = vpack.c.b16 %v1422, %v1422
  %v1487 = vpack.c.b16 %v1423, %v1423
  %v1488 = vpack.c.b16 %v1424, %v1424
  %vm1553 = vcmask 125952
  %1554 = vst.msk [vmem:[%s4] sm:$0xf] %vm1553, %v1425
  %1555 = vst.msk [vmem:[%s4 + $0x4] sm:$0xf] %vm1553, %v1426
  %1556 = vst.msk [vmem:[%s4 + $0x8] sm:$0xf] %vm1553, %v1427
  %1557 = vst.msk [vmem:[%s4 + $0xc] sm:$0xf] %vm1553, %v1428
  %1558 = vst.msk [vmem:[%s4 + $0x10] sm:$0xf] %vm1553, %v1429
  %1559 = vst.msk [vmem:[%s4 + $0x14] sm:$0xf] %vm1553, %v1430
  %1560 = vst.msk [vmem:[%s4 + $0x18] sm:$0xf] %vm1553, %v1431
  %1561 = vst.msk [vmem:[%s4 + $0x1c] sm:$0xf] %vm1553, %v1432
  %1562 = vst.msk [vmem:[%s4 + $0x20] sm:$0xf] %vm1553, %v1433
  %1563 = vst.msk [vmem:[%s4 + $0x24] sm:$0xf] %vm1553, %v1434
  %1564 = vst.msk [vmem:[%s4 + $0x28] sm:$0xf] %vm1553, %v1435
  %1565 = vst.msk [vmem:[%s4 + $0x2c] sm:$0xf] %vm1553, %v1436
  %1566 = vst.msk [vmem:[%s4 + $0x30] sm:$0xf] %vm1553, %v1437
  %1567 = vst.msk [vmem:[%s4 + $0x34] sm:$0xf] %vm1553, %v1438
  %1568 = vst.msk [vmem:[%s4 + $0x38] sm:$0xf] %vm1553, %v1439
  %1569 = vst.msk [vmem:[%s4 + $0x3c] sm:$0xf] %vm1553, %v1440
  %1570 = vst.msk [vmem:[%s4 + $0x40] sm:$0xf] %vm1553, %v1441
  %1571 = vst.msk [vmem:[%s4 + $0x44] sm:$0xf] %vm1553, %v1442
  %1572 = vst.msk [vmem:[%s4 + $0x48] sm:$0xf] %vm1553, %v1443
  %1573 = vst.msk [vmem:[%s4 + $0x4c] sm:$0xf] %vm1553, %v1444
  %1574 = vst.msk [vmem:[%s4 + $0x50] sm:$0xf] %vm1553, %v1445
  %1575 = vst.msk [vmem:[%s4 + $0x54] sm:$0xf] %vm1553, %v1446
  %1576 = vst.msk [vmem:[%s4 + $0x58] sm:$0xf] %vm1553, %v1447
  %1577 = vst.msk [vmem:[%s4 + $0x5c] sm:$0xf] %vm1553, %v1448
  %1578 = vst.msk [vmem:[%s4 + $0x60] sm:$0xf] %vm1553, %v1449
  %1579 = vst.msk [vmem:[%s4 + $0x64] sm:$0xf] %vm1553, %v1450
  %1580 = vst.msk [vmem:[%s4 + $0x68] sm:$0xf] %vm1553, %v1451
  %1581 = vst.msk [vmem:[%s4 + $0x6c] sm:$0xf] %vm1553, %v1452
  %1582 = vst.msk [vmem:[%s4 + $0x70] sm:$0xf] %vm1553, %v1453
  %1583 = vst.msk [vmem:[%s4 + $0x74] sm:$0xf] %vm1553, %v1454
  %1584 = vst.msk [vmem:[%s4 + $0x78] sm:$0xf] %vm1553, %v1455
  %1585 = vst.msk [vmem:[%s4 + $0x7c] sm:$0xf] %vm1553, %v1456
  %1586 = vst.msk [vmem:[%s4 + $0x80] sm:$0xf] %vm1553, %v1457
  %1587 = vst.msk [vmem:[%s4 + $0x84] sm:$0xf] %vm1553, %v1458
  %1588 = vst.msk [vmem:[%s4 + $0x88] sm:$0xf] %vm1553, %v1459
  %1589 = vst.msk [vmem:[%s4 + $0x8c] sm:$0xf] %vm1553, %v1460
  %1590 = vst.msk [vmem:[%s4 + $0x90] sm:$0xf] %vm1553, %v1461
  %1591 = vst.msk [vmem:[%s4 + $0x94] sm:$0xf] %vm1553, %v1462
  %1592 = vst.msk [vmem:[%s4 + $0x98] sm:$0xf] %vm1553, %v1463
  %1593 = vst.msk [vmem:[%s4 + $0x9c] sm:$0xf] %vm1553, %v1464
  %1594 = vst.msk [vmem:[%s4 + $0xa0] sm:$0xf] %vm1553, %v1465
  %1595 = vst.msk [vmem:[%s4 + $0xa4] sm:$0xf] %vm1553, %v1466
  %1596 = vst.msk [vmem:[%s4 + $0xa8] sm:$0xf] %vm1553, %v1467
  %1597 = vst.msk [vmem:[%s4 + $0xac] sm:$0xf] %vm1553, %v1468
  %1598 = vst.msk [vmem:[%s4 + $0xb0] sm:$0xf] %vm1553, %v1469
  %1599 = vst.msk [vmem:[%s4 + $0xb4] sm:$0xf] %vm1553, %v1470
  %1600 = vst.msk [vmem:[%s4 + $0xb8] sm:$0xf] %vm1553, %v1471
  %1601 = vst.msk [vmem:[%s4 + $0xbc] sm:$0xf] %vm1553, %v1472
  %1602 = vst.msk [vmem:[%s4 + $0xc0] sm:$0xf] %vm1553, %v1473
  %1603 = vst.msk [vmem:[%s4 + $0xc4] sm:$0xf] %vm1553, %v1474
  %1604 = vst.msk [vmem:[%s4 + $0xc8] sm:$0xf] %vm1553, %v1475
  %1605 = vst.msk [vmem:[%s4 + $0xcc] sm:$0xf] %vm1553, %v1476
  %1606 = vst.msk [vmem:[%s4 + $0xd0] sm:$0xf] %vm1553, %v1477
  %1607 = vst.msk [vmem:[%s4 + $0xd4] sm:$0xf] %vm1553, %v1478
  %1608 = vst.msk [vmem:[%s4 + $0xd8] sm:$0xf] %vm1553, %v1479
  %1609 = vst.msk [vmem:[%s4 + $0xdc] sm:$0xf] %vm1553, %v1480
  %1610 = vst.msk [vmem:[%s4 + $0xe0] sm:$0xf] %vm1553, %v1481
  %1611 = vst.msk [vmem:[%s4 + $0xe4] sm:$0xf] %vm1553, %v1482
  %1612 = vst.msk [vmem:[%s4 + $0xe8] sm:$0xf] %vm1553, %v1483
  %1613 = vst.msk [vmem:[%s4 + $0xec] sm:$0xf] %vm1553, %v1484
  %1614 = vst.msk [vmem:[%s4 + $0xf0] sm:$0xf] %vm1553, %v1485
  %1615 = vst.msk [vmem:[%s4 + $0xf4] sm:$0xf] %vm1553, %v1486
  %1616 = vst.msk [vmem:[%s4 + $0xf8] sm:$0xf] %vm1553, %v1487
  %1617 = vst.msk [vmem:[%s4 + $0xfc] sm:$0xf] %vm1553, %v1488
  // Predicated region
  $region18: #{bisenetv2_forward.6} parent=0 // pred_check
    _
  $region19: #{bisenetv2_forward.6} parent=0 // pred_check_branch
    %1619 = sbr.rel (0) target = $region21
  $region20: #{bisenetv2_forward.6} parent=0 // pred_region
    _
  $region21: #{bisenetv2_forward.6} parent=0 // pred_fallthru
    _
  // Predicated region
  $region22: #{bisenetv2_forward.6} parent=0 // pred_check
    _
  $region23: #{bisenetv2_forward.6} parent=0 // pred_check_branch
    %1621 = sbr.rel (0) target = $region25
  $region24: #{bisenetv2_forward.6} parent=0 // pred_region
    _
  $region25: #{bisenetv2_forward.6} parent=0 // pred_fallthru
    _

// kernel: bisenetv2_forward.7
$region0: #{bisenetv2_forward.7}
  #allocation0 [shape = 'u32[]', space=smem, size = 0x4, offset = 0x4, fixed_abs, tag = 'smem constant byte address 0x4 - core index']
  #allocation1 [shape = 'u32[144,128]{1,0:T(1,128)}', space=vmem, size = 0x12000, scoped, tag = 'internal scratch']
  %s0 = inlined_call_operand.vmem [shape: bf16[128,144], index: 0, kind: input, shape index: {}]
  %s1 = inlined_call_operand.vmem [shape: bf16[144,32], index: 1, kind: input, shape index: {}]
  %s2 = inlined_call_operand.vmem [shape: f32[1,32], index: 2, kind: input, shape index: {}]
  %s3 = inlined_call_operand.vmem [shape: f32[1,32], index: 3, kind: input, shape index: {}]
  %s4 = inlined_call_operand.vmem [shape: bf16[128,32], index: 4, kind: output, shape index: {}]
  %s5 = sld [smem:[#allocation0]]
  $region26: #{bisenetv2_forward.7} parent=0
    _
  %s7 = ssub.s32 1, %s5
  %s8 = scalar_select 0, %s7, %s5
  // Predicated region
  $region2: #{bisenetv2_forward.7} parent=0 // pred_check
    _
  $region3: #{bisenetv2_forward.7} parent=0 // pred_check_branch
    %10 = sbr.rel (0) target = $region5
  $region4: #{bisenetv2_forward.7} parent=0 // pred_region
    _
  $region5: #{bisenetv2_forward.7} parent=0 // pred_fallthru
    _
  // Predicated region
  $region6: #{bisenetv2_forward.7} parent=0 // pred_check
    _
  $region7: #{bisenetv2_forward.7} parent=0 // pred_check_branch
    %12 = sbr.rel (0) target = $region9
  $region8: #{bisenetv2_forward.7} parent=0 // pred_region
    _
  $region9: #{bisenetv2_forward.7} parent=0 // pred_fallthru
    _
  // Predicated region
  $region10: #{bisenetv2_forward.7} parent=0 // pred_check
    _
  $region11: #{bisenetv2_forward.7} parent=0 // pred_check_branch
    %14 = sbr.rel (0) target = $region13
  $region12: #{bisenetv2_forward.7} parent=0 // pred_region
    _
  $region13: #{bisenetv2_forward.7} parent=0 // pred_fallthru
    _
  // Predicated region
  $region14: #{bisenetv2_forward.7} parent=0 // pred_check
    _
  $region15: #{bisenetv2_forward.7} parent=0 // pred_check_branch
    %16 = sbr.rel (0) target = $region17
  $region16: #{bisenetv2_forward.7} parent=0 // pred_region
    _
  $region17: #{bisenetv2_forward.7} parent=0 // pred_fallthru
    _
  %v18 = vld [vmem:[%s0] sm:$0xff]
  %v19 = vld [vmem:[%s0 + $0x8] sm:$0xff]
  %v20 = vld [vmem:[%s0 + $0x10] sm:$0xff]
  %v21 = vld [vmem:[%s0 + $0x18] sm:$0xff]
  %v22 = vld [vmem:[%s0 + $0x20] sm:$0xff]
  %v23 = vld [vmem:[%s0 + $0x28] sm:$0xff]
  %v24 = vld [vmem:[%s0 + $0x30] sm:$0xff]
  %v25 = vld [vmem:[%s0 + $0x38] sm:$0xff]
  %v26 = vld [vmem:[%s0 + $0x40] sm:$0xff]
  %v27 = vld [vmem:[%s0 + $0x48] sm:$0xff]
  %v28 = vld [vmem:[%s0 + $0x50] sm:$0xff]
  %v29 = vld [vmem:[%s0 + $0x58] sm:$0xff]
  %v30 = vld [vmem:[%s0 + $0x60] sm:$0xff]
  %v31 = vld [vmem:[%s0 + $0x68] sm:$0xff]
  %v32 = vld [vmem:[%s0 + $0x70] sm:$0xff]
  %v33 = vld [vmem:[%s0 + $0x78] sm:$0xff]
  %v34 = vld [vmem:[%s1] sm:$0xf]
  %v35 = vld [vmem:[%s1 + $0x4] sm:$0xf]
  %v36 = vld [vmem:[%s1 + $0x8] sm:$0xf]
  %v37 = vld [vmem:[%s1 + $0xc] sm:$0xf]
  %v38 = vld [vmem:[%s1 + $0x10] sm:$0xf]
  %v39 = vld [vmem:[%s1 + $0x14] sm:$0xf]
  %v40 = vld [vmem:[%s1 + $0x18] sm:$0xf]
  %v41 = vld [vmem:[%s1 + $0x1c] sm:$0xf]
  %v42 = vld [vmem:[%s1 + $0x20] sm:$0xf]
  %v43 = vld [vmem:[%s1 + $0x24] sm:$0xf]
  %v44 = vld [vmem:[%s1 + $0x28] sm:$0xf]
  %v45 = vld [vmem:[%s1 + $0x2c] sm:$0xf]
  %v46 = vld [vmem:[%s1 + $0x30] sm:$0xf]
  %v47 = vld [vmem:[%s1 + $0x34] sm:$0xf]
  %v48 = vld [vmem:[%s1 + $0x38] sm:$0xf]
  %v49 = vld [vmem:[%s1 + $0x3c] sm:$0xf]
  %v50 = vld [vmem:[%s1 + $0x40] sm:$0xf]
  %v51 = vld [vmem:[%s1 + $0x44] sm:$0xf]
  %v68 = vunpack.c.l.b16 %v18
  %v69 = vunpack.c.h.b16 %v18
  %v70 = vunpack.c.l.b16 %v19
  %v71 = vunpack.c.h.b16 %v19
  %v72 = vunpack.c.l.b16 %v20
  %v73 = vunpack.c.h.b16 %v20
  %v74 = vunpack.c.l.b16 %v21
  %v75 = vunpack.c.h.b16 %v21
  %v76 = vunpack.c.l.b16 %v22
  %v77 = vunpack.c.h.b16 %v22
  %v78 = vunpack.c.l.b16 %v23
  %v79 = vunpack.c.h.b16 %v23
  %v80 = vunpack.c.l.b16 %v24
  %v81 = vunpack.c.h.b16 %v24
  %v82 = vunpack.c.l.b16 %v25
  %v83 = vunpack.c.h.b16 %v25
  %v84 = vunpack.c.l.b16 %v26
  %v85 = vunpack.c.h.b16 %v26
  %v86 = vunpack.c.l.b16 %v27
  %v87 = vunpack.c.h.b16 %v27
  %v88 = vunpack.c.l.b16 %v28
  %v89 = vunpack.c.h.b16 %v28
  %v90 = vunpack.c.l.b16 %v29
  %v91 = vunpack.c.h.b16 %v29
  %v92 = vunpack.c.l.b16 %v30
  %v93 = vunpack.c.h.b16 %v30
  %v94 = vunpack.c.l.b16 %v31
  %v95 = vunpack.c.h.b16 %v31
  %v96 = vunpack.c.l.b16 %v32
  %v97 = vunpack.c.h.b16 %v32
  %v98 = vunpack.c.l.b16 %v33
  %v99 = vunpack.c.h.b16 %v33
  %v100 = vpack.c.b16 %v70, %v68
  %v101 = vpack.c.b16 %v71, %v69
  %v102 = vpack.c.b16 %v74, %v72
  %v103 = vpack.c.b16 %v75, %v73
  %v104 = vpack.c.b16 %v78, %v76
  %v105 = vpack.c.b16 %v79, %v77
  %v106 = vpack.c.b16 %v82, %v80
  %v107 = vpack.c.b16 %v83, %v81
  %v108 = vpack.c.b16 %v86, %v84
  %v109 = vpack.c.b16 %v87, %v85
  %v110 = vpack.c.b16 %v90, %v88
  %v111 = vpack.c.b16 %v91, %v89
  %v112 = vpack.c.b16 %v94, %v92
  %v113 = vpack.c.b16 %v95, %v93
  %v114 = vpack.c.b16 %v98, %v96
  %v115 = vpack.c.b16 %v99, %v97
  %v142 = vunpack.c.l.b16 %v34
  %v143 = vunpack.c.l.b16 %v35
  %v144 = vunpack.c.l.b16 %v36
  %v145 = vunpack.c.l.b16 %v37
  %v146 = vunpack.c.l.b16 %v38
  %v147 = vunpack.c.l.b16 %v39
  %v148 = vunpack.c.l.b16 %v40
  %v149 = vunpack.c.l.b16 %v41
  %v150 = vunpack.c.l.b16 %v42
  %v151 = vunpack.c.l.b16 %v43
  %v152 = vunpack.c.l.b16 %v44
  %v153 = vunpack.c.l.b16 %v45
  %v154 = vunpack.c.l.b16 %v46
  %v155 = vunpack.c.l.b16 %v47
  %v156 = vunpack.c.l.b16 %v48
  %v157 = vunpack.c.l.b16 %v49
  %v158 = vunpack.c.l.b16 %v50
  %v159 = vunpack.c.l.b16 %v51
  %v160 = vpack.c.b16 %v143, %v142
  %v161 = vpack.c.b16 %v145, %v144
  %v162 = vpack.c.b16 %v147, %v146
  %v163 = vpack.c.b16 %v149, %v148
  %v164 = vpack.c.b16 %v151, %v150
  %v165 = vpack.c.b16 %v153, %v152
  %v166 = vpack.c.b16 %v155, %v154
  %v167 = vpack.c.b16 %v157, %v156
  %v168 = vpack.c.b16 %v159, %v158
  %vm178 = vcmask 130048
  %v180 = vsel %vm178, %v101, 0
  %v183 = vsel %vm178, %v103, 0
  %v186 = vsel %vm178, %v105, 0
  %v189 = vsel %vm178, %v107, 0
  %v192 = vsel %vm178, %v109, 0
  %v195 = vsel %vm178, %v111, 0
  %v198 = vsel %vm178, %v113, 0
  %v201 = vsel %vm178, %v115, 0
  %203 = vmatprep.subr.bf16.mxu0 0
  %204 = vmatpush1.bf16.msra.mxu0 %v160
  %205 = vmatprep.subr.bf16.mxu0 0
  %206 = vmatpush1.bf16.msra.mxu0 %v161
  %207 = vmatprep.subr.bf16.mxu0 0
  %208 = vmatpush1.bf16.msra.mxu0 %v162
  %209 = vmatprep.subr.bf16.mxu0 0
  %210 = vmatpush1.bf16.msra.mxu0 %v163
  %211 = vmatprep.subr.bf16.mxu0 0
  %212 = vmatpush1.bf16.msra.mxu0 %v164
  %213 = vmatprep.subr.bf16.mxu0 0
  %214 = vmatpush1.bf16.msra.mxu0 %v165
  %215 = vmatprep.subr.bf16.mxu0 0
  %216 = vmatpush1.bf16.msra.mxu0 %v166
  %217 = vmatprep.subr.bf16.mxu0 0
  %218 = vmatpush1.bf16.msra.mxu0 %v167
  %219 = vmatprep.subr.bf16.mxu0 0
  %220 = vmatpush1.bf16.msra.mxu0 %v168
  %221 = vmatprep.subr.bf16.mxu0 0
  %222 = vmatpush1.bf16.msra.mxu0 0
  %223 = vmatprep.subr.bf16.mxu0 0
  %224 = vmatpush1.bf16.msra.mxu0 0
  %225 = vmatprep.subr.bf16.mxu0 0
  %226 = vmatpush1.bf16.msra.mxu0 0
  %227 = vmatprep.subr.bf16.mxu0 0
  %228 = vmatpush1.bf16.msra.mxu0 0
  %229 = vmatprep.subr.bf16.mxu0 0
  %230 = vmatpush1.bf16.msra.mxu0 0
  %231 = vmatprep.subr.bf16.mxu0 0
  %232 = vmatpush1.bf16.msra.mxu0 0
  %233 = vmatprep.subr.bf16.mxu0 0
  %234 = vmatpush1.bf16.msra.mxu0 0
  %235 = vmatprep.mubr.bf16.mxu0 %v180
  %236 = vmatmul.mubr.bf16.gmra.mrb[0].mxu0 %v100
  %v237 = vpop.f32.mrb[0].mxu0
  %v238 = vadd.f32 0.0, %v237
  %v239 = vpop.f32.mrb[0].mxu0
  %v240 = vpop.f32.mrb[0].mxu0
  %v241 = vadd.f32 0.0, %v240
  %v242 = vpop.f32.mrb[0].mxu0
  %243 = vmatprep.mubr.bf16.mxu0 %v183
  %244 = vmatmul.mubr.bf16.gmra.mrb[0].mxu0 %v102
  %v245 = vpop.f32.mrb[0].mxu0
  %v246 = vadd.f32 0.0, %v245
  %v247 = vpop.f32.mrb[0].mxu0
  %v248 = vpop.f32.mrb[0].mxu0
  %v249 = vadd.f32 0.0, %v248
  %v250 = vpop.f32.mrb[0].mxu0
  %251 = vmatprep.mubr.bf16.mxu0 %v186
  %252 = vmatmul.mubr.bf16.gmra.mrb[0].mxu0 %v104
  %v253 = vpop.f32.mrb[0].mxu0
  %v254 = vadd.f32 0.0, %v253
  %v255 = vpop.f32.mrb[0].mxu0
  %v256 = vpop.f32.mrb[0].mxu0
  %v257 = vadd.f32 0.0, %v256
  %v258 = vpop.f32.mrb[0].mxu0
  %259 = vmatprep.mubr.bf16.mxu0 %v189
  %260 = vmatmul.mubr.bf16.gmra.mrb[0].mxu0 %v106
  %v261 = vpop.f32.mrb[0].mxu0
  %v262 = vadd.f32 0.0, %v261
  %v263 = vpop.f32.mrb[0].mxu0
  %v264 = vpop.f32.mrb[0].mxu0
  %v265 = vadd.f32 0.0, %v264
  %v266 = vpop.f32.mrb[0].mxu0
  %267 = vmatprep.mubr.bf16.mxu0 %v192
  %268 = vmatmul.mubr.bf16.gmra.mrb[0].mxu0 %v108
  %v269 = vpop.f32.mrb[0].mxu0
  %v270 = vadd.f32 0.0, %v269
  %v271 = vpop.f32.mrb[0].mxu0
  %v272 = vpop.f32.mrb[0].mxu0
  %v273 = vadd.f32 0.0, %v272
  %v274 = vpop.f32.mrb[0].mxu0
  %275 = vmatprep.mubr.bf16.mxu0 %v195
  %276 = vmatmul.mubr.bf16.gmra.mrb[0].mxu0 %v110
  %v277 = vpop.f32.mrb[0].mxu0
  %v278 = vadd.f32 0.0, %v277
  %v279 = vpop.f32.mrb[0].mxu0
  %v280 = vpop.f32.mrb[0].mxu0
  %v281 = vadd.f32 0.0, %v280
  %v282 = vpop.f32.mrb[0].mxu0
  %283 = vmatprep.mubr.bf16.mxu0 %v198
  %284 = vmatmul.mubr.bf16.gmra.mrb[0].mxu0 %v112
  %v285 = vpop.f32.mrb[0].mxu0
  %v286 = vadd.f32 0.0, %v285
  %v287 = vpop.f32.mrb[0].mxu0
  %v288 = vpop.f32.mrb[0].mxu0
  %v289 = vadd.f32 0.0, %v288
  %v290 = vpop.f32.mrb[0].mxu0
  %291 = vmatprep.mubr.bf16.mxu0 %v201
  %292 = vmatmul.mubr.bf16.gmra.mrb[0].mxu0 %v114
  %v293 = vpop.f32.mrb[0].mxu0
  %v294 = vadd.f32 0.0, %v293
  %v295 = vpop.f32.mrb[0].mxu0
  %v296 = vpop.f32.mrb[0].mxu0
  %v297 = vadd.f32 0.0, %v296
  %v298 = vpop.f32.mrb[0].mxu0
  %299 = vdwg.mxu0
  %vm300 = vcmask 261120
  %v301 = vsel %vm300, %v238, 0.0
  %v302 = vsel %vm300, %v241, 0.0
  %v303 = vadd.f32 %v301, %v302
  %v304 = vsel %vm300, %v246, 0.0
  %v305 = vadd.f32 %v303, %v304
  %v306 = vsel %vm300, %v249, 0.0
  %v307 = vadd.f32 %v305, %v306
  %v308 = vsel %vm300, %v254, 0.0
  %v309 = vadd.f32 %v307, %v308
  %v310 = vsel %vm300, %v257, 0.0
  %v311 = vadd.f32 %v309, %v310
  %v312 = vsel %vm300, %v262, 0.0
  %v313 = vadd.f32 %v311, %v312
  %v314 = vsel %vm300, %v265, 0.0
  %v315 = vadd.f32 %v313, %v314
  %v316 = vsel %vm300, %v270, 0.0
  %v317 = vadd.f32 %v315, %v316
  %v318 = vsel %vm300, %v273, 0.0
  %v319 = vadd.f32 %v317, %v318
  %v320 = vsel %vm300, %v278, 0.0
  %v321 = vadd.f32 %v319, %v320
  %v322 = vsel %vm300, %v281, 0.0
  %v323 = vadd.f32 %v321, %v322
  %v324 = vsel %vm300, %v286, 0.0
  %v325 = vadd.f32 %v323, %v324
  %v326 = vsel %vm300, %v289, 0.0
  %v327 = vadd.f32 %v325, %v326
  %v328 = vsel %vm300, %v294, 0.0
  %v329 = vadd.f32 %v327, %v328
  %v330 = vsel %vm300, %v297, 0.0
  %v331 = vadd.f32 %v329, %v330
  %v332 = vrot.slane %v331, 4
  %v333 = vadd.f32 %v331, %v332
  %v334 = vrot.slane %v333, 2
  %v335 = vadd.f32 %v333, %v334
  %v336 = vrot.slane %v335, 1
  %v337 = vadd.f32 %v335, %v336
  %v338 = vrcp.pop 128.0
  %v339 = vmul.f32 %v337, %v338
  %v340 = vsub.f32 %v238, %v339
  %v341 = vsub.f32 %v241, %v339
  %v342 = vsub.f32 %v246, %v339
  %v343 = vsub.f32 %v249, %v339
  %v344 = vsub.f32 %v254, %v339
  %v345 = vsub.f32 %v257, %v339
  %v346 = vsub.f32 %v262, %v339
  %v347 = vsub.f32 %v265, %v339
  %v348 = vsub.f32 %v270, %v339
  %v349 = vsub.f32 %v273, %v339
  %v350 = vsub.f32 %v278, %v339
  %v351 = vsub.f32 %v281, %v339
  %v352 = vsub.f32 %v286, %v339
  %v353 = vsub.f32 %v289, %v339
  %v354 = vsub.f32 %v294, %v339
  %v355 = vsub.f32 %v297, %v339
  %v356 = vmul.f32 %v340, %v340
  %v357 = vmul.f32 %v341, %v341
  %v358 = vmul.f32 %v342, %v342
  %v359 = vmul.f32 %v343, %v343
  %v360 = vmul.f32 %v344, %v344
  %v361 = vmul.f32 %v345, %v345
  %v362 = vmul.f32 %v346, %v346
  %v363 = vmul.f32 %v347, %v347
  %v364 = vmul.f32 %v348, %v348
  %v365 = vmul.f32 %v349, %v349
  %v366 = vmul.f32 %v350, %v350
  %v367 = vmul.f32 %v351, %v351
  %v368 = vmul.f32 %v352, %v352
  %v369 = vmul.f32 %v353, %v353
  %v370 = vmul.f32 %v354, %v354
  %v371 = vmul.f32 %v355, %v355
  %v372 = vsel %vm300, %v356, 0.0
  %v373 = vsel %vm300, %v357, 0.0
  %v374 = vadd.f32 %v372, %v373
  %v375 = vsel %vm300, %v358, 0.0
  %v376 = vadd.f32 %v374, %v375
  %v377 = vsel %vm300, %v359, 0.0
  %v378 = vadd.f32 %v376, %v377
  %v379 = vsel %vm300, %v360, 0.0
  %v380 = vadd.f32 %v378, %v379
  %v381 = vsel %vm300, %v361, 0.0
  %v382 = vadd.f32 %v380, %v381
  %v383 = vsel %vm300, %v362, 0.0
  %v384 = vadd.f32 %v382, %v383
  %v385 = vsel %vm300, %v363, 0.0
  %v386 = vadd.f32 %v384, %v385
  %v387 = vsel %vm300, %v364, 0.0
  %v388 = vadd.f32 %v386, %v387
  %v389 = vsel %vm300, %v365, 0.0
  %v390 = vadd.f32 %v388, %v389
  %v391 = vsel %vm300, %v366, 0.0
  %v392 = vadd.f32 %v390, %v391
  %v393 = vsel %vm300, %v367, 0.0
  %v394 = vadd.f32 %v392, %v393
  %v395 = vsel %vm300, %v368, 0.0
  %v396 = vadd.f32 %v394, %v395
  %v397 = vsel %vm300, %v369, 0.0
  %v398 = vadd.f32 %v396, %v397
  %v399 = vsel %vm300, %v370, 0.0
  %v400 = vadd.f32 %v398, %v399
  %v401 = vsel %vm300, %v371, 0.0
  %v402 = vadd.f32 %v400, %v401
  %v403 = vrot.slane %v402, 4
  %v404 = vadd.f32 %v402, %v403
  %v405 = vrot.slane %v404, 2
  %v406 = vadd.f32 %v404, %v405
  %v407 = vrot.slane %v406, 1
  %v408 = vadd.f32 %v406, %v407
  %v409 = vmul.f32 %v408, %v338
  %v410 = vadd.f32 %v409, 1e-05
  %v411 = vrsqrt.pop %v410
  %v412 = vmul.f32 %v340, %v411
  %v413 = vmul.f32 %v341, %v411
  %v414 = vmul.f32 %v342, %v411
  %v415 = vmul.f32 %v343, %v411
  %v416 = vmul.f32 %v344, %v411
  %v417 = vmul.f32 %v345, %v411
  %v418 = vmul.f32 %v346, %v411
  %v419 = vmul.f32 %v347, %v411
  %v420 = vmul.f32 %v348, %v411
  %v421 = vmul.f32 %v349, %v411
  %v422 = vmul.f32 %v350, %v411
  %v423 = vmul.f32 %v351, %v411
  %v424 = vmul.f32 %v352, %v411
  %v425 = vmul.f32 %v353, %v411
  %v426 = vmul.f32 %v354, %v411
  %v427 = vmul.f32 %v355, %v411
  %v428 = vld [vmem:[%s2] sm:$0x1]
  %v430 = vlaneseq
  %v431 = vshrl.u32 %v430, 7
  %v432 = vsub.s32 0, %v431
  %v433 = vrot.slane %v428, %v432
  %v435 = vmul.f32 %v412, %v433
  %v436 = vmul.f32 %v413, %v433
  %v437 = vmul.f32 %v414, %v433
  %v438 = vmul.f32 %v415, %v433
  %v439 = vmul.f32 %v416, %v433
  %v440 = vmul.f32 %v417, %v433
  %v441 = vmul.f32 %v418, %v433
  %v442 = vmul.f32 %v419, %v433
  %v443 = vmul.f32 %v420, %v433
  %v444 = vmul.f32 %v421, %v433
  %v445 = vmul.f32 %v422, %v433
  %v446 = vmul.f32 %v423, %v433
  %v447 = vmul.f32 %v424, %v433
  %v448 = vmul.f32 %v425, %v433
  %v449 = vmul.f32 %v426, %v433
  %v450 = vmul.f32 %v427, %v433
  %v451 = vld [vmem:[%s3] sm:$0x1]
  %v453 = vlaneseq
  %v454 = vshrl.u32 %v453, 7
  %v455 = vsub.s32 0, %v454
  %v456 = vrot.slane %v451, %v455
  %v458 = vadd.f32 %v435, %v456
  %v459 = vadd.f32 %v436, %v456
  %v460 = vadd.f32 %v437, %v456
  %v461 = vadd.f32 %v438, %v456
  %v462 = vadd.f32 %v439, %v456
  %v463 = vadd.f32 %v440, %v456
  %v464 = vadd.f32 %v441, %v456
  %v465 = vadd.f32 %v442, %v456
  %v466 = vadd.f32 %v443, %v456
  %v467 = vadd.f32 %v444, %v456
  %v468 = vadd.f32 %v445, %v456
  %v469 = vadd.f32 %v446, %v456
  %v470 = vadd.f32 %v447, %v456
  %v471 = vadd.f32 %v448, %v456
  %v472 = vadd.f32 %v449, %v456
  %v473 = vadd.f32 %v450, %v456
  %v474 = vmax.f32 %v458, 0.0
  %v475 = vmax.f32 %v459, 0.0
  %v476 = vmax.f32 %v460, 0.0
  %v477 = vmax.f32 %v461, 0.0
  %v478 = vmax.f32 %v462, 0.0
  %v479 = vmax.f32 %v463, 0.0
  %v480 = vmax.f32 %v464, 0.0
  %v481 = vmax.f32 %v465, 0.0
  %v482 = vmax.f32 %v466, 0.0
  %v483 = vmax.f32 %v467, 0.0
  %v484 = vmax.f32 %v468, 0.0
  %v485 = vmax.f32 %v469, 0.0
  %v486 = vmax.f32 %v470, 0.0
  %v487 = vmax.f32 %v471, 0.0
  %v488 = vmax.f32 %v472, 0.0
  %v489 = vmax.f32 %v473, 0.0
  %v490 = vpack.c.bf16 %v475, %v474
  %v491 = vpack.c.bf16 %v477, %v476
  %v492 = vpack.c.bf16 %v479, %v478
  %v493 = vpack.c.bf16 %v481, %v480
  %v494 = vpack.c.bf16 %v483, %v482
  %v495 = vpack.c.bf16 %v485, %v484
  %v496 = vpack.c.bf16 %v487, %v486
  %v497 = vpack.c.bf16 %v489, %v488
  %v506 = vunpack.c.l.b16 %v490
  %v507 = vunpack.c.h.b16 %v490
  %v508 = vunpack.c.l.b16 %v491
  %v509 = vunpack.c.h.b16 %v491
  %v510 = vunpack.c.l.b16 %v492
  %v511 = vunpack.c.h.b16 %v492
  %v512 = vunpack.c.l.b16 %v493
  %v513 = vunpack.c.h.b16 %v493
  %v514 = vunpack.c.l.b16 %v494
  %v515 = vunpack.c.h.b16 %v494
  %v516 = vunpack.c.l.b16 %v495
  %v517 = vunpack.c.h.b16 %v495
  %v518 = vunpack.c.l.b16 %v496
  %v519 = vunpack.c.h.b16 %v496
  %v520 = vunpack.c.l.b16 %v497
  %v521 = vunpack.c.h.b16 %v497
  %v522 = vpack.c.b16 %v506, %v506
  %v523 = vpack.c.b16 %v507, %v507
  %v524 = vpack.c.b16 %v508, %v508
  %v525 = vpack.c.b16 %v509, %v509
  %v526 = vpack.c.b16 %v510, %v510
  %v527 = vpack.c.b16 %v511, %v511
  %v528 = vpack.c.b16 %v512, %v512
  %v529 = vpack.c.b16 %v513, %v513
  %v530 = vpack.c.b16 %v514, %v514
  %v531 = vpack.c.b16 %v515, %v515
  %v532 = vpack.c.b16 %v516, %v516
  %v533 = vpack.c.b16 %v517, %v517
  %v534 = vpack.c.b16 %v518, %v518
  %v535 = vpack.c.b16 %v519, %v519
  %v536 = vpack.c.b16 %v520, %v520
  %v537 = vpack.c.b16 %v521, %v521
  %vm554 = vcmask 257024
  %555 = vst.msk [vmem:[%s4] sm:$0xf] %vm554, %v522
  %556 = vst.msk [vmem:[%s4 + $0x4] sm:$0xf] %vm554, %v523
  %557 = vst.msk [vmem:[%s4 + $0x8] sm:$0xf] %vm554, %v524
  %558 = vst.msk [vmem:[%s4 + $0xc] sm:$0xf] %vm554, %v525
  %559 = vst.msk [vmem:[%s4 + $0x10] sm:$0xf] %vm554, %v526
  %560 = vst.msk [vmem:[%s4 + $0x14] sm:$0xf] %vm554, %v527
  %561 = vst.msk [vmem:[%s4 + $0x18] sm:$0xf] %vm554, %v528
  %562 = vst.msk [vmem:[%s4 + $0x1c] sm:$0xf] %vm554, %v529
  %563 = vst.msk [vmem:[%s4 + $0x20] sm:$0xf] %vm554, %v530
  %564 = vst.msk [vmem:[%s4 + $0x24] sm:$0xf] %vm554, %v531
  %565 = vst.msk [vmem:[%s4 + $0x28] sm:$0xf] %vm554, %v532
  %566 = vst.msk [vmem:[%s4 + $0x2c] sm:$0xf] %vm554, %v533
  %567 = vst.msk [vmem:[%s4 + $0x30] sm:$0xf] %vm554, %v534
  %568 = vst.msk [vmem:[%s4 + $0x34] sm:$0xf] %vm554, %v535
  %569 = vst.msk [vmem:[%s4 + $0x38] sm:$0xf] %vm554, %v536
  %570 = vst.msk [vmem:[%s4 + $0x3c] sm:$0xf] %vm554, %v537
  // Predicated region
  $region18: #{bisenetv2_forward.7} parent=0 // pred_check
    _
  $region19: #{bisenetv2_forward.7} parent=0 // pred_check_branch
    %572 = sbr.rel (0) target = $region21
  $region20: #{bisenetv2_forward.7} parent=0 // pred_region
    _
  $region21: #{bisenetv2_forward.7} parent=0 // pred_fallthru
    _
  // Predicated region
  $region22: #{bisenetv2_forward.7} parent=0 // pred_check
    _
  $region23: #{bisenetv2_forward.7} parent=0 // pred_check_branch
    %574 = sbr.rel (0) target = $region25
  $region24: #{bisenetv2_forward.7} parent=0 // pred_region
    _
  $region25: #{bisenetv2_forward.7} parent=0 // pred_fallthru
    _

// kernel: bisenetv2_forward.8
$region0: #{bisenetv2_forward.8}
  #allocation0 [shape = 'u32[]', space=smem, size = 0x4, offset = 0x4, fixed_abs, tag = 'smem constant byte address 0x4 - core index']
  #allocation1 [shape = 'u32[144,128]{1,0:T(1,128)}', space=vmem, size = 0x12000, scoped, tag = 'internal scratch']
  %s0 = inlined_call_operand.vmem [shape: bf16[32,288], index: 0, kind: input, shape index: {}]
  %s1 = inlined_call_operand.vmem [shape: bf16[288,64], index: 1, kind: input, shape index: {}]
  %s2 = inlined_call_operand.vmem [shape: f32[1,64], index: 2, kind: input, shape index: {}]
  %s3 = inlined_call_operand.vmem [shape: f32[1,64], index: 3, kind: input, shape index: {}]
  %s4 = inlined_call_operand.vmem [shape: bf16[32,64], index: 4, kind: output, shape index: {}]
  %s5 = sld [smem:[#allocation0]]
  $region26: #{bisenetv2_forward.8} parent=0
    _
  %s7 = ssub.s32 1, %s5
  %s8 = scalar_select 0, %s7, %s5
  // Predicated region
  $region2: #{bisenetv2_forward.8} parent=0 // pred_check
    _
  $region3: #{bisenetv2_forward.8} parent=0 // pred_check_branch
    %10 = sbr.rel (0) target = $region5
  $region4: #{bisenetv2_forward.8} parent=0 // pred_region
    _
  $region5: #{bisenetv2_forward.8} parent=0 // pred_fallthru
    _
  // Predicated region
  $region6: #{bisenetv2_forward.8} parent=0 // pred_check
    _
  $region7: #{bisenetv2_forward.8} parent=0 // pred_check_branch
    %12 = sbr.rel (0) target = $region9
  $region8: #{bisenetv2_forward.8} parent=0 // pred_region
    _
  $region9: #{bisenetv2_forward.8} parent=0 // pred_fallthru
    _
  // Predicated region
  $region10: #{bisenetv2_forward.8} parent=0 // pred_check
    _
  $region11: #{bisenetv2_forward.8} parent=0 // pred_check_branch
    %14 = sbr.rel (0) target = $region13
  $region12: #{bisenetv2_forward.8} parent=0 // pred_region
    _
  $region13: #{bisenetv2_forward.8} parent=0 // pred_fallthru
    _
  // Predicated region
  $region14: #{bisenetv2_forward.8} parent=0 // pred_check
    _
  $region15: #{bisenetv2_forward.8} parent=0 // pred_check_branch
    %16 = sbr.rel (0) target = $region17
  $region16: #{bisenetv2_forward.8} parent=0 // pred_region
    _
  $region17: #{bisenetv2_forward.8} parent=0 // pred_fallthru
    _
  %v18 = vld [vmem:[%s0] sm:$0xff]
  %v19 = vld [vmem:[%s0 + $0x8] sm:$0xf]
  %v20 = vld [vmem:[%s0 + $0xc] sm:$0xff]
  %v21 = vld [vmem:[%s0 + $0x14] sm:$0xf]
  %v22 = vld [vmem:[%s0 + $0x18] sm:$0xff]
  %v23 = vld [vmem:[%s0 + $0x20] sm:$0xf]
  %v24 = vld [vmem:[%s0 + $0x24] sm:$0xff]
  %v25 = vld [vmem:[%s0 + $0x2c] sm:$0xf]
  %v26 = vld [vmem:[%s1] sm:$0xf]
  %v27 = vld [vmem:[%s1 + $0x4] sm:$0xf]
  %v28 = vld [vmem:[%s1 + $0x8] sm:$0xf]
  %v29 = vld [vmem:[%s1 + $0xc] sm:$0xf]
  %v30 = vld [vmem:[%s1 + $0x10] sm:$0xf]
  %v31 = vld [vmem:[%s1 + $0x14] sm:$0xf]
  %v32 = vld [vmem:[%s1 + $0x18] sm:$0xf]
  %v33 = vld [vmem:[%s1 + $0x1c] sm:$0xf]
  %v34 = vld [vmem:[%s1 + $0x20] sm:$0xf]
  %v35 = vld [vmem:[%s1 + $0x24] sm:$0xf]
  %v36 = vld [vmem:[%s1 + $0x28] sm:$0xf]
  %v37 = vld [vmem:[%s1 + $0x2c] sm:$0xf]
  %v38 = vld [vmem:[%s1 + $0x30] sm:$0xf]
  %v39 = vld [vmem:[%s1 + $0x34] sm:$0xf]
  %v40 = vld [vmem:[%s1 + $0x38] sm:$0xf]
  %v41 = vld [vmem:[%s1 + $0x3c] sm:$0xf]
  %v42 = vld [vmem:[%s1 + $0x40] sm:$0xf]
  %v43 = vld [vmem:[%s1 + $0x44] sm:$0xf]
  %v44 = vld [vmem:[%s1 + $0x48] sm:$0xf]
  %v45 = vld [vmem:[%s1 + $0x4c] sm:$0xf]
  %v46 = vld [vmem:[%s1 + $0x50] sm:$0xf]
  %v47 = vld [vmem:[%s1 + $0x54] sm:$0xf]
  %v48 = vld [vmem:[%s1 + $0x58] sm:$0xf]
  %v49 = vld [vmem:[%s1 + $0x5c] sm:$0xf]
  %v50 = vld [vmem:[%s1 + $0x60] sm:$0xf]
  %v51 = vld [vmem:[%s1 + $0x64] sm:$0xf]
  %v52 = vld [vmem:[%s1 + $0x68] sm:$0xf]
  %v53 = vld [vmem:[%s1 + $0x6c] sm:$0xf]
  %v54 = vld [vmem:[%s1 + $0x70] sm:$0xf]
  %v55 = vld [vmem:[%s1 + $0x74] sm:$0xf]
  %v56 = vld [vmem:[%s1 + $0x78] sm:$0xf]
  %v57 = vld [vmem:[%s1 + $0x7c] sm:$0xf]
  %v58 = vld [vmem:[%s1 + $0x80] sm:$0xf]
  %v59 = vld [vmem:[%s1 + $0x84] sm:$0xf]
  %v60 = vld [vmem:[%s1 + $0x88] sm:$0xf]
  %v61 = vld [vmem:[%s1 + $0x8c] sm:$0xf]
  %v70 = vunpack.c.l.b16 %v18
  %v71 = vunpack.c.h.b16 %v18
  %v72 = vunpack.c.l.b16 %v19
  %v73 = vunpack.c.l.b16 %v20
  %v74 = vunpack.c.h.b16 %v20
  %v75 = vunpack.c.l.b16 %v21
  %v76 = vunpack.c.l.b16 %v22
  %v77 = vunpack.c.h.b16 %v22
  %v78 = vunpack.c.l.b16 %v23
  %v79 = vunpack.c.l.b16 %v24
  %v80 = vunpack.c.h.b16 %v24
  %v81 = vunpack.c.l.b16 %v25
  %v82 = vpack.c.b16 %v73, %v70
  %v83 = vpack.c.b16 %v74, %v71
  %v84 = vpack.c.b16 %v75, %v72
  %v85 = vpack.c.b16 %v79, %v76
  %v86 = vpack.c.b16 %v80, %v77
  %v87 = vpack.c.b16 %v81, %v78
  %v128 = vunpack.c.l.b16 %v26
  %v129 = vunpack.c.l.b16 %v27
  %v130 = vunpack.c.l.b16 %v28
  %v131 = vunpack.c.l.b16 %v29
  %v132 = vunpack.c.l.b16 %v30
  %v133 = vunpack.c.l.b16 %v31
  %v134 = vunpack.c.l.b16 %v32
  %v135 = vunpack.c.l.b16 %v33
  %v136 = vunpack.c.l.b16 %v34
  %v137 = vunpack.c.l.b16 %v35
  %v138 = vunpack.c.l.b16 %v36
  %v139 = vunpack.c.l.b16 %v37
  %v140 = vunpack.c.l.b16 %v38
  %v141 = vunpack.c.l.b16 %v39
  %v142 = vunpack.c.l.b16 %v40
  %v143 = vunpack.c.l.b16 %v41
  %v144 = vunpack.c.l.b16 %v42
  %v145 = vunpack.c.l.b16 %v43
  %v146 = vunpack.c.l.b16 %v44
  %v147 = vunpack.c.l.b16 %v45
  %v148 = vunpack.c.l.b16 %v46
  %v149 = vunpack.c.l.b16 %v47
  %v150 = vunpack.c.l.b16 %v48
  %v151 = vunpack.c.l.b16 %v49
  %v152 = vunpack.c.l.b16 %v50
  %v153 = vunpack.c.l.b16 %v51
  %v154 = vunpack.c.l.b16 %v52
  %v155 = vunpack.c.l.b16 %v53
  %v156 = vunpack.c.l.b16 %v54
  %v157 = vunpack.c.l.b16 %v55
  %v158 = vunpack.c.l.b16 %v56
  %v159 = vunpack.c.l.b16 %v57
  %v160 = vunpack.c.l.b16 %v58
  %v161 = vunpack.c.l.b16 %v59
  %v162 = vunpack.c.l.b16 %v60
  %v163 = vunpack.c.l.b16 %v61
  %v164 = vpack.c.b16 %v129, %v128
  %v165 = vpack.c.b16 %v131, %v130
  %v166 = vpack.c.b16 %v133, %v132
  %v167 = vpack.c.b16 %v135, %v134
  %v168 = vpack.c.b16 %v137, %v136
  %v169 = vpack.c.b16 %v139, %v138
  %v170 = vpack.c.b16 %v141, %v140
  %v171 = vpack.c.b16 %v143, %v142
  %v172 = vpack.c.b16 %v145, %v144
  %v173 = vpack.c.b16 %v147, %v146
  %v174 = vpack.c.b16 %v149, %v148
  %v175 = vpack.c.b16 %v151, %v150
  %v176 = vpack.c.b16 %v153, %v152
  %v177 = vpack.c.b16 %v155, %v154
  %v178 = vpack.c.b16 %v157, %v156
  %v179 = vpack.c.b16 %v159, %v158
  %v180 = vpack.c.b16 %v161, %v160
  %v181 = vpack.c.b16 %v163, %v162
  %vm200 = vcmask 261120
  %v202 = vsel %vm200, %v84, 0
  %v205 = vsel %vm200, %v87, 0
  %207 = vmatprep.subr.bf16.mxu0 0
  %208 = vmatpush1.bf16.msra.mxu0 %v164
  %209 = vmatprep.subr.bf16.mxu0 0
  %210 = vmatpush1.bf16.msra.mxu0 %v165
  %211 = vmatprep.subr.bf16.mxu0 0
  %212 = vmatpush1.bf16.msra.mxu0 %v166
  %213 = vmatprep.subr.bf16.mxu0 0
  %214 = vmatpush1.bf16.msra.mxu0 %v167
  %215 = vmatprep.subr.bf16.mxu0 0
  %216 = vmatpush1.bf16.msra.mxu0 %v168
  %217 = vmatprep.subr.bf16.mxu0 0
  %218 = vmatpush1.bf16.msra.mxu0 %v169
  %219 = vmatprep.subr.bf16.mxu0 0
  %220 = vmatpush1.bf16.msra.mxu0 %v170
  %221 = vmatprep.subr.bf16.mxu0 0
  %222 = vmatpush1.bf16.msra.mxu0 %v171
  %223 = vmatprep.subr.bf16.mxu0 0
  %224 = vmatpush1.bf16.msra.mxu0 %v172
  %225 = vmatprep.subr.bf16.mxu0 0
  %226 = vmatpush1.bf16.msra.mxu0 %v173
  %227 = vmatprep.subr.bf16.mxu0 0
  %228 = vmatpush1.bf16.msra.mxu0 %v174
  %229 = vmatprep.subr.bf16.mxu0 0
  %230 = vmatpush1.bf16.msra.mxu0 %v175
  %231 = vmatprep.subr.bf16.mxu0 0
  %232 = vmatpush1.bf16.msra.mxu0 %v176
  %233 = vmatprep.subr.bf16.mxu0 0
  %234 = vmatpush1.bf16.msra.mxu0 %v177
  %235 = vmatprep.subr.bf16.mxu0 0
  %236 = vmatpush1.bf16.msra.mxu0 %v178
  %237 = vmatprep.subr.bf16.mxu0 0
  %238 = vmatpush1.bf16.msra.mxu0 %v179
  %239 = vmatprep.mubr.bf16.mxu0 %v83
  %240 = vmatmul.mubr.bf16.gmra.mrb[0].mxu0 %v82
  %v241 = vpop.f32.mrb[0].mxu0
  %v242 = vadd.f32 0.0, %v241
  %v243 = vpop.f32.mrb[0].mxu0
  %v244 = vpop.f32.mrb[0].mxu0
  %v245 = vadd.f32 0.0, %v244
  %v246 = vpop.f32.mrb[0].mxu0
  %247 = vmatprep.mubr.bf16.mxu0 %v86
  %248 = vmatmul.mubr.bf16.gmra.mrb[0].mxu0 %v85
  %v249 = vpop.f32.mrb[0].mxu0
  %v250 = vadd.f32 0.0, %v249
  %v251 = vpop.f32.mrb[0].mxu0
  %v252 = vpop.f32.mrb[0].mxu0
  %v253 = vadd.f32 0.0, %v252
  %v254 = vpop.f32.mrb[0].mxu0
  %255 = vdwg.mxu0
  %256 = vmatprep.subr.bf16.mxu0 0
  %257 = vmatpush1.bf16.msra.mxu0 %v180
  %258 = vmatprep.subr.bf16.mxu0 0
  %259 = vmatpush1.bf16.msra.mxu0 %v181
  %260 = vmatprep.subr.bf16.mxu0 0
  %261 = vmatpush1.bf16.msra.mxu0 0
  %262 = vmatprep.subr.bf16.mxu0 0
  %263 = vmatpush1.bf16.msra.mxu0 0
  %264 = vmatprep.subr.bf16.mxu0 0
  %265 = vmatpush1.bf16.msra.mxu0 0
  %266 = vmatprep.subr.bf16.mxu0 0
  %267 = vmatpush1.bf16.msra.mxu0 0
  %268 = vmatprep.subr.bf16.mxu0 0
  %269 = vmatpush1.bf16.msra.mxu0 0
  %270 = vmatprep.subr.bf16.mxu0 0
  %271 = vmatpush1.bf16.msra.mxu0 0
  %272 = vmatprep.subr.bf16.mxu0 0
  %273 = vmatpush1.bf16.msra.mxu0 0
  %274 = vmatprep.subr.bf16.mxu0 0
  %275 = vmatpush1.bf16.msra.mxu0 0
  %276 = vmatprep.subr.bf16.mxu0 0
  %277 = vmatpush1.bf16.msra.mxu0 0
  %278 = vmatprep.subr.bf16.mxu0 0
  %279 = vmatpush1.bf16.msra.mxu0 0
  %280 = vmatprep.subr.bf16.mxu0 0
  %281 = vmatpush1.bf16.msra.mxu0 0
  %282 = vmatprep.subr.bf16.mxu0 0
  %283 = vmatpush1.bf16.msra.mxu0 0
  %284 = vmatprep.subr.bf16.mxu0 0
  %285 = vmatpush1.bf16.msra.mxu0 0
  %286 = vmatprep.subr.bf16.mxu0 0
  %287 = vmatpush1.bf16.msra.mxu0 0
  %288 = vmatprep.mubr.bf16.mxu0 0
  %289 = vmatmul.mubr.bf16.gmra.mrb[0].mxu0 %v202
  %v290 = vpop.f32.mrb[0].mxu0
  %v291 = vadd.f32 %v242, %v290
  %v292 = vpop.f32.mrb[0].mxu0
  %v293 = vpop.f32.mrb[0].mxu0
  %v294 = vadd.f32 %v245, %v293
  %v295 = vpop.f32.mrb[0].mxu0
  %296 = vmatprep.mubr.bf16.mxu0 0
  %297 = vmatmul.mubr.bf16.gmra.mrb[0].mxu0 %v205
  %v298 = vpop.f32.mrb[0].mxu0
  %v299 = vadd.f32 %v250, %v298
  %v300 = vpop.f32.mrb[0].mxu0
  %v301 = vpop.f32.mrb[0].mxu0
  %v302 = vadd.f32 %v253, %v301
  %v303 = vpop.f32.mrb[0].mxu0
  %304 = vdwg.mxu0
  %vm305 = vcmask 523264
  %v306 = vsel %vm305, %v291, 0.0
  %v307 = vsel %vm305, %v294, 0.0
  %v308 = vadd.f32 %v306, %v307
  %v309 = vsel %vm305, %v299, 0.0
  %v310 = vadd.f32 %v308, %v309
  %v311 = vsel %vm305, %v302, 0.0
  %v312 = vadd.f32 %v310, %v311
  %v313 = vrot.slane %v312, 4
  %v314 = vadd.f32 %v312, %v313
  %v315 = vrot.slane %v314, 2
  %v316 = vadd.f32 %v314, %v315
  %v317 = vrot.slane %v316, 1
  %v318 = vadd.f32 %v316, %v317
  %v319 = vrcp.pop 32.0
  %v320 = vmul.f32 %v318, %v319
  %v321 = vsub.f32 %v291, %v320
  %v322 = vsub.f32 %v294, %v320
  %v323 = vsub.f32 %v299, %v320
  %v324 = vsub.f32 %v302, %v320
  %v325 = vmul.f32 %v321, %v321
  %v326 = vmul.f32 %v322, %v322
  %v327 = vmul.f32 %v323, %v323
  %v328 = vmul.f32 %v324, %v324
  %v329 = vsel %vm305, %v325, 0.0
  %v330 = vsel %vm305, %v326, 0.0
  %v331 = vadd.f32 %v329, %v330
  %v332 = vsel %vm305, %v327, 0.0
  %v333 = vadd.f32 %v331, %v332
  %v334 = vsel %vm305, %v328, 0.0
  %v335 = vadd.f32 %v333, %v334
  %v336 = vrot.slane %v335, 4
  %v337 = vadd.f32 %v335, %v336
  %v338 = vrot.slane %v337, 2
  %v339 = vadd.f32 %v337, %v338
  %v340 = vrot.slane %v339, 1
  %v341 = vadd.f32 %v339, %v340
  %v342 = vmul.f32 %v341, %v319
  %v343 = vadd.f32 %v342, 1e-05
  %v344 = vrsqrt.pop %v343
  %v345 = vmul.f32 %v321, %v344
  %v346 = vmul.f32 %v322, %v344
  %v347 = vmul.f32 %v323, %v344
  %v348 = vmul.f32 %v324, %v344
  %v349 = vld [vmem:[%s2] sm:$0x1]
  %v351 = vlaneseq
  %v352 = vshrl.u32 %v351, 7
  %v353 = vsub.s32 0, %v352
  %v354 = vrot.slane %v349, %v353
  %v356 = vmul.f32 %v345, %v354
  %v357 = vmul.f32 %v346, %v354
  %v358 = vmul.f32 %v347, %v354
  %v359 = vmul.f32 %v348, %v354
  %v360 = vld [vmem:[%s3] sm:$0x1]
  %v362 = vlaneseq
  %v363 = vshrl.u32 %v362, 7
  %v364 = vsub.s32 0, %v363
  %v365 = vrot.slane %v360, %v364
  %v367 = vadd.f32 %v356, %v365
  %v368 = vadd.f32 %v357, %v365
  %v369 = vadd.f32 %v358, %v365
  %v370 = vadd.f32 %v359, %v365
  %v371 = vmax.f32 %v367, 0.0
  %v372 = vmax.f32 %v368, 0.0
  %v373 = vmax.f32 %v369, 0.0
  %v374 = vmax.f32 %v370, 0.0
  %v375 = vpack.c.bf16 %v372, %v371
  %v376 = vpack.c.bf16 %v374, %v373
  %v379 = vunpack.c.l.b16 %v375
  %v380 = vunpack.c.h.b16 %v375
  %v381 = vunpack.c.l.b16 %v376
  %v382 = vunpack.c.h.b16 %v376
  %v383 = vpack.c.b16 %v379, %v379
  %v384 = vpack.c.b16 %v380, %v380
  %v385 = vpack.c.b16 %v381, %v381
  %v386 = vpack.c.b16 %v382, %v382
  %vm391 = vcmask 519168
  %392 = vst.msk [vmem:[%s4] sm:$0xf] %vm391, %v383
  %393 = vst.msk [vmem:[%s4 + $0x4] sm:$0xf] %vm391, %v384
  %394 = vst.msk [vmem:[%s4 + $0x8] sm:$0xf] %vm391, %v385
  %395 = vst.msk [vmem:[%s4 + $0xc] sm:$0xf] %vm391, %v386
  // Predicated region
  $region18: #{bisenetv2_forward.8} parent=0 // pred_check
    _
  $region19: #{bisenetv2_forward.8} parent=0 // pred_check_branch
    %397 = sbr.rel (0) target = $region21
  $region20: #{bisenetv2_forward.8} parent=0 // pred_region
    _
  $region21: #{bisenetv2_forward.8} parent=0 // pred_fallthru
    _
  // Predicated region
  $region22: #{bisenetv2_forward.8} parent=0 // pred_check
    _
  $region23: #{bisenetv2_forward.8} parent=0 // pred_check_branch
    %399 = sbr.rel (0) target = $region25
  $region24: #{bisenetv2_forward.8} parent=0 // pred_region
    _
  $region25: #{bisenetv2_forward.8} parent=0 // pred_fallthru
    _

// kernel: bisenetv2_forward.9
$region0: #{bisenetv2_forward.9}
  #allocation0 [shape = 'u32[]', space=smem, size = 0x4, offset = 0x4, fixed_abs, tag = 'smem constant byte address 0x4 - core index']
  #allocation1 [shape = 'u32[144,128]{1,0:T(1,128)}', space=vmem, size = 0x12000, scoped, tag = 'internal scratch']
  %s0 = inlined_call_operand.vmem [shape: bf16[8,576], index: 0, kind: input, shape index: {}]
  %s1 = inlined_call_operand.vmem [shape: bf16[576,128], index: 1, kind: input, shape index: {}]
  %s2 = inlined_call_operand.vmem [shape: f32[1,128], index: 2, kind: input, shape index: {}]
  %s3 = inlined_call_operand.vmem [shape: f32[1,128], index: 3, kind: input, shape index: {}]
  %s4 = inlined_call_operand.vmem [shape: bf16[8,128], index: 4, kind: output, shape index: {}]
  %s5 = sld [smem:[#allocation0]]
  $region26: #{bisenetv2_forward.9} parent=0
    _
  %s7 = ssub.s32 1, %s5
  %s8 = scalar_select 0, %s7, %s5
  // Predicated region
  $region2: #{bisenetv2_forward.9} parent=0 // pred_check
    _
  $region3: #{bisenetv2_forward.9} parent=0 // pred_check_branch
    %10 = sbr.rel (0) target = $region5
  $region4: #{bisenetv2_forward.9} parent=0 // pred_region
    _
  $region5: #{bisenetv2_forward.9} parent=0 // pred_fallthru
    _
  // Predicated region
  $region6: #{bisenetv2_forward.9} parent=0 // pred_check
    _
  $region7: #{bisenetv2_forward.9} parent=0 // pred_check_branch
    %12 = sbr.rel (0) target = $region9
  $region8: #{bisenetv2_forward.9} parent=0 // pred_region
    _
  $region9: #{bisenetv2_forward.9} parent=0 // pred_fallthru
    _
  // Predicated region
  $region10: #{bisenetv2_forward.9} parent=0 // pred_check
    _
  $region11: #{bisenetv2_forward.9} parent=0 // pred_check_branch
    %14 = sbr.rel (0) target = $region13
  $region12: #{bisenetv2_forward.9} parent=0 // pred_region
    _
  $region13: #{bisenetv2_forward.9} parent=0 // pred_fallthru
    _
  // Predicated region
  $region14: #{bisenetv2_forward.9} parent=0 // pred_check
    _
  $region15: #{bisenetv2_forward.9} parent=0 // pred_check_branch
    %16 = sbr.rel (0) target = $region17
  $region16: #{bisenetv2_forward.9} parent=0 // pred_region
    _
  $region17: #{bisenetv2_forward.9} parent=0 // pred_fallthru
    _
  %v18 = vld [vmem:[%s0] sm:$0xff]
  %v19 = vld [vmem:[%s0 + $0x8] sm:$0xff]
  %v20 = vld [vmem:[%s0 + $0x10] sm:$0xf]
  %v21 = vld [vmem:[%s1] sm:$0xf]
  %v22 = vld [vmem:[%s1 + $0x4] sm:$0xf]
  %v23 = vld [vmem:[%s1 + $0x8] sm:$0xf]
  %v24 = vld [vmem:[%s1 + $0xc] sm:$0xf]
  %v25 = vld [vmem:[%s1 + $0x10] sm:$0xf]
  %v26 = vld [vmem:[%s1 + $0x14] sm:$0xf]
  %v27 = vld [vmem:[%s1 + $0x18] sm:$0xf]
  %v28 = vld [vmem:[%s1 + $0x1c] sm:$0xf]
  %v29 = vld [vmem:[%s1 + $0x20] sm:$0xf]
  %v30 = vld [vmem:[%s1 + $0x24] sm:$0xf]
  %v31 = vld [vmem:[%s1 + $0x28] sm:$0xf]
  %v32 = vld [vmem:[%s1 + $0x2c] sm:$0xf]
  %v33 = vld [vmem:[%s1 + $0x30] sm:$0xf]
  %v34 = vld [vmem:[%s1 + $0x34] sm:$0xf]
  %v35 = vld [vmem:[%s1 + $0x38] sm:$0xf]
  %v36 = vld [vmem:[%s1 + $0x3c] sm:$0xf]
  %v37 = vld [vmem:[%s1 + $0x40] sm:$0xf]
  %v38 = vld [vmem:[%s1 + $0x44] sm:$0xf]
  %v39 = vld [vmem:[%s1 + $0x48] sm:$0xf]
  %v40 = vld [vmem:[%s1 + $0x4c] sm:$0xf]
  %v41 = vld [vmem:[%s1 + $0x50] sm:$0xf]
  %v42 = vld [vmem:[%s1 + $0x54] sm:$0xf]
  %v43 = vld [vmem:[%s1 + $0x58] sm:$0xf]
  %v44 = vld [vmem:[%s1 + $0x5c] sm:$0xf]
  %v45 = vld [vmem:[%s1 + $0x60] sm:$0xf]
  %v46 = vld [vmem:[%s1 + $0x64] sm:$0xf]
  %v47 = vld [vmem:[%s1 + $0x68] sm:$0xf]
  %v48 = vld [vmem:[%s1 + $0x6c] sm:$0xf]
  %v49 = vld [vmem:[%s1 + $0x70] sm:$0xf]
  %v50 = vld [vmem:[%s1 + $0x74] sm:$0xf]
  %v51 = vld [vmem:[%s1 + $0x78] sm:$0xf]
  %v52 = vld [vmem:[%s1 + $0x7c] sm:$0xf]
  %v53 = vld [vmem:[%s1 + $0x80] sm:$0xf]
  %v54 = vld [vmem:[%s1 + $0x84] sm:$0xf]
  %v55 = vld [vmem:[%s1 + $0x88] sm:$0xf]
  %v56 = vld [vmem:[%s1 + $0x8c] sm:$0xf]
  %v57 = vld [vmem:[%s1 + $0x90] sm:$0xf]
  %v58 = vld [vmem:[%s1 + $0x94] sm:$0xf]
  %v59 = vld [vmem:[%s1 + $0x98] sm:$0xf]
  %v60 = vld [vmem:[%s1 + $0x9c] sm:$0xf]
  %v61 = vld [vmem:[%s1 + $0xa0] sm:$0xf]
  %v62 = vld [vmem:[%s1 + $0xa4] sm:$0xf]
  %v63 = vld [vmem:[%s1 + $0xa8] sm:$0xf]
  %v64 = vld [vmem:[%s1 + $0xac] sm:$0xf]
  %v65 = vld [vmem:[%s1 + $0xb0] sm:$0xf]
  %v66 = vld [vmem:[%s1 + $0xb4] sm:$0xf]
  %v67 = vld [vmem:[%s1 + $0xb8] sm:$0xf]
  %v68 = vld [vmem:[%s1 + $0xbc] sm:$0xf]
  %v69 = vld [vmem:[%s1 + $0xc0] sm:$0xf]
  %v70 = vld [vmem:[%s1 + $0xc4] sm:$0xf]
  %v71 = vld [vmem:[%s1 + $0xc8] sm:$0xf]
  %v72 = vld [vmem:[%s1 + $0xcc] sm:$0xf]
  %v73 = vld [vmem:[%s1 + $0xd0] sm:$0xf]
  %v74 = vld [vmem:[%s1 + $0xd4] sm:$0xf]
  %v75 = vld [vmem:[%s1 + $0xd8] sm:$0xf]
  %v76 = vld [vmem:[%s1 + $0xdc] sm:$0xf]
  %v77 = vld [vmem:[%s1 + $0xe0] sm:$0xf]
  %v78 = vld [vmem:[%s1 + $0xe4] sm:$0xf]
  %v79 = vld [vmem:[%s1 + $0xe8] sm:$0xf]
  %v80 = vld [vmem:[%s1 + $0xec] sm:$0xf]
  %v81 = vld [vmem:[%s1 + $0xf0] sm:$0xf]
  %v82 = vld [vmem:[%s1 + $0xf4] sm:$0xf]
  %v83 = vld [vmem:[%s1 + $0xf8] sm:$0xf]
  %v84 = vld [vmem:[%s1 + $0xfc] sm:$0xf]
  %v85 = vld [vmem:[%s1 + $0x100] sm:$0xf]
  %v86 = vld [vmem:[%s1 + $0x104] sm:$0xf]
  %v87 = vld [vmem:[%s1 + $0x108] sm:$0xf]
  %v88 = vld [vmem:[%s1 + $0x10c] sm:$0xf]
  %v89 = vld [vmem:[%s1 + $0x110] sm:$0xf]
  %v90 = vld [vmem:[%s1 + $0x114] sm:$0xf]
  %v91 = vld [vmem:[%s1 + $0x118] sm:$0xf]
  %v92 = vld [vmem:[%s1 + $0x11c] sm:$0xf]
  %v96 = vunpack.c.l.b16 %v18
  %v97 = vunpack.c.h.b16 %v18
  %v98 = vunpack.c.l.b16 %v19
  %v99 = vunpack.c.h.b16 %v19
  %v100 = vunpack.c.l.b16 %v20
  %v101 = vpack.c.b16 %v96, %v96
  %v102 = vpack.c.b16 %v97, %v97
  %v103 = vpack.c.b16 %v98, %v98
  %v104 = vpack.c.b16 %v99, %v99
  %v105 = vpack.c.b16 %v100, %v100
  %v182 = vunpack.c.l.b16 %v21
  %v183 = vunpack.c.l.b16 %v22
  %v184 = vunpack.c.l.b16 %v23
  %v185 = vunpack.c.l.b16 %v24
  %v186 = vunpack.c.l.b16 %v25
  %v187 = vunpack.c.l.b16 %v26
  %v188 = vunpack.c.l.b16 %v27
  %v189 = vunpack.c.l.b16 %v28
  %v190 = vunpack.c.l.b16 %v29
  %v191 = vunpack.c.l.b16 %v30
  %v192 = vunpack.c.l.b16 %v31
  %v193 = vunpack.c.l.b16 %v32
  %v194 = vunpack.c.l.b16 %v33
  %v195 = vunpack.c.l.b16 %v34
  %v196 = vunpack.c.l.b16 %v35
  %v197 = vunpack.c.l.b16 %v36
  %v198 = vunpack.c.l.b16 %v37
  %v199 = vunpack.c.l.b16 %v38
  %v200 = vunpack.c.l.b16 %v39
  %v201 = vunpack.c.l.b16 %v40
  %v202 = vunpack.c.l.b16 %v41
  %v203 = vunpack.c.l.b16 %v42
  %v204 = vunpack.c.l.b16 %v43
  %v205 = vunpack.c.l.b16 %v44
  %v206 = vunpack.c.l.b16 %v45
  %v207 = vunpack.c.l.b16 %v46
  %v208 = vunpack.c.l.b16 %v47
  %v209 = vunpack.c.l.b16 %v48
  %v210 = vunpack.c.l.b16 %v49
  %v211 = vunpack.c.l.b16 %v50
  %v212 = vunpack.c.l.b16 %v51
  %v213 = vunpack.c.l.b16 %v52
  %v214 = vunpack.c.l.b16 %v53
  %v215 = vunpack.c.l.b16 %v54
  %v216 = vunpack.c.l.b16 %v55
  %v217 = vunpack.c.l.b16 %v56
  %v218 = vunpack.c.l.b16 %v57
  %v219 = vunpack.c.l.b16 %v58
  %v220 = vunpack.c.l.b16 %v59
  %v221 = vunpack.c.l.b16 %v60
  %v222 = vunpack.c.l.b16 %v61
  %v223 = vunpack.c.l.b16 %v62
  %v224 = vunpack.c.l.b16 %v63
  %v225 = vunpack.c.l.b16 %v64
  %v226 = vunpack.c.l.b16 %v65
  %v227 = vunpack.c.l.b16 %v66
  %v228 = vunpack.c.l.b16 %v67
  %v229 = vunpack.c.l.b16 %v68
  %v230 = vunpack.c.l.b16 %v69
  %v231 = vunpack.c.l.b16 %v70
  %v232 = vunpack.c.l.b16 %v71
  %v233 = vunpack.c.l.b16 %v72
  %v234 = vunpack.c.l.b16 %v73
  %v235 = vunpack.c.l.b16 %v74
  %v236 = vunpack.c.l.b16 %v75
  %v237 = vunpack.c.l.b16 %v76
  %v238 = vunpack.c.l.b16 %v77
  %v239 = vunpack.c.l.b16 %v78
  %v240 = vunpack.c.l.b16 %v79
  %v241 = vunpack.c.l.b16 %v80
  %v242 = vunpack.c.l.b16 %v81
  %v243 = vunpack.c.l.b16 %v82
  %v244 = vunpack.c.l.b16 %v83
  %v245 = vunpack.c.l.b16 %v84
  %v246 = vunpack.c.l.b16 %v85
  %v247 = vunpack.c.l.b16 %v86
  %v248 = vunpack.c.l.b16 %v87
  %v249 = vunpack.c.l.b16 %v88
  %v250 = vunpack.c.l.b16 %v89
  %v251 = vunpack.c.l.b16 %v90
  %v252 = vunpack.c.l.b16 %v91
  %v253 = vunpack.c.l.b16 %v92
  %v254 = vpack.c.b16 %v183, %v182
  %v255 = vpack.c.b16 %v185, %v184
  %v256 = vpack.c.b16 %v187, %v186
  %v257 = vpack.c.b16 %v189, %v188
  %v258 = vpack.c.b16 %v191, %v190
  %v259 = vpack.c.b16 %v193, %v192
  %v260 = vpack.c.b16 %v195, %v194
  %v261 = vpack.c.b16 %v197, %v196
  %v262 = vpack.c.b16 %v199, %v198
  %v263 = vpack.c.b16 %v201, %v200
  %v264 = vpack.c.b16 %v203, %v202
  %v265 = vpack.c.b16 %v205, %v204
  %v266 = vpack.c.b16 %v207, %v206
  %v267 = vpack.c.b16 %v209, %v208
  %v268 = vpack.c.b16 %v211, %v210
  %v269 = vpack.c.b16 %v213, %v212
  %v270 = vpack.c.b16 %v215, %v214
  %v271 = vpack.c.b16 %v217, %v216
  %v272 = vpack.c.b16 %v219, %v218
  %v273 = vpack.c.b16 %v221, %v220
  %v274 = vpack.c.b16 %v223, %v222
  %v275 = vpack.c.b16 %v225, %v224
  %v276 = vpack.c.b16 %v227, %v226
  %v277 = vpack.c.b16 %v229, %v228
  %v278 = vpack.c.b16 %v231, %v230
  %v279 = vpack.c.b16 %v233, %v232
  %v280 = vpack.c.b16 %v235, %v234
  %v281 = vpack.c.b16 %v237, %v236
  %v282 = vpack.c.b16 %v239, %v238
  %v283 = vpack.c.b16 %v241, %v240
  %v284 = vpack.c.b16 %v243, %v242
  %v285 = vpack.c.b16 %v245, %v244
  %v286 = vpack.c.b16 %v247, %v246
  %v287 = vpack.c.b16 %v249, %v248
  %v288 = vpack.c.b16 %v251, %v250
  %v289 = vpack.c.b16 %v253, %v252
  %vm326 = vcmask 523264
  %v328 = vsel %vm326, %v105, 0
  %330 = vmatprep.subr.bf16.mxu0 0
  %331 = vmatpush1.bf16.msra.mxu0 %v254
  %332 = vmatprep.subr.bf16.mxu0 0
  %333 = vmatpush1.bf16.msra.mxu0 %v255
  %334 = vmatprep.subr.bf16.mxu0 0
  %335 = vmatpush1.bf16.msra.mxu0 %v256
  %336 = vmatprep.subr.bf16.mxu0 0
  %337 = vmatpush1.bf16.msra.mxu0 %v257
  %338 = vmatprep.subr.bf16.mxu0 0
  %339 = vmatpush1.bf16.msra.mxu0 %v258
  %340 = vmatprep.subr.bf16.mxu0 0
  %341 = vmatpush1.bf16.msra.mxu0 %v259
  %342 = vmatprep.subr.bf16.mxu0 0
  %343 = vmatpush1.bf16.msra.mxu0 %v260
  %344 = vmatprep.subr.bf16.mxu0 0
  %345 = vmatpush1.bf16.msra.mxu0 %v261
  %346 = vmatprep.subr.bf16.mxu0 0
  %347 = vmatpush1.bf16.msra.mxu0 %v262
  %348 = vmatprep.subr.bf16.mxu0 0
  %349 = vmatpush1.bf16.msra.mxu0 %v263
  %350 = vmatprep.subr.bf16.mxu0 0
  %351 = vmatpush1.bf16.msra.mxu0 %v264
  %352 = vmatprep.subr.bf16.mxu0 0
  %353 = vmatpush1.bf16.msra.mxu0 %v265
  %354 = vmatprep.subr.bf16.mxu0 0
  %355 = vmatpush1.bf16.msra.mxu0 %v266
  %356 = vmatprep.subr.bf16.mxu0 0
  %357 = vmatpush1.bf16.msra.mxu0 %v267
  %358 = vmatprep.subr.bf16.mxu0 0
  %359 = vmatpush1.bf16.msra.mxu0 %v268
  %360 = vmatprep.subr.bf16.mxu0 0
  %361 = vmatpush1.bf16.msra.mxu0 %v269
  %362 = vmatprep.mubr.bf16.mxu0 %v102
  %363 = vmatmul.mubr.bf16.gmra.mrb[0].mxu0 %v101
  %v364 = vpop.f32.mrb[0].mxu0
  %v365 = vadd.f32 0.0, %v364
  %v366 = vpop.f32.mrb[0].mxu0
  %v367 = vpop.f32.mrb[0].mxu0
  %v368 = vpop.f32.mrb[0].mxu0
  %369 = vdwg.mxu0
  %370 = vmatprep.subr.bf16.mxu0 0
  %371 = vmatpush1.bf16.msra.mxu0 %v270
  %372 = vmatprep.subr.bf16.mxu0 0
  %373 = vmatpush1.bf16.msra.mxu0 %v271
  %374 = vmatprep.subr.bf16.mxu0 0
  %375 = vmatpush1.bf16.msra.mxu0 %v272
  %376 = vmatprep.subr.bf16.mxu0 0
  %377 = vmatpush1.bf16.msra.mxu0 %v273
  %378 = vmatprep.subr.bf16.mxu0 0
  %379 = vmatpush1.bf16.msra.mxu0 %v274
  %380 = vmatprep.subr.bf16.mxu0 0
  %381 = vmatpush1.bf16.msra.mxu0 %v275
  %382 = vmatprep.subr.bf16.mxu0 0
  %383 = vmatpush1.bf16.msra.mxu0 %v276
  %384 = vmatprep.subr.bf16.mxu0 0
  %385 = vmatpush1.bf16.msra.mxu0 %v277
  %386 = vmatprep.subr.bf16.mxu0 0
  %387 = vmatpush1.bf16.msra.mxu0 %v278
  %388 = vmatprep.subr.bf16.mxu0 0
  %389 = vmatpush1.bf16.msra.mxu0 %v279
  %390 = vmatprep.subr.bf16.mxu0 0
  %391 = vmatpush1.bf16.msra.mxu0 %v280
  %392 = vmatprep.subr.bf16.mxu0 0
  %393 = vmatpush1.bf16.msra.mxu0 %v281
  %394 = vmatprep.subr.bf16.mxu0 0
  %395 = vmatpush1.bf16.msra.mxu0 %v282
  %396 = vmatprep.subr.bf16.mxu0 0
  %397 = vmatpush1.bf16.msra.mxu0 %v283
  %398 = vmatprep.subr.bf16.mxu0 0
  %399 = vmatpush1.bf16.msra.mxu0 %v284
  %400 = vmatprep.subr.bf16.mxu0 0
  %401 = vmatpush1.bf16.msra.mxu0 %v285
  %402 = vmatprep.mubr.bf16.mxu0 %v104
  %403 = vmatmul.mubr.bf16.gmra.mrb[0].mxu0 %v103
  %v404 = vpop.f32.mrb[0].mxu0
  %v405 = vadd.f32 %v365, %v404
  %v406 = vpop.f32.mrb[0].mxu0
  %v407 = vpop.f32.mrb[0].mxu0
  %v408 = vpop.f32.mrb[0].mxu0
  %409 = vdwg.mxu0
  %410 = vmatprep.subr.bf16.mxu0 0
  %411 = vmatpush1.bf16.msra.mxu0 %v286
  %412 = vmatprep.subr.bf16.mxu0 0
  %413 = vmatpush1.bf16.msra.mxu0 %v287
  %414 = vmatprep.subr.bf16.mxu0 0
  %415 = vmatpush1.bf16.msra.mxu0 %v288
  %416 = vmatprep.subr.bf16.mxu0 0
  %417 = vmatpush1.bf16.msra.mxu0 %v289
  %418 = vmatprep.subr.bf16.mxu0 0
  %419 = vmatpush1.bf16.msra.mxu0 0
  %420 = vmatprep.subr.bf16.mxu0 0
  %421 = vmatpush1.bf16.msra.mxu0 0
  %422 = vmatprep.subr.bf16.mxu0 0
  %423 = vmatpush1.bf16.msra.mxu0 0
  %424 = vmatprep.subr.bf16.mxu0 0
  %425 = vmatpush1.bf16.msra.mxu0 0
  %426 = vmatprep.subr.bf16.mxu0 0
  %427 = vmatpush1.bf16.msra.mxu0 0
  %428 = vmatprep.subr.bf16.mxu0 0
  %429 = vmatpush1.bf16.msra.mxu0 0
  %430 = vmatprep.subr.bf16.mxu0 0
  %431 = vmatpush1.bf16.msra.mxu0 0
  %432 = vmatprep.subr.bf16.mxu0 0
  %433 = vmatpush1.bf16.msra.mxu0 0
  %434 = vmatprep.subr.bf16.mxu0 0
  %435 = vmatpush1.bf16.msra.mxu0 0
  %436 = vmatprep.subr.bf16.mxu0 0
  %437 = vmatpush1.bf16.msra.mxu0 0
  %438 = vmatprep.subr.bf16.mxu0 0
  %439 = vmatpush1.bf16.msra.mxu0 0
  %440 = vmatprep.subr.bf16.mxu0 0
  %441 = vmatpush1.bf16.msra.mxu0 0
  %442 = vmatprep.mubr.bf16.mxu0 0
  %443 = vmatmul.mubr.bf16.gmra.mrb[0].mxu0 %v328
  %v444 = vpop.f32.mrb[0].mxu0
  %v445 = vadd.f32 %v405, %v444
  %v446 = vpop.f32.mrb[0].mxu0
  %v447 = vpop.f32.mrb[0].mxu0
  %v448 = vpop.f32.mrb[0].mxu0
  %449 = vdwg.mxu0
  %v450 = vrot.slane %v445, 4
  %v451 = vadd.f32 %v445, %v450
  %v452 = vrot.slane %v451, 2
  %v453 = vadd.f32 %v451, %v452
  %v454 = vrot.slane %v453, 1
  %v455 = vadd.f32 %v453, %v454
  %v456 = vrcp.pop 8.0
  %v457 = vmul.f32 %v455, %v456
  %v458 = vsub.f32 %v445, %v457
  %v459 = vmul.f32 %v458, %v458
  %v460 = vrot.slane %v459, 4
  %v461 = vadd.f32 %v459, %v460
  %v462 = vrot.slane %v461, 2
  %v463 = vadd.f32 %v461, %v462
  %v464 = vrot.slane %v463, 1
  %v465 = vadd.f32 %v463, %v464
  %v466 = vmul.f32 %v465, %v456
  %v467 = vadd.f32 %v466, 1e-05
  %v468 = vrsqrt.pop %v467
  %v469 = vmul.f32 %v458, %v468
  %v470 = vld [vmem:[%s2] sm:$0x1]
  %v472 = vlaneseq
  %v473 = vshrl.u32 %v472, 7
  %v474 = vsub.s32 0, %v473
  %v475 = vrot.slane %v470, %v474
  %v477 = vmul.f32 %v469, %v475
  %v478 = vld [vmem:[%s3] sm:$0x1]
  %v480 = vlaneseq
  %v481 = vshrl.u32 %v480, 7
  %v482 = vsub.s32 0, %v481
  %v483 = vrot.slane %v478, %v482
  %v485 = vadd.f32 %v477, %v483
  %v486 = vmax.f32 %v485, 0.0
  %v487 = vpack.c.bf16 %v486, %v486
  %488 = vst [vmem:[%s4] sm:$0xf] %v487
  // Predicated region
  $region18: #{bisenetv2_forward.9} parent=0 // pred_check
    _
  $region19: #{bisenetv2_forward.9} parent=0 // pred_check_branch
    %490 = sbr.rel (0) target = $region21
  $region20: #{bisenetv2_forward.9} parent=0 // pred_region
    _
  $region21: #{bisenetv2_forward.9} parent=0 // pred_fallthru
    _
  // Predicated region
  $region22: #{bisenetv2_forward.9} parent=0 // pred_check
    _
  $region23: #{bisenetv2_forward.9} parent=0 // pred_check_branch
    %492 = sbr.rel (0) target = $region25
  $region24: #{bisenetv2_forward.9} parent=0 // pred_region
    _
  $region25: #{bisenetv2_forward.9} parent=0 // pred_fallthru
    _

// kernel: bisenetv2_forward.10
$region0: #{bisenetv2_forward.10}
  #allocation0 [shape = 'u32[]', space=smem, size = 0x4, offset = 0x4, fixed_abs, tag = 'smem constant byte address 0x4 - core index']
  #allocation1 [shape = 'u32[144,128]{1,0:T(1,128)}', space=vmem, size = 0x12000, scoped, tag = 'internal scratch']
  %s0 = inlined_call_operand.vmem [shape: bf16[8,1152], index: 0, kind: input, shape index: {}]
  %s1 = inlined_call_operand.vmem [shape: bf16[1152,128], index: 1, kind: input, shape index: {}]
  %s2 = inlined_call_operand.vmem [shape: f32[1,128], index: 2, kind: input, shape index: {}]
  %s3 = inlined_call_operand.vmem [shape: f32[1,128], index: 3, kind: input, shape index: {}]
  %s4 = inlined_call_operand.vmem [shape: bf16[8,128], index: 4, kind: output, shape index: {}]
  %s5 = sld [smem:[#allocation0]]
  $region26: #{bisenetv2_forward.10} parent=0
    _
  %s7 = ssub.s32 1, %s5
  %s8 = scalar_select 0, %s7, %s5
  // Predicated region
  $region2: #{bisenetv2_forward.10} parent=0 // pred_check
    _
  $region3: #{bisenetv2_forward.10} parent=0 // pred_check_branch
    %10 = sbr.rel (0) target = $region5
  $region4: #{bisenetv2_forward.10} parent=0 // pred_region
    _
  $region5: #{bisenetv2_forward.10} parent=0 // pred_fallthru
    _
  // Predicated region
  $region6: #{bisenetv2_forward.10} parent=0 // pred_check
    _
  $region7: #{bisenetv2_forward.10} parent=0 // pred_check_branch
    %12 = sbr.rel (0) target = $region9
  $region8: #{bisenetv2_forward.10} parent=0 // pred_region
    _
  $region9: #{bisenetv2_forward.10} parent=0 // pred_fallthru
    _
  // Predicated region
  $region10: #{bisenetv2_forward.10} parent=0 // pred_check
    _
  $region11: #{bisenetv2_forward.10} parent=0 // pred_check_branch
    %14 = sbr.rel (0) target = $region13
  $region12: #{bisenetv2_forward.10} parent=0 // pred_region
    _
  $region13: #{bisenetv2_forward.10} parent=0 // pred_fallthru
    _
  // Predicated region
  $region14: #{bisenetv2_forward.10} parent=0 // pred_check
    _
  $region15: #{bisenetv2_forward.10} parent=0 // pred_check_branch
    %16 = sbr.rel (0) target = $region17
  $region16: #{bisenetv2_forward.10} parent=0 // pred_region
    _
  $region17: #{bisenetv2_forward.10} parent=0 // pred_fallthru
    _
  %v18 = vld [vmem:[%s0] sm:$0xff]
  %v19 = vld [vmem:[%s0 + $0x8] sm:$0xff]
  %v20 = vld [vmem:[%s0 + $0x10] sm:$0xff]
  %v21 = vld [vmem:[%s0 + $0x18] sm:$0xff]
  %v22 = vld [vmem:[%s0 + $0x20] sm:$0xf]
  %v23 = vld [vmem:[%s1] sm:$0xf]
  %v24 = vld [vmem:[%s1 + $0x4] sm:$0xf]
  %v25 = vld [vmem:[%s1 + $0x8] sm:$0xf]
  %v26 = vld [vmem:[%s1 + $0xc] sm:$0xf]
  %v27 = vld [vmem:[%s1 + $0x10] sm:$0xf]
  %v28 = vld [vmem:[%s1 + $0x14] sm:$0xf]
  %v29 = vld [vmem:[%s1 + $0x18] sm:$0xf]
  %v30 = vld [vmem:[%s1 + $0x1c] sm:$0xf]
  %v31 = vld [vmem:[%s1 + $0x20] sm:$0xf]
  %v32 = vld [vmem:[%s1 + $0x24] sm:$0xf]
  %v33 = vld [vmem:[%s1 + $0x28] sm:$0xf]
  %v34 = vld [vmem:[%s1 + $0x2c] sm:$0xf]
  %v35 = vld [vmem:[%s1 + $0x30] sm:$0xf]
  %v36 = vld [vmem:[%s1 + $0x34] sm:$0xf]
  %v37 = vld [vmem:[%s1 + $0x38] sm:$0xf]
  %v38 = vld [vmem:[%s1 + $0x3c] sm:$0xf]
  %v39 = vld [vmem:[%s1 + $0x40] sm:$0xf]
  %v40 = vld [vmem:[%s1 + $0x44] sm:$0xf]
  %v41 = vld [vmem:[%s1 + $0x48] sm:$0xf]
  %v42 = vld [vmem:[%s1 + $0x4c] sm:$0xf]
  %v43 = vld [vmem:[%s1 + $0x50] sm:$0xf]
  %v44 = vld [vmem:[%s1 + $0x54] sm:$0xf]
  %v45 = vld [vmem:[%s1 + $0x58] sm:$0xf]
  %v46 = vld [vmem:[%s1 + $0x5c] sm:$0xf]
  %v47 = vld [vmem:[%s1 + $0x60] sm:$0xf]
  %v48 = vld [vmem:[%s1 + $0x64] sm:$0xf]
  %v49 = vld [vmem:[%s1 + $0x68] sm:$0xf]
  %v50 = vld [vmem:[%s1 + $0x6c] sm:$0xf]
  %v51 = vld [vmem:[%s1 + $0x70] sm:$0xf]
  %v52 = vld [vmem:[%s1 + $0x74] sm:$0xf]
  %v53 = vld [vmem:[%s1 + $0x78] sm:$0xf]
  %v54 = vld [vmem:[%s1 + $0x7c] sm:$0xf]
  %v55 = vld [vmem:[%s1 + $0x80] sm:$0xf]
  %v56 = vld [vmem:[%s1 + $0x84] sm:$0xf]
  %v57 = vld [vmem:[%s1 + $0x88] sm:$0xf]
  %v58 = vld [vmem:[%s1 + $0x8c] sm:$0xf]
  %v59 = vld [vmem:[%s1 + $0x90] sm:$0xf]
  %v60 = vld [vmem:[%s1 + $0x94] sm:$0xf]
  %v61 = vld [vmem:[%s1 + $0x98] sm:$0xf]
  %v62 = vld [vmem:[%s1 + $0x9c] sm:$0xf]
  %v63 = vld [vmem:[%s1 + $0xa0] sm:$0xf]
  %v64 = vld [vmem:[%s1 + $0xa4] sm:$0xf]
  %v65 = vld [vmem:[%s1 + $0xa8] sm:$0xf]
  %v66 = vld [vmem:[%s1 + $0xac] sm:$0xf]
  %v67 = vld [vmem:[%s1 + $0xb0] sm:$0xf]
  %v68 = vld [vmem:[%s1 + $0xb4] sm:$0xf]
  %v69 = vld [vmem:[%s1 + $0xb8] sm:$0xf]
  %v70 = vld [vmem:[%s1 + $0xbc] sm:$0xf]
  %v71 = vld [vmem:[%s1 + $0xc0] sm:$0xf]
  %v72 = vld [vmem:[%s1 + $0xc4] sm:$0xf]
  %v73 = vld [vmem:[%s1 + $0xc8] sm:$0xf]
  %v74 = vld [vmem:[%s1 + $0xcc] sm:$0xf]
  %v75 = vld [vmem:[%s1 + $0xd0] sm:$0xf]
  %v76 = vld [vmem:[%s1 + $0xd4] sm:$0xf]
  %v77 = vld [vmem:[%s1 + $0xd8] sm:$0xf]
  %v78 = vld [vmem:[%s1 + $0xdc] sm:$0xf]
  %v79 = vld [vmem:[%s1 + $0xe0] sm:$0xf]
  %v80 = vld [vmem:[%s1 + $0xe4] sm:$0xf]
  %v81 = vld [vmem:[%s1 + $0xe8] sm:$0xf]
  %v82 = vld [vmem:[%s1 + $0xec] sm:$0xf]
  %v83 = vld [vmem:[%s1 + $0xf0] sm:$0xf]
  %v84 = vld [vmem:[%s1 + $0xf4] sm:$0xf]
  %v85 = vld [vmem:[%s1 + $0xf8] sm:$0xf]
  %v86 = vld [vmem:[%s1 + $0xfc] sm:$0xf]
  %v87 = vld [vmem:[%s1 + $0x100] sm:$0xf]
  %v88 = vld [vmem:[%s1 + $0x104] sm:$0xf]
  %v89 = vld [vmem:[%s1 + $0x108] sm:$0xf]
  %v90 = vld [vmem:[%s1 + $0x10c] sm:$0xf]
  %v91 = vld [vmem:[%s1 + $0x110] sm:$0xf]
  %v92 = vld [vmem:[%s1 + $0x114] sm:$0xf]
  %v93 = vld [vmem:[%s1 + $0x118] sm:$0xf]
  %v94 = vld [vmem:[%s1 + $0x11c] sm:$0xf]
  %v95 = vld [vmem:[%s1 + $0x120] sm:$0xf]
  %v96 = vld [vmem:[%s1 + $0x124] sm:$0xf]
  %v97 = vld [vmem:[%s1 + $0x128] sm:$0xf]
  %v98 = vld [vmem:[%s1 + $0x12c] sm:$0xf]
  %v99 = vld [vmem:[%s1 + $0x130] sm:$0xf]
  %v100 = vld [vmem:[%s1 + $0x134] sm:$0xf]
  %v101 = vld [vmem:[%s1 + $0x138] sm:$0xf]
  %v102 = vld [vmem:[%s1 + $0x13c] sm:$0xf]
  %v103 = vld [vmem:[%s1 + $0x140] sm:$0xf]
  %v104 = vld [vmem:[%s1 + $0x144] sm:$0xf]
  %v105 = vld [vmem:[%s1 + $0x148] sm:$0xf]
  %v106 = vld [vmem:[%s1 + $0x14c] sm:$0xf]
  %v107 = vld [vmem:[%s1 + $0x150] sm:$0xf]
  %v108 = vld [vmem:[%s1 + $0x154] sm:$0xf]
  %v109 = vld [vmem:[%s1 + $0x158] sm:$0xf]
  %v110 = vld [vmem:[%s1 + $0x15c] sm:$0xf]
  %v111 = vld [vmem:[%s1 + $0x160] sm:$0xf]
  %v112 = vld [vmem:[%s1 + $0x164] sm:$0xf]
  %v113 = vld [vmem:[%s1 + $0x168] sm:$0xf]
  %v114 = vld [vmem:[%s1 + $0x16c] sm:$0xf]
  %v115 = vld [vmem:[%s1 + $0x170] sm:$0xf]
  %v116 = vld [vmem:[%s1 + $0x174] sm:$0xf]
  %v117 = vld [vmem:[%s1 + $0x178] sm:$0xf]
  %v118 = vld [vmem:[%s1 + $0x17c] sm:$0xf]
  %v119 = vld [vmem:[%s1 + $0x180] sm:$0xf]
  %v120 = vld [vmem:[%s1 + $0x184] sm:$0xf]
  %v121 = vld [vmem:[%s1 + $0x188] sm:$0xf]
  %v122 = vld [vmem:[%s1 + $0x18c] sm:$0xf]
  %v123 = vld [vmem:[%s1 + $0x190] sm:$0xf]
  %v124 = vld [vmem:[%s1 + $0x194] sm:$0xf]
  %v125 = vld [vmem:[%s1 + $0x198] sm:$0xf]
  %v126 = vld [vmem:[%s1 + $0x19c] sm:$0xf]
  %v127 = vld [vmem:[%s1 + $0x1a0] sm:$0xf]
  %v128 = vld [vmem:[%s1 + $0x1a4] sm:$0xf]
  %v129 = vld [vmem:[%s1 + $0x1a8] sm:$0xf]
  %v130 = vld [vmem:[%s1 + $0x1ac] sm:$0xf]
  %v131 = vld [vmem:[%s1 + $0x1b0] sm:$0xf]
  %v132 = vld [vmem:[%s1 + $0x1b4] sm:$0xf]
  %v133 = vld [vmem:[%s1 + $0x1b8] sm:$0xf]
  %v134 = vld [vmem:[%s1 + $0x1bc] sm:$0xf]
  %v135 = vld [vmem:[%s1 + $0x1c0] sm:$0xf]
  %v136 = vld [vmem:[%s1 + $0x1c4] sm:$0xf]
  %v137 = vld [vmem:[%s1 + $0x1c8] sm:$0xf]
  %v138 = vld [vmem:[%s1 + $0x1cc] sm:$0xf]
  %v139 = vld [vmem:[%s1 + $0x1d0] sm:$0xf]
  %v140 = vld [vmem:[%s1 + $0x1d4] sm:$0xf]
  %v141 = vld [vmem:[%s1 + $0x1d8] sm:$0xf]
  %v142 = vld [vmem:[%s1 + $0x1dc] sm:$0xf]
  %v143 = vld [vmem:[%s1 + $0x1e0] sm:$0xf]
  %v144 = vld [vmem:[%s1 + $0x1e4] sm:$0xf]
  %v145 = vld [vmem:[%s1 + $0x1e8] sm:$0xf]
  %v146 = vld [vmem:[%s1 + $0x1ec] sm:$0xf]
  %v147 = vld [vmem:[%s1 + $0x1f0] sm:$0xf]
  %v148 = vld [vmem:[%s1 + $0x1f4] sm:$0xf]
  %v149 = vld [vmem:[%s1 + $0x1f8] sm:$0xf]
  %v150 = vld [vmem:[%s1 + $0x1fc] sm:$0xf]
  %v151 = vld [vmem:[%s1 + $0x200] sm:$0xf]
  %v152 = vld [vmem:[%s1 + $0x204] sm:$0xf]
  %v153 = vld [vmem:[%s1 + $0x208] sm:$0xf]
  %v154 = vld [vmem:[%s1 + $0x20c] sm:$0xf]
  %v155 = vld [vmem:[%s1 + $0x210] sm:$0xf]
  %v156 = vld [vmem:[%s1 + $0x214] sm:$0xf]
  %v157 = vld [vmem:[%s1 + $0x218] sm:$0xf]
  %v158 = vld [vmem:[%s1 + $0x21c] sm:$0xf]
  %v159 = vld [vmem:[%s1 + $0x220] sm:$0xf]
  %v160 = vld [vmem:[%s1 + $0x224] sm:$0xf]
  %v161 = vld [vmem:[%s1 + $0x228] sm:$0xf]
  %v162 = vld [vmem:[%s1 + $0x22c] sm:$0xf]
  %v163 = vld [vmem:[%s1 + $0x230] sm:$0xf]
  %v164 = vld [vmem:[%s1 + $0x234] sm:$0xf]
  %v165 = vld [vmem:[%s1 + $0x238] sm:$0xf]
  %v166 = vld [vmem:[%s1 + $0x23c] sm:$0xf]
  %v172 = vunpack.c.l.b16 %v18
  %v173 = vunpack.c.h.b16 %v18
  %v174 = vunpack.c.l.b16 %v19
  %v175 = vunpack.c.h.b16 %v19
  %v176 = vunpack.c.l.b16 %v20
  %v177 = vunpack.c.h.b16 %v20
  %v178 = vunpack.c.l.b16 %v21
  %v179 = vunpack.c.h.b16 %v21
  %v180 = vunpack.c.l.b16 %v22
  %v181 = vpack.c.b16 %v172, %v172
  %v182 = vpack.c.b16 %v173, %v173
  %v183 = vpack.c.b16 %v174, %v174
  %v184 = vpack.c.b16 %v175, %v175
  %v185 = vpack.c.b16 %v176, %v176
  %v186 = vpack.c.b16 %v177, %v177
  %v187 = vpack.c.b16 %v178, %v178
  %v188 = vpack.c.b16 %v179, %v179
  %v189 = vpack.c.b16 %v180, %v180
  %v343 = vunpack.c.l.b16 %v23
  %v344 = vunpack.c.l.b16 %v24
  %v345 = vunpack.c.l.b16 %v25
  %v346 = vunpack.c.l.b16 %v26
  %v347 = vunpack.c.l.b16 %v27
  %v348 = vunpack.c.l.b16 %v28
  %v349 = vunpack.c.l.b16 %v29
  %v350 = vunpack.c.l.b16 %v30
  %v351 = vunpack.c.l.b16 %v31
  %v352 = vunpack.c.l.b16 %v32
  %v353 = vunpack.c.l.b16 %v33
  %v354 = vunpack.c.l.b16 %v34
  %v355 = vunpack.c.l.b16 %v35
  %v356 = vunpack.c.l.b16 %v36
  %v357 = vunpack.c.l.b16 %v37
  %v358 = vunpack.c.l.b16 %v38
  %v359 = vunpack.c.l.b16 %v39
  %v360 = vunpack.c.l.b16 %v40
  %v361 = vunpack.c.l.b16 %v41
  %v362 = vunpack.c.l.b16 %v42
  %v363 = vunpack.c.l.b16 %v43
  %v364 = vunpack.c.l.b16 %v44
  %v365 = vunpack.c.l.b16 %v45
  %v366 = vunpack.c.l.b16 %v46
  %v367 = vunpack.c.l.b16 %v47
  %v368 = vunpack.c.l.b16 %v48
  %v369 = vunpack.c.l.b16 %v49
  %v370 = vunpack.c.l.b16 %v50
  %v371 = vunpack.c.l.b16 %v51
  %v372 = vunpack.c.l.b16 %v52
  %v373 = vunpack.c.l.b16 %v53
  %v374 = vunpack.c.l.b16 %v54
  %v375 = vunpack.c.l.b16 %v55
  %v376 = vunpack.c.l.b16 %v56
  %v377 = vunpack.c.l.b16 %v57
  %v378 = vunpack.c.l.b16 %v58
  %v379 = vunpack.c.l.b16 %v59
  %v380 = vunpack.c.l.b16 %v60
  %v381 = vunpack.c.l.b16 %v61
  %v382 = vunpack.c.l.b16 %v62
  %v383 = vunpack.c.l.b16 %v63
  %v384 = vunpack.c.l.b16 %v64
  %v385 = vunpack.c.l.b16 %v65
  %v386 = vunpack.c.l.b16 %v66
  %v387 = vunpack.c.l.b16 %v67
  %v388 = vunpack.c.l.b16 %v68
  %v389 = vunpack.c.l.b16 %v69
  %v390 = vunpack.c.l.b16 %v70
  %v391 = vunpack.c.l.b16 %v71
  %v392 = vunpack.c.l.b16 %v72
  %v393 = vunpack.c.l.b16 %v73
  %v394 = vunpack.c.l.b16 %v74
  %v395 = vunpack.c.l.b16 %v75
  %v396 = vunpack.c.l.b16 %v76
  %v397 = vunpack.c.l.b16 %v77
  %v398 = vunpack.c.l.b16 %v78
  %v399 = vunpack.c.l.b16 %v79
  %v400 = vunpack.c.l.b16 %v80
  %v401 = vunpack.c.l.b16 %v81
  %v402 = vunpack.c.l.b16 %v82
  %v403 = vunpack.c.l.b16 %v83
  %v404 = vunpack.c.l.b16 %v84
  %v405 = vunpack.c.l.b16 %v85
  %v406 = vunpack.c.l.b16 %v86
  %v407 = vunpack.c.l.b16 %v87
  %v408 = vunpack.c.l.b16 %v88
  %v409 = vunpack.c.l.b16 %v89
  %v410 = vunpack.c.l.b16 %v90
  %v411 = vunpack.c.l.b16 %v91
  %v412 = vunpack.c.l.b16 %v92
  %v413 = vunpack.c.l.b16 %v93
  %v414 = vunpack.c.l.b16 %v94
  %v415 = vunpack.c.l.b16 %v95
  %v416 = vunpack.c.l.b16 %v96
  %v417 = vunpack.c.l.b16 %v97
  %v418 = vunpack.c.l.b16 %v98
  %v419 = vunpack.c.l.b16 %v99
  %v420 = vunpack.c.l.b16 %v100
  %v421 = vunpack.c.l.b16 %v101
  %v422 = vunpack.c.l.b16 %v102
  %v423 = vunpack.c.l.b16 %v103
  %v424 = vunpack.c.l.b16 %v104
  %v425 = vunpack.c.l.b16 %v105
  %v426 = vunpack.c.l.b16 %v106
  %v427 = vunpack.c.l.b16 %v107
  %v428 = vunpack.c.l.b16 %v108
  %v429 = vunpack.c.l.b16 %v109
  %v430 = vunpack.c.l.b16 %v110
  %v431 = vunpack.c.l.b16 %v111
  %v432 = vunpack.c.l.b16 %v112
  %v433 = vunpack.c.l.b16 %v113
  %v434 = vunpack.c.l.b16 %v114
  %v435 = vunpack.c.l.b16 %v115
  %v436 = vunpack.c.l.b16 %v116
  %v437 = vunpack.c.l.b16 %v117
  %v438 = vunpack.c.l.b16 %v118
  %v439 = vunpack.c.l.b16 %v119
  %v440 = vunpack.c.l.b16 %v120
  %v441 = vunpack.c.l.b16 %v121
  %v442 = vunpack.c.l.b16 %v122
  %v443 = vunpack.c.l.b16 %v123
  %v444 = vunpack.c.l.b16 %v124
  %v445 = vunpack.c.l.b16 %v125
  %v446 = vunpack.c.l.b16 %v126
  %v447 = vunpack.c.l.b16 %v127
  %v448 = vunpack.c.l.b16 %v128
  %v449 = vunpack.c.l.b16 %v129
  %v450 = vunpack.c.l.b16 %v130
  %v451 = vunpack.c.l.b16 %v131
  %v452 = vunpack.c.l.b16 %v132
  %v453 = vunpack.c.l.b16 %v133
  %v454 = vunpack.c.l.b16 %v134
  %v455 = vunpack.c.l.b16 %v135
  %v456 = vunpack.c.l.b16 %v136
  %v457 = vunpack.c.l.b16 %v137
  %v458 = vunpack.c.l.b16 %v138
  %v459 = vunpack.c.l.b16 %v139
  %v460 = vunpack.c.l.b16 %v140
  %v461 = vunpack.c.l.b16 %v141
  %v462 = vunpack.c.l.b16 %v142
  %v463 = vunpack.c.l.b16 %v143
  %v464 = vunpack.c.l.b16 %v144
  %v465 = vunpack.c.l.b16 %v145
  %v466 = vunpack.c.l.b16 %v146
  %v467 = vunpack.c.l.b16 %v147
  %v468 = vunpack.c.l.b16 %v148
  %v469 = vunpack.c.l.b16 %v149
  %v470 = vunpack.c.l.b16 %v150
  %v471 = vunpack.c.l.b16 %v151
  %v472 = vunpack.c.l.b16 %v152
  %v473 = vunpack.c.l.b16 %v153
  %v474 = vunpack.c.l.b16 %v154
  %v475 = vunpack.c.l.b16 %v155
  %v476 = vunpack.c.l.b16 %v156
  %v477 = vunpack.c.l.b16 %v157
  %v478 = vunpack.c.l.b16 %v158
  %v479 = vunpack.c.l.b16 %v159
  %v480 = vunpack.c.l.b16 %v160
  %v481 = vunpack.c.l.b16 %v161
  %v482 = vunpack.c.l.b16 %v162
  %v483 = vunpack.c.l.b16 %v163
  %v484 = vunpack.c.l.b16 %v164
  %v485 = vunpack.c.l.b16 %v165
  %v486 = vunpack.c.l.b16 %v166
  %v487 = vpack.c.b16 %v344, %v343
  %v488 = vpack.c.b16 %v346, %v345
  %v489 = vpack.c.b16 %v348, %v347
  %v490 = vpack.c.b16 %v350, %v349
  %v491 = vpack.c.b16 %v352, %v351
  %v492 = vpack.c.b16 %v354, %v353
  %v493 = vpack.c.b16 %v356, %v355
  %v494 = vpack.c.b16 %v358, %v357
  %v495 = vpack.c.b16 %v360, %v359
  %v496 = vpack.c.b16 %v362, %v361
  %v497 = vpack.c.b16 %v364, %v363
  %v498 = vpack.c.b16 %v366, %v365
  %v499 = vpack.c.b16 %v368, %v367
  %v500 = vpack.c.b16 %v370, %v369
  %v501 = vpack.c.b16 %v372, %v371
  %v502 = vpack.c.b16 %v374, %v373
  %v503 = vpack.c.b16 %v376, %v375
  %v504 = vpack.c.b16 %v378, %v377
  %v505 = vpack.c.b16 %v380, %v379
  %v506 = vpack.c.b16 %v382, %v381
  %v507 = vpack.c.b16 %v384, %v383
  %v508 = vpack.c.b16 %v386, %v385
  %v509 = vpack.c.b16 %v388, %v387
  %v510 = vpack.c.b16 %v390, %v389
  %v511 = vpack.c.b16 %v392, %v391
  %v512 = vpack.c.b16 %v394, %v393
  %v513 = vpack.c.b16 %v396, %v395
  %v514 = vpack.c.b16 %v398, %v397
  %v515 = vpack.c.b16 %v400, %v399
  %v516 = vpack.c.b16 %v402, %v401
  %v517 = vpack.c.b16 %v404, %v403
  %v518 = vpack.c.b16 %v406, %v405
  %v519 = vpack.c.b16 %v408, %v407
  %v520 = vpack.c.b16 %v410, %v409
  %v521 = vpack.c.b16 %v412, %v411
  %v522 = vpack.c.b16 %v414, %v413
  %v523 = vpack.c.b16 %v416, %v415
  %v524 = vpack.c.b16 %v418, %v417
  %v525 = vpack.c.b16 %v420, %v419
  %v526 = vpack.c.b16 %v422, %v421
  %v527 = vpack.c.b16 %v424, %v423
  %v528 = vpack.c.b16 %v426, %v425
  %v529 = vpack.c.b16 %v428, %v427
  %v530 = vpack.c.b16 %v430, %v429
  %v531 = vpack.c.b16 %v432, %v431
  %v532 = vpack.c.b16 %v434, %v433
  %v533 = vpack.c.b16 %v436, %v435
  %v534 = vpack.c.b16 %v438, %v437
  %v535 = vpack.c.b16 %v440, %v439
  %v536 = vpack.c.b16 %v442, %v441
  %v537 = vpack.c.b16 %v444, %v443
  %v538 = vpack.c.b16 %v446, %v445
  %v539 = vpack.c.b16 %v448, %v447
  %v540 = vpack.c.b16 %v450, %v449
  %v541 = vpack.c.b16 %v452, %v451
  %v542 = vpack.c.b16 %v454, %v453
  %v543 = vpack.c.b16 %v456, %v455
  %v544 = vpack.c.b16 %v458, %v457
  %v545 = vpack.c.b16 %v460, %v459
  %v546 = vpack.c.b16 %v462, %v461
  %v547 = vpack.c.b16 %v464, %v463
  %v548 = vpack.c.b16 %v466, %v465
  %v549 = vpack.c.b16 %v468, %v467
  %v550 = vpack.c.b16 %v470, %v469
  %v551 = vpack.c.b16 %v472, %v471
  %v552 = vpack.c.b16 %v474, %v473
  %v553 = vpack.c.b16 %v476, %v475
  %v554 = vpack.c.b16 %v478, %v477
  %v555 = vpack.c.b16 %v480, %v479
  %v556 = vpack.c.b16 %v482, %v481
  %v557 = vpack.c.b16 %v484, %v483
  %v558 = vpack.c.b16 %v486, %v485
  %631 = vmatprep.subr.bf16.mxu0 0
  %632 = vmatpush1.bf16.msra.mxu0 %v487
  %633 = vmatprep.subr.bf16.mxu0 0
  %634 = vmatpush1.bf16.msra.mxu0 %v488
  %635 = vmatprep.subr.bf16.mxu0 0
  %636 = vmatpush1.bf16.msra.mxu0 %v489
  %637 = vmatprep.subr.bf16.mxu0 0
  %638 = vmatpush1.bf16.msra.mxu0 %v490
  %639 = vmatprep.subr.bf16.mxu0 0
  %640 = vmatpush1.bf16.msra.mxu0 %v491
  %641 = vmatprep.subr.bf16.mxu0 0
  %642 = vmatpush1.bf16.msra.mxu0 %v492
  %643 = vmatprep.subr.bf16.mxu0 0
  %644 = vmatpush1.bf16.msra.mxu0 %v493
  %645 = vmatprep.subr.bf16.mxu0 0
  %646 = vmatpush1.bf16.msra.mxu0 %v494
  %647 = vmatprep.subr.bf16.mxu0 0
  %648 = vmatpush1.bf16.msra.mxu0 %v495
  %649 = vmatprep.subr.bf16.mxu0 0
  %650 = vmatpush1.bf16.msra.mxu0 %v496
  %651 = vmatprep.subr.bf16.mxu0 0
  %652 = vmatpush1.bf16.msra.mxu0 %v497
  %653 = vmatprep.subr.bf16.mxu0 0
  %654 = vmatpush1.bf16.msra.mxu0 %v498
  %655 = vmatprep.subr.bf16.mxu0 0
  %656 = vmatpush1.bf16.msra.mxu0 %v499
  %657 = vmatprep.subr.bf16.mxu0 0
  %658 = vmatpush1.bf16.msra.mxu0 %v500
  %659 = vmatprep.subr.bf16.mxu0 0
  %660 = vmatpush1.bf16.msra.mxu0 %v501
  %661 = vmatprep.subr.bf16.mxu0 0
  %662 = vmatpush1.bf16.msra.mxu0 %v502
  %663 = vmatprep.mubr.bf16.mxu0 %v182
  %664 = vmatmul.mubr.bf16.gmra.mrb[0].mxu0 %v181
  %v665 = vpop.f32.mrb[0].mxu0
  %v666 = vadd.f32 0.0, %v665
  %v667 = vpop.f32.mrb[0].mxu0
  %v668 = vpop.f32.mrb[0].mxu0
  %v669 = vpop.f32.mrb[0].mxu0
  %670 = vdwg.mxu0
  %671 = vmatprep.subr.bf16.mxu0 0
  %672 = vmatpush1.bf16.msra.mxu0 %v503
  %673 = vmatprep.subr.bf16.mxu0 0
  %674 = vmatpush1.bf16.msra.mxu0 %v504
  %675 = vmatprep.subr.bf16.mxu0 0
  %676 = vmatpush1.bf16.msra.mxu0 %v505
  %677 = vmatprep.subr.bf16.mxu0 0
  %678 = vmatpush1.bf16.msra.mxu0 %v506
  %679 = vmatprep.subr.bf16.mxu0 0
  %680 = vmatpush1.bf16.msra.mxu0 %v507
  %681 = vmatprep.subr.bf16.mxu0 0
  %682 = vmatpush1.bf16.msra.mxu0 %v508
  %683 = vmatprep.subr.bf16.mxu0 0
  %684 = vmatpush1.bf16.msra.mxu0 %v509
  %685 = vmatprep.subr.bf16.mxu0 0
  %686 = vmatpush1.bf16.msra.mxu0 %v510
  %687 = vmatprep.subr.bf16.mxu0 0
  %688 = vmatpush1.bf16.msra.mxu0 %v511
  %689 = vmatprep.subr.bf16.mxu0 0
  %690 = vmatpush1.bf16.msra.mxu0 %v512
  %691 = vmatprep.subr.bf16.mxu0 0
  %692 = vmatpush1.bf16.msra.mxu0 %v513
  %693 = vmatprep.subr.bf16.mxu0 0
  %694 = vmatpush1.bf16.msra.mxu0 %v514
  %695 = vmatprep.subr.bf16.mxu0 0
  %696 = vmatpush1.bf16.msra.mxu0 %v515
  %697 = vmatprep.subr.bf16.mxu0 0
  %698 = vmatpush1.bf16.msra.mxu0 %v516
  %699 = vmatprep.subr.bf16.mxu0 0
  %700 = vmatpush1.bf16.msra.mxu0 %v517
  %701 = vmatprep.subr.bf16.mxu0 0
  %702 = vmatpush1.bf16.msra.mxu0 %v518
  %703 = vmatprep.mubr.bf16.mxu0 %v184
  %704 = vmatmul.mubr.bf16.gmra.mrb[0].mxu0 %v183
  %v705 = vpop.f32.mrb[0].mxu0
  %v706 = vadd.f32 %v666, %v705
  %v707 = vpop.f32.mrb[0].mxu0
  %v708 = vpop.f32.mrb[0].mxu0
  %v709 = vpop.f32.mrb[0].mxu0
  %710 = vdwg.mxu0
  %711 = vmatprep.subr.bf16.mxu0 0
  %712 = vmatpush1.bf16.msra.mxu0 %v519
  %713 = vmatprep.subr.bf16.mxu0 0
  %714 = vmatpush1.bf16.msra.mxu0 %v520
  %715 = vmatprep.subr.bf16.mxu0 0
  %716 = vmatpush1.bf16.msra.mxu0 %v521
  %717 = vmatprep.subr.bf16.mxu0 0
  %718 = vmatpush1.bf16.msra.mxu0 %v522
  %719 = vmatprep.subr.bf16.mxu0 0
  %720 = vmatpush1.bf16.msra.mxu0 %v523
  %721 = vmatprep.subr.bf16.mxu0 0
  %722 = vmatpush1.bf16.msra.mxu0 %v524
  %723 = vmatprep.subr.bf16.mxu0 0
  %724 = vmatpush1.bf16.msra.mxu0 %v525
  %725 = vmatprep.subr.bf16.mxu0 0
  %726 = vmatpush1.bf16.msra.mxu0 %v526
  %727 = vmatprep.subr.bf16.mxu0 0
  %728 = vmatpush1.bf16.msra.mxu0 %v527
  %729 = vmatprep.subr.bf16.mxu0 0
  %730 = vmatpush1.bf16.msra.mxu0 %v528
  %731 = vmatprep.subr.bf16.mxu0 0
  %732 = vmatpush1.bf16.msra.mxu0 %v529
  %733 = vmatprep.subr.bf16.mxu0 0
  %734 = vmatpush1.bf16.msra.mxu0 %v530
  %735 = vmatprep.subr.bf16.mxu0 0
  %736 = vmatpush1.bf16.msra.mxu0 %v531
  %737 = vmatprep.subr.bf16.mxu0 0
  %738 = vmatpush1.bf16.msra.mxu0 %v532
  %739 = vmatprep.subr.bf16.mxu0 0
  %740 = vmatpush1.bf16.msra.mxu0 %v533
  %741 = vmatprep.subr.bf16.mxu0 0
  %742 = vmatpush1.bf16.msra.mxu0 %v534
  %743 = vmatprep.mubr.bf16.mxu0 %v186
  %744 = vmatmul.mubr.bf16.gmra.mrb[0].mxu0 %v185
  %v745 = vpop.f32.mrb[0].mxu0
  %v746 = vadd.f32 %v706, %v745
  %v747 = vpop.f32.mrb[0].mxu0
  %v748 = vpop.f32.mrb[0].mxu0
  %v749 = vpop.f32.mrb[0].mxu0
  %750 = vdwg.mxu0
  %751 = vmatprep.subr.bf16.mxu0 0
  %752 = vmatpush1.bf16.msra.mxu0 %v535
  %753 = vmatprep.subr.bf16.mxu0 0
  %754 = vmatpush1.bf16.msra.mxu0 %v536
  %755 = vmatprep.subr.bf16.mxu0 0
  %756 = vmatpush1.bf16.msra.mxu0 %v537
  %757 = vmatprep.subr.bf16.mxu0 0
  %758 = vmatpush1.bf16.msra.mxu0 %v538
  %759 = vmatprep.subr.bf16.mxu0 0
  %760 = vmatpush1.bf16.msra.mxu0 %v539
  %761 = vmatprep.subr.bf16.mxu0 0
  %762 = vmatpush1.bf16.msra.mxu0 %v540
  %763 = vmatprep.subr.bf16.mxu0 0
  %764 = vmatpush1.bf16.msra.mxu0 %v541
  %765 = vmatprep.subr.bf16.mxu0 0
  %766 = vmatpush1.bf16.msra.mxu0 %v542
  %767 = vmatprep.subr.bf16.mxu0 0
  %768 = vmatpush1.bf16.msra.mxu0 %v543
  %769 = vmatprep.subr.bf16.mxu0 0
  %770 = vmatpush1.bf16.msra.mxu0 %v544
  %771 = vmatprep.subr.bf16.mxu0 0
  %772 = vmatpush1.bf16.msra.mxu0 %v545
  %773 = vmatprep.subr.bf16.mxu0 0
  %774 = vmatpush1.bf16.msra.mxu0 %v546
  %775 = vmatprep.subr.bf16.mxu0 0
  %776 = vmatpush1.bf16.msra.mxu0 %v547
  %777 = vmatprep.subr.bf16.mxu0 0
  %778 = vmatpush1.bf16.msra.mxu0 %v548
  %779 = vmatprep.subr.bf16.mxu0 0
  %780 = vmatpush1.bf16.msra.mxu0 %v549
  %781 = vmatprep.subr.bf16.mxu0 0
  %782 = vmatpush1.bf16.msra.mxu0 %v550
  %783 = vmatprep.mubr.bf16.mxu0 %v188
  %784 = vmatmul.mubr.bf16.gmra.mrb[0].mxu0 %v187
  %v785 = vpop.f32.mrb[0].mxu0
  %v786 = vadd.f32 %v746, %v785
  %v787 = vpop.f32.mrb[0].mxu0
  %v788 = vpop.f32.mrb[0].mxu0
  %v789 = vpop.f32.mrb[0].mxu0
  %790 = vdwg.mxu0
  %791 = vmatprep.subr.bf16.mxu0 0
  %792 = vmatpush1.bf16.msra.mxu0 %v551
  %793 = vmatprep.subr.bf16.mxu0 0
  %794 = vmatpush1.bf16.msra.mxu0 %v552
  %795 = vmatprep.subr.bf16.mxu0 0
  %796 = vmatpush1.bf16.msra.mxu0 %v553
  %797 = vmatprep.subr.bf16.mxu0 0
  %798 = vmatpush1.bf16.msra.mxu0 %v554
  %799 = vmatprep.subr.bf16.mxu0 0
  %800 = vmatpush1.bf16.msra.mxu0 %v555
  %801 = vmatprep.subr.bf16.mxu0 0
  %802 = vmatpush1.bf16.msra.mxu0 %v556
  %803 = vmatprep.subr.bf16.mxu0 0
  %804 = vmatpush1.bf16.msra.mxu0 %v557
  %805 = vmatprep.subr.bf16.mxu0 0
  %806 = vmatpush1.bf16.msra.mxu0 %v558
  %807 = vmatprep.subr.bf16.mxu0 0
  %808 = vmatpush1.bf16.msra.mxu0 0
  %809 = vmatprep.subr.bf16.mxu0 0
  %810 = vmatpush1.bf16.msra.mxu0 0
  %811 = vmatprep.subr.bf16.mxu0 0
  %812 = vmatpush1.bf16.msra.mxu0 0
  %813 = vmatprep.subr.bf16.mxu0 0
  %814 = vmatpush1.bf16.msra.mxu0 0
  %815 = vmatprep.subr.bf16.mxu0 0
  %816 = vmatpush1.bf16.msra.mxu0 0
  %817 = vmatprep.subr.bf16.mxu0 0
  %818 = vmatpush1.bf16.msra.mxu0 0
  %819 = vmatprep.subr.bf16.mxu0 0
  %820 = vmatpush1.bf16.msra.mxu0 0
  %821 = vmatprep.subr.bf16.mxu0 0
  %822 = vmatpush1.bf16.msra.mxu0 0
  %823 = vmatprep.mubr.bf16.mxu0 0
  %824 = vmatmul.mubr.bf16.gmra.mrb[0].mxu0 %v189
  %v825 = vpop.f32.mrb[0].mxu0
  %v826 = vadd.f32 %v786, %v825
  %v827 = vpop.f32.mrb[0].mxu0
  %v828 = vpop.f32.mrb[0].mxu0
  %v829 = vpop.f32.mrb[0].mxu0
  %830 = vdwg.mxu0
  %v831 = vrot.slane %v826, 4
  %v832 = vadd.f32 %v826, %v831
  %v833 = vrot.slane %v832, 2
  %v834 = vadd.f32 %v832, %v833
  %v835 = vrot.slane %v834, 1
  %v836 = vadd.f32 %v834, %v835
  %v837 = vrcp.pop 8.0
  %v838 = vmul.f32 %v836, %v837
  %v839 = vsub.f32 %v826, %v838
  %v840 = vmul.f32 %v839, %v839
  %v841 = vrot.slane %v840, 4
  %v842 = vadd.f32 %v840, %v841
  %v843 = vrot.slane %v842, 2
  %v844 = vadd.f32 %v842, %v843
  %v845 = vrot.slane %v844, 1
  %v846 = vadd.f32 %v844, %v845
  %v847 = vmul.f32 %v846, %v837
  %v848 = vadd.f32 %v847, 1e-05
  %v849 = vrsqrt.pop %v848
  %v850 = vmul.f32 %v839, %v849
  %v851 = vld [vmem:[%s2] sm:$0x1]
  %v853 = vlaneseq
  %v854 = vshrl.u32 %v853, 7
  %v855 = vsub.s32 0, %v854
  %v856 = vrot.slane %v851, %v855
  %v858 = vmul.f32 %v850, %v856
  %v859 = vld [vmem:[%s3] sm:$0x1]
  %v861 = vlaneseq
  %v862 = vshrl.u32 %v861, 7
  %v863 = vsub.s32 0, %v862
  %v864 = vrot.slane %v859, %v863
  %v866 = vadd.f32 %v858, %v864
  %v867 = vmax.f32 %v866, 0.0
  %v868 = vpack.c.bf16 %v867, %v867
  %869 = vst [vmem:[%s4] sm:$0xf] %v868
  // Predicated region
  $region18: #{bisenetv2_forward.10} parent=0 // pred_check
    _
  $region19: #{bisenetv2_forward.10} parent=0 // pred_check_branch
    %871 = sbr.rel (0) target = $region21
  $region20: #{bisenetv2_forward.10} parent=0 // pred_region
    _
  $region21: #{bisenetv2_forward.10} parent=0 // pred_fallthru
    _
  // Predicated region
  $region22: #{bisenetv2_forward.10} parent=0 // pred_check
    _
  $region23: #{bisenetv2_forward.10} parent=0 // pred_check_branch
    %873 = sbr.rel (0) target = $region25
  $region24: #{bisenetv2_forward.10} parent=0 // pred_region
    _
  $region25: #{bisenetv2_forward.10} parent=0 // pred_fallthru
    _

// kernel: bisenetv2_forward.11
$region0: #{bisenetv2_forward.11}
  #allocation0 [shape = 'u32[]', space=smem, size = 0x4, offset = 0x4, fixed_abs, tag = 'smem constant byte address 0x4 - core index']
  #allocation1 [shape = 'u32[144,128]{1,0:T(1,128)}', space=vmem, size = 0x12000, scoped, tag = 'internal scratch']
  #allocation2 [shape = 'f32[1,1]{1,0:T(1,128)S(6)}', space=smem, size = 0x200, scoped, tag = 'scoped memory for bisenetv2_forward.11']
  %s0 = inlined_call_operand.vmem [shape: bf16[2,128,4], index: 0, kind: input, shape index: {}]
  %s1 = inlined_call_operand.vmem [shape: bf16[2,64,16], index: 1, kind: input, shape index: {}]
  %s2 = inlined_call_operand.vmem [shape: bf16[2,32,64], index: 2, kind: input, shape index: {}]
  %s3 = inlined_call_operand.vmem [shape: bf16[2,16,256], index: 3, kind: input, shape index: {}]
  %s4 = inlined_call_operand.vmem [shape: bf16[64,128], index: 4, kind: input, shape index: {}]
  %s5 = inlined_call_operand.vmem [shape: bf16[32,64], index: 5, kind: input, shape index: {}]
  %s6 = inlined_call_operand.vmem [shape: bf16[16,32], index: 6, kind: input, shape index: {}]
  %s7 = inlined_call_operand.vmem [shape: bf16[1,16], index: 7, kind: input, shape index: {}]
  %s8 = inlined_call_operand.vmem [shape: f32[64,1], index: 8, kind: input, shape index: {}]
  %s9 = inlined_call_operand.vmem [shape: f32[32,1], index: 9, kind: input, shape index: {}]
  %s10 = inlined_call_operand.vmem [shape: f32[16,1], index: 10, kind: input, shape index: {}]
  %s11 = inlined_call_operand.<no memory space> [shape: f32[1,1], index: 11, kind: input, shape index: {}]
  %s12 = inlined_call_operand.vmem [shape: bf16[4,16], index: 12, kind: input, shape index: {}]
  %s13 = inlined_call_operand.vmem [shape: bf16[16,64], index: 13, kind: input, shape index: {}]
  %s14 = inlined_call_operand.vmem [shape: bf16[64,256], index: 14, kind: input, shape index: {}]
  %s15 = inlined_call_operand.vmem [shape: bf16[256,1024], index: 15, kind: input, shape index: {}]
  %s16 = inlined_call_operand.vmem [shape: f32[2,1,1024], index: 16, kind: output, shape index: {}]
  %s17 = sld [smem:[#allocation0]]
  $region97: #{bisenetv2_forward.11} parent=0
    _
  %s19 = ssub.s32 1, %s17
  %s20 = scalar_select 0, %s19, %s17
  %21 = sst [smem:[#allocation2]] %s11
  loop: start=0, step=1, limit=4
  $region2: #{bisenetv2_forward.11} parent=0 // loop_pre_header
    _
  $region3: #{bisenetv2_forward.11} parent=0 // loop_header
    %s23 = sphi 0, %s27
    %p24 = scmp.ge.s32.totalorder %s23, 4
    %s33 = sphi 0, %s35
    %s36 = sphi 0, %s33
    %s37 = sphi 0, %s36
    %s53 = sphi 0, %s37
    %s59 = sphi 0, %s61
    %s62 = sphi 0, %s59
    %s63 = sphi 0, %s62
    %s79 = sphi 0, %s63
    %s85 = sphi 0, %s87
    %s88 = sphi 0, %s85
    %s89 = sphi 0, %s88
    %s105 = sphi 0, %s89
    %s111 = sphi 0, %s113
    %s114 = sphi 0, %s111
    %s115 = sphi 0, %s114
    %s131 = sphi 0, %s115
    %s135 = sphi 0, %s135
    %s137 = sphi 0, %s135
    %s138 = sphi 0, %s137
    %s152 = sphi 0, %s138
    %s156 = sphi 0, %s156
    %s158 = sphi 0, %s156
    %s159 = sphi 0, %s158
    %s173 = sphi 0, %s159
    %s177 = sphi 0, %s177
    %s179 = sphi 0, %s177
    %s180 = sphi 0, %s179
    %s194 = sphi 0, %s180
    %s198 = sphi 0, %s198
    %s200 = sphi 0, %s198
    %s201 = sphi 0, %s200
    %s215 = sphi 0, %s201
    %s219 = sphi 0, %s219
    %s221 = sphi 0, %s219
    %s222 = sphi 0, %s221
    %s236 = sphi 0, %s222
    %s240 = sphi 0, %s240
    %s242 = sphi 0, %s240
    %s243 = sphi 0, %s242
    %s257 = sphi 0, %s243
    %s261 = sphi 0, %s261
    %s263 = sphi 0, %s261
    %s264 = sphi 0, %s263
    %s278 = sphi 0, %s264
    %s282 = sphi 0, %s282
    %s284 = sphi 0, %s282
    %s285 = sphi 0, %s284
    %s299 = sphi 0, %s285
    %s303 = sphi 0, %s303
    %s305 = sphi 0, %s303
    %s306 = sphi 0, %s305
    %s320 = sphi 0, %s306
    %s324 = sphi 0, %s324
    %s326 = sphi 0, %s324
    %s327 = sphi 0, %s326
    %s341 = sphi 0, %s327
    %s345 = sphi 0, %s345
    %s347 = sphi 0, %s345
    %s348 = sphi 0, %s347
    %s362 = sphi 0, %s348
    %s366 = sphi 0, %s366
    %s368 = sphi 0, %s366
    %s369 = sphi 0, %s368
    %s383 = sphi 0, %s369
    %s389 = sphi 0, %s391
    %s392 = sphi 0, %s389
    %s393 = sphi 0, %s392
    %s409 = sphi 0, %s393
  $region4: #{bisenetv2_forward.11} parent=0 // loop_header_branch
    %26 = sbr.rel (%p24) target = $region8
  $region5: #{bisenetv2_forward.11} parent=0 // loop_body
    %s28 = ssub.s32 %s23, 1
    %s29 = ssub.s32 %s23, 2
    %s30 = sadd.s32 %s23, 1
    %s31 = ssub.s32 %s23, %s30
    %p32 = scmp.eq.s32.totalorder %s31, 0
    %s34 = sadd.s32 %s33, 1
    %s35 = scalar_select %p32, %s33, %s34
    %p38 = pneg %p32
    %p39 = scmp.eq.s32.totalorder %s23, 1
    %p40 = por %p38, %p39
    %p41 = scmp.ne.s32.totalorder %s33, %s36
    %p42 = scmp.eq.s32.totalorder %s23, 0
    %p43 = por %p41, %p42
    %p44 = scmp.ne.s32.totalorder %s33, %s36
    %p45 = scmp.eq.s32.totalorder %s28, 1
    %p46 = por %p44, %p45
    %p47 = scmp.ne.s32.totalorder %s36, %s37
    %p48 = scmp.eq.s32.totalorder %s28, 0
    %p49 = por %p47, %p48
    %p50 = scmp.ne.s32.totalorder %s36, %s37
    %p51 = scmp.eq.s32.totalorder %s29, 1
    %p52 = por %p50, %p51
    %p54 = scmp.ne.s32.totalorder %s37, %s53
    %p55 = scmp.eq.s32.totalorder %s29, 0
    %p56 = por %p54, %p55
    %s57 = ssub.s32 %s23, %s30
    %p58 = scmp.eq.s32.totalorder %s57, 0
    %s60 = sadd.s32 %s59, 1
    %s61 = scalar_select %p58, %s59, %s60
    %p64 = pneg %p58
    %p65 = scmp.eq.s32.totalorder %s23, 1
    %p66 = por %p64, %p65
    %p67 = scmp.ne.s32.totalorder %s59, %s62
    %p68 = scmp.eq.s32.totalorder %s23, 0
    %p69 = por %p67, %p68
    %p70 = scmp.ne.s32.totalorder %s59, %s62
    %p71 = scmp.eq.s32.totalorder %s28, 1
    %p72 = por %p70, %p71
    %p73 = scmp.ne.s32.totalorder %s62, %s63
    %p74 = scmp.eq.s32.totalorder %s28, 0
    %p75 = por %p73, %p74
    %p76 = scmp.ne.s32.totalorder %s62, %s63
    %p77 = scmp.eq.s32.totalorder %s29, 1
    %p78 = por %p76, %p77
    %p80 = scmp.ne.s32.totalorder %s63, %s79
    %p81 = scmp.eq.s32.totalorder %s29, 0
    %p82 = por %p80, %p81
    %s83 = ssub.s32 %s23, %s30
    %p84 = scmp.eq.s32.totalorder %s83, 0
    %s86 = sadd.s32 %s85, 1
    %s87 = scalar_select %p84, %s85, %s86
    %p90 = pneg %p84
    %p91 = scmp.eq.s32.totalorder %s23, 1
    %p92 = por %p90, %p91
    %p93 = scmp.ne.s32.totalorder %s85, %s88
    %p94 = scmp.eq.s32.totalorder %s23, 0
    %p95 = por %p93, %p94
    %p96 = scmp.ne.s32.totalorder %s85, %s88
    %p97 = scmp.eq.s32.totalorder %s28, 1
    %p98 = por %p96, %p97
    %p99 = scmp.ne.s32.totalorder %s88, %s89
    %p100 = scmp.eq.s32.totalorder %s28, 0
    %p101 = por %p99, %p100
    %p102 = scmp.ne.s32.totalorder %s88, %s89
    %p103 = scmp.eq.s32.totalorder %s29, 1
    %p104 = por %p102, %p103
    %p106 = scmp.ne.s32.totalorder %s89, %s105
    %p107 = scmp.eq.s32.totalorder %s29, 0
    %p108 = por %p106, %p107
    %s109 = ssub.s32 %s23, %s30
    %p110 = scmp.eq.s32.totalorder %s109, 0
    %s112 = sadd.s32 %s111, 1
    %s113 = scalar_select %p110, %s111, %s112
    %p116 = pneg %p110
    %p117 = scmp.eq.s32.totalorder %s23, 1
    %p118 = por %p116, %p117
    %p119 = scmp.ne.s32.totalorder %s111, %s114
    %p120 = scmp.eq.s32.totalorder %s23, 0
    %p121 = por %p119, %p120
    %p122 = scmp.ne.s32.totalorder %s111, %s114
    %p123 = scmp.eq.s32.totalorder %s28, 1
    %p124 = por %p122, %p123
    %p125 = scmp.ne.s32.totalorder %s114, %s115
    %p126 = scmp.eq.s32.totalorder %s28, 0
    %p127 = por %p125, %p126
    %p128 = scmp.ne.s32.totalorder %s114, %s115
    %p129 = scmp.eq.s32.totalorder %s29, 1
    %p130 = por %p128, %p129
    %p132 = scmp.ne.s32.totalorder %s115, %s131
    %p133 = scmp.eq.s32.totalorder %s29, 0
    %p134 = por %p132, %p133
    %s136 = sadd.s32 %s135, 1
    %p139 = scmp.eq.s32.totalorder %s23, 1
    %p140 = scmp.ne.s32.totalorder %s135, %s137
    %p141 = scmp.eq.s32.totalorder %s23, 0
    %p142 = por %p140, %p141
    %p143 = scmp.ne.s32.totalorder %s135, %s137
    %p144 = scmp.eq.s32.totalorder %s28, 1
    %p145 = por %p143, %p144
    %p146 = scmp.ne.s32.totalorder %s137, %s138
    %p147 = scmp.eq.s32.totalorder %s28, 0
    %p148 = por %p146, %p147
    %p149 = scmp.ne.s32.totalorder %s137, %s138
    %p150 = scmp.eq.s32.totalorder %s29, 1
    %p151 = por %p149, %p150
    %p153 = scmp.ne.s32.totalorder %s138, %s152
    %p154 = scmp.eq.s32.totalorder %s29, 0
    %p155 = por %p153, %p154
    %s157 = sadd.s32 %s156, 1
    %p160 = scmp.eq.s32.totalorder %s23, 1
    %p161 = scmp.ne.s32.totalorder %s156, %s158
    %p162 = scmp.eq.s32.totalorder %s23, 0
    %p163 = por %p161, %p162
    %p164 = scmp.ne.s32.totalorder %s156, %s158
    %p165 = scmp.eq.s32.totalorder %s28, 1
    %p166 = por %p164, %p165
    %p167 = scmp.ne.s32.totalorder %s158, %s159
    %p168 = scmp.eq.s32.totalorder %s28, 0
    %p169 = por %p167, %p168
    %p170 = scmp.ne.s32.totalorder %s158, %s159
    %p171 = scmp.eq.s32.totalorder %s29, 1
    %p172 = por %p170, %p171
    %p174 = scmp.ne.s32.totalorder %s159, %s173
    %p175 = scmp.eq.s32.totalorder %s29, 0
    %p176 = por %p174, %p175
    %s178 = sadd.s32 %s177, 1
    %p181 = scmp.eq.s32.totalorder %s23, 1
    %p182 = scmp.ne.s32.totalorder %s177, %s179
    %p183 = scmp.eq.s32.totalorder %s23, 0
    %p184 = por %p182, %p183
    %p185 = scmp.ne.s32.totalorder %s177, %s179
    %p186 = scmp.eq.s32.totalorder %s28, 1
    %p187 = por %p185, %p186
    %p188 = scmp.ne.s32.totalorder %s179, %s180
    %p189 = scmp.eq.s32.totalorder %s28, 0
    %p190 = por %p188, %p189
    %p191 = scmp.ne.s32.totalorder %s179, %s180
    %p192 = scmp.eq.s32.totalorder %s29, 1
    %p193 = por %p191, %p192
    %p195 = scmp.ne.s32.totalorder %s180, %s194
    %p196 = scmp.eq.s32.totalorder %s29, 0
    %p197 = por %p195, %p196
    %s199 = sadd.s32 %s198, 1
    %p202 = scmp.eq.s32.totalorder %s23, 1
    %p203 = scmp.ne.s32.totalorder %s198, %s200
    %p204 = scmp.eq.s32.totalorder %s23, 0
    %p205 = por %p203, %p204
    %p206 = scmp.ne.s32.totalorder %s198, %s200
    %p207 = scmp.eq.s32.totalorder %s28, 1
    %p208 = por %p206, %p207
    %p209 = scmp.ne.s32.totalorder %s200, %s201
    %p210 = scmp.eq.s32.totalorder %s28, 0
    %p211 = por %p209, %p210
    %p212 = scmp.ne.s32.totalorder %s200, %s201
    %p213 = scmp.eq.s32.totalorder %s29, 1
    %p214 = por %p212, %p213
    %p216 = scmp.ne.s32.totalorder %s201, %s215
    %p217 = scmp.eq.s32.totalorder %s29, 0
    %p218 = por %p216, %p217
    %s220 = sadd.s32 %s219, 1
    %p223 = scmp.eq.s32.totalorder %s23, 1
    %p224 = scmp.ne.s32.totalorder %s219, %s221
    %p225 = scmp.eq.s32.totalorder %s23, 0
    %p226 = por %p224, %p225
    %p227 = scmp.ne.s32.totalorder %s219, %s221
    %p228 = scmp.eq.s32.totalorder %s28, 1
    %p229 = por %p227, %p228
    %p230 = scmp.ne.s32.totalorder %s221, %s222
    %p231 = scmp.eq.s32.totalorder %s28, 0
    %p232 = por %p230, %p231
    %p233 = scmp.ne.s32.totalorder %s221, %s222
    %p234 = scmp.eq.s32.totalorder %s29, 1
    %p235 = por %p233, %p234
    %p237 = scmp.ne.s32.totalorder %s222, %s236
    %p238 = scmp.eq.s32.totalorder %s29, 0
    %p239 = por %p237, %p238
    %s241 = sadd.s32 %s240, 1
    %p244 = scmp.eq.s32.totalorder %s23, 1
    %p245 = scmp.ne.s32.totalorder %s240, %s242
    %p246 = scmp.eq.s32.totalorder %s23, 0
    %p247 = por %p245, %p246
    %p248 = scmp.ne.s32.totalorder %s240, %s242
    %p249 = scmp.eq.s32.totalorder %s28, 1
    %p250 = por %p248, %p249
    %p251 = scmp.ne.s32.totalorder %s242, %s243
    %p252 = scmp.eq.s32.totalorder %s28, 0
    %p253 = por %p251, %p252
    %p254 = scmp.ne.s32.totalorder %s242, %s243
    %p255 = scmp.eq.s32.totalorder %s29, 1
    %p256 = por %p254, %p255
    %p258 = scmp.ne.s32.totalorder %s243, %s257
    %p259 = scmp.eq.s32.totalorder %s29, 0
    %p260 = por %p258, %p259
    %s262 = sadd.s32 %s261, 1
    %p265 = scmp.eq.s32.totalorder %s23, 1
    %p266 = scmp.ne.s32.totalorder %s261, %s263
    %p267 = scmp.eq.s32.totalorder %s23, 0
    %p268 = por %p266, %p267
    %p269 = scmp.ne.s32.totalorder %s261, %s263
    %p270 = scmp.eq.s32.totalorder %s28, 1
    %p271 = por %p269, %p270
    %p272 = scmp.ne.s32.totalorder %s263, %s264
    %p273 = scmp.eq.s32.totalorder %s28, 0
    %p274 = por %p272, %p273
    %p275 = scmp.ne.s32.totalorder %s263, %s264
    %p276 = scmp.eq.s32.totalorder %s29, 1
    %p277 = por %p275, %p276
    %p279 = scmp.ne.s32.totalorder %s264, %s278
    %p280 = scmp.eq.s32.totalorder %s29, 0
    %p281 = por %p279, %p280
    %s283 = sadd.s32 %s282, 1
    %p286 = scmp.eq.s32.totalorder %s23, 1
    %p287 = scmp.ne.s32.totalorder %s282, %s284
    %p288 = scmp.eq.s32.totalorder %s23, 0
    %p289 = por %p287, %p288
    %p290 = scmp.ne.s32.totalorder %s282, %s284
    %p291 = scmp.eq.s32.totalorder %s28, 1
    %p292 = por %p290, %p291
    %p293 = scmp.ne.s32.totalorder %s284, %s285
    %p294 = scmp.eq.s32.totalorder %s28, 0
    %p295 = por %p293, %p294
    %p296 = scmp.ne.s32.totalorder %s284, %s285
    %p297 = scmp.eq.s32.totalorder %s29, 1
    %p298 = por %p296, %p297
    %p300 = scmp.ne.s32.totalorder %s285, %s299
    %p301 = scmp.eq.s32.totalorder %s29, 0
    %p302 = por %p300, %p301
    %s304 = sadd.s32 %s303, 1
    %p307 = scmp.eq.s32.totalorder %s23, 1
    %p308 = scmp.ne.s32.totalorder %s303, %s305
    %p309 = scmp.eq.s32.totalorder %s23, 0
    %p310 = por %p308, %p309
    %p311 = scmp.ne.s32.totalorder %s303, %s305
    %p312 = scmp.eq.s32.totalorder %s28, 1
    %p313 = por %p311, %p312
    %p314 = scmp.ne.s32.totalorder %s305, %s306
    %p315 = scmp.eq.s32.totalorder %s28, 0
    %p316 = por %p314, %p315
    %p317 = scmp.ne.s32.totalorder %s305, %s306
    %p318 = scmp.eq.s32.totalorder %s29, 1
    %p319 = por %p317, %p318
    %p321 = scmp.ne.s32.totalorder %s306, %s320
    %p322 = scmp.eq.s32.totalorder %s29, 0
    %p323 = por %p321, %p322
    %s325 = sadd.s32 %s324, 1
    %p328 = scmp.eq.s32.totalorder %s23, 1
    %p329 = scmp.ne.s32.totalorder %s324, %s326
    %p330 = scmp.eq.s32.totalorder %s23, 0
    %p331 = por %p329, %p330
    %p332 = scmp.ne.s32.totalorder %s324, %s326
    %p333 = scmp.eq.s32.totalorder %s28, 1
    %p334 = por %p332, %p333
    %p335 = scmp.ne.s32.totalorder %s326, %s327
    %p336 = scmp.eq.s32.totalorder %s28, 0
    %p337 = por %p335, %p336
    %p338 = scmp.ne.s32.totalorder %s326, %s327
    %p339 = scmp.eq.s32.totalorder %s29, 1
    %p340 = por %p338, %p339
    %p342 = scmp.ne.s32.totalorder %s327, %s341
    %p343 = scmp.eq.s32.totalorder %s29, 0
    %p344 = por %p342, %p343
    %s346 = sadd.s32 %s345, 1
    %p349 = scmp.eq.s32.totalorder %s23, 1
    %p350 = scmp.ne.s32.totalorder %s345, %s347
    %p351 = scmp.eq.s32.totalorder %s23, 0
    %p352 = por %p350, %p351
    %p353 = scmp.ne.s32.totalorder %s345, %s347
    %p354 = scmp.eq.s32.totalorder %s28, 1
    %p355 = por %p353, %p354
    %p356 = scmp.ne.s32.totalorder %s347, %s348
    %p357 = scmp.eq.s32.totalorder %s28, 0
    %p358 = por %p356, %p357
    %p359 = scmp.ne.s32.totalorder %s347, %s348
    %p360 = scmp.eq.s32.totalorder %s29, 1
    %p361 = por %p359, %p360
    %p363 = scmp.ne.s32.totalorder %s348, %s362
    %p364 = scmp.eq.s32.totalorder %s29, 0
    %p365 = por %p363, %p364
    %s367 = sadd.s32 %s366, 1
    %p370 = scmp.eq.s32.totalorder %s23, 1
    %p371 = scmp.ne.s32.totalorder %s366, %s368
    %p372 = scmp.eq.s32.totalorder %s23, 0
    %p373 = por %p371, %p372
    %p374 = scmp.ne.s32.totalorder %s366, %s368
    %p375 = scmp.eq.s32.totalorder %s28, 1
    %p376 = por %p374, %p375
    %p377 = scmp.ne.s32.totalorder %s368, %s369
    %p378 = scmp.eq.s32.totalorder %s28, 0
    %p379 = por %p377, %p378
    %p380 = scmp.ne.s32.totalorder %s368, %s369
    %p381 = scmp.eq.s32.totalorder %s29, 1
    %p382 = por %p380, %p381
    %p384 = scmp.ne.s32.totalorder %s369, %s383
    %p385 = scmp.eq.s32.totalorder %s29, 0
    %p386 = por %p384, %p385
    %s387 = ssub.s32 %s23, %s30
    %p388 = scmp.eq.s32.totalorder %s387, 0
    %s390 = sadd.s32 %s389, 1
    %s391 = scalar_select %p388, %s389, %s390
    %p394 = pneg %p388
    %p395 = scmp.eq.s32.totalorder %s23, 1
    %p396 = por %p394, %p395
    %p397 = scmp.ne.s32.totalorder %s389, %s392
    %p398 = scmp.eq.s32.totalorder %s23, 0
    %p399 = por %p397, %p398
    %p400 = scmp.ne.s32.totalorder %s389, %s392
    %p401 = scmp.eq.s32.totalorder %s28, 1
    %p402 = por %p400, %p401
    %p403 = scmp.ne.s32.totalorder %s392, %s393
    %p404 = scmp.eq.s32.totalorder %s28, 0
    %p405 = por %p403, %p404
    %p406 = scmp.ne.s32.totalorder %s392, %s393
    %p407 = scmp.eq.s32.totalorder %s29, 1
    %p408 = por %p406, %p407
    %p410 = scmp.ne.s32.totalorder %s393, %s409
    %p411 = scmp.eq.s32.totalorder %s29, 0
    %p412 = por %p410, %p411
    %p413 = scmp.le.s32.totalorder 1, %s23
    %p414 = scmp.lt.s32.totalorder %s23, 3
    %p415 = pnand %p413, %p414
    %p416 = pneg %p415
    // Predicated region
    $region9: #{bisenetv2_forward.11} parent=5 // pred_check
      _
    $region10: #{bisenetv2_forward.11} parent=5 // pred_check_branch
      %418 = sbr.rel (%p415) target = $region12
    $region11: #{bisenetv2_forward.11} parent=5 // pred_region
      %s419 = ssub.s32 %s23, 1
      // Predicated region
      $region13: #{bisenetv2_forward.11} parent=11 // pred_check
        %p420 = pneg %p148
      $region14: #{bisenetv2_forward.11} parent=11 // pred_check_branch
        %422 = sbr.rel (%p420) target = $region16
      $region15: #{bisenetv2_forward.11} parent=11 // pred_region
        _
      $region16: #{bisenetv2_forward.11} parent=11 // pred_fallthru
        _
      // Predicated region
      $region17: #{bisenetv2_forward.11} parent=11 // pred_check
        %p423 = pneg %p169
      $region18: #{bisenetv2_forward.11} parent=11 // pred_check_branch
        %425 = sbr.rel (%p423) target = $region20
      $region19: #{bisenetv2_forward.11} parent=11 // pred_region
        _
      $region20: #{bisenetv2_forward.11} parent=11 // pred_fallthru
        _
      // Predicated region
      $region21: #{bisenetv2_forward.11} parent=11 // pred_check
        %p426 = pneg %p190
      $region22: #{bisenetv2_forward.11} parent=11 // pred_check_branch
        %428 = sbr.rel (%p426) target = $region24
      $region23: #{bisenetv2_forward.11} parent=11 // pred_region
        _
      $region24: #{bisenetv2_forward.11} parent=11 // pred_fallthru
        _
      // Predicated region
      $region25: #{bisenetv2_forward.11} parent=11 // pred_check
        %p429 = pneg %p211
      $region26: #{bisenetv2_forward.11} parent=11 // pred_check_branch
        %431 = sbr.rel (%p429) target = $region28
      $region27: #{bisenetv2_forward.11} parent=11 // pred_region
        _
      $region28: #{bisenetv2_forward.11} parent=11 // pred_fallthru
        _
      // Predicated region
      $region29: #{bisenetv2_forward.11} parent=11 // pred_check
        %p432 = pneg %p232
      $region30: #{bisenetv2_forward.11} parent=11 // pred_check_branch
        %434 = sbr.rel (%p432) target = $region32
      $region31: #{bisenetv2_forward.11} parent=11 // pred_region
        _
      $region32: #{bisenetv2_forward.11} parent=11 // pred_fallthru
        _
      // Predicated region
      $region33: #{bisenetv2_forward.11} parent=11 // pred_check
        %p435 = pneg %p253
      $region34: #{bisenetv2_forward.11} parent=11 // pred_check_branch
        %437 = sbr.rel (%p435) target = $region36
      $region35: #{bisenetv2_forward.11} parent=11 // pred_region
        _
      $region36: #{bisenetv2_forward.11} parent=11 // pred_fallthru
        _
      // Predicated region
      $region37: #{bisenetv2_forward.11} parent=11 // pred_check
        %p438 = pneg %p274
      $region38: #{bisenetv2_forward.11} parent=11 // pred_check_branch
        %440 = sbr.rel (%p438) target = $region40
      $region39: #{bisenetv2_forward.11} parent=11 // pred_region
        _
      $region40: #{bisenetv2_forward.11} parent=11 // pred_fallthru
        _
      // Predicated region
      $region41: #{bisenetv2_forward.11} parent=11 // pred_check
        %p441 = pneg %p295
      $region42: #{bisenetv2_forward.11} parent=11 // pred_check_branch
        %443 = sbr.rel (%p441) target = $region44
      $region43: #{bisenetv2_forward.11} parent=11 // pred_region
        _
      $region44: #{bisenetv2_forward.11} parent=11 // pred_fallthru
        _
      // Predicated region
      $region45: #{bisenetv2_forward.11} parent=11 // pred_check
        %p444 = pneg %p316
      $region46: #{bisenetv2_forward.11} parent=11 // pred_check_branch
        %446 = sbr.rel (%p444) target = $region48
      $region47: #{bisenetv2_forward.11} parent=11 // pred_region
        _
      $region48: #{bisenetv2_forward.11} parent=11 // pred_fallthru
        _
      // Predicated region
      $region49: #{bisenetv2_forward.11} parent=11 // pred_check
        %p447 = pneg %p337
      $region50: #{bisenetv2_forward.11} parent=11 // pred_check_branch
        %449 = sbr.rel (%p447) target = $region52
      $region51: #{bisenetv2_forward.11} parent=11 // pred_region
        _
      $region52: #{bisenetv2_forward.11} parent=11 // pred_fallthru
        _
      // Predicated region
      $region53: #{bisenetv2_forward.11} parent=11 // pred_check
        %p450 = pneg %p358
      $region54: #{bisenetv2_forward.11} parent=11 // pred_check_branch
        %452 = sbr.rel (%p450) target = $region56
      $region55: #{bisenetv2_forward.11} parent=11 // pred_region
        _
      $region56: #{bisenetv2_forward.11} parent=11 // pred_fallthru
        _
      // Predicated region
      $region57: #{bisenetv2_forward.11} parent=11 // pred_check
        %p453 = pneg %p379
      $region58: #{bisenetv2_forward.11} parent=11 // pred_check_branch
        %455 = sbr.rel (%p453) target = $region60
      $region59: #{bisenetv2_forward.11} parent=11 // pred_region
        _
      $region60: #{bisenetv2_forward.11} parent=11 // pred_fallthru
        _
    $region12: #{bisenetv2_forward.11} parent=5 // pred_fallthru
      _
    %p456 = scmp.lt.s32.totalorder %s23, 2
    // Predicated region
    $region61: #{bisenetv2_forward.11} parent=5 // pred_check
      %p457 = pneg %p456
    $region62: #{bisenetv2_forward.11} parent=5 // pred_check_branch
      %459 = sbr.rel (%p457) target = $region64
    $region63: #{bisenetv2_forward.11} parent=5 // pred_region
      // Predicated region
      $region65: #{bisenetv2_forward.11} parent=63 // pred_check
        %p460 = pneg %p43
      $region66: #{bisenetv2_forward.11} parent=63 // pred_check_branch
        %462 = sbr.rel (%p460) target = $region68
      $region67: #{bisenetv2_forward.11} parent=63 // pred_region
        %p463 = scmp.lt.s32.totalorder %s23, 1
        %s464 = scalar_select %p463, %s23, 1
        %s465 = smul.addr %s464, 16
        %s466 = smul.addr %s465, 4
        %s467 = scalar_lea.vmem %s0, %s466
      $region68: #{bisenetv2_forward.11} parent=63 // pred_fallthru
        _
      // Predicated region
      $region69: #{bisenetv2_forward.11} parent=63 // pred_check
        %p468 = pneg %p69
      $region70: #{bisenetv2_forward.11} parent=63 // pred_check_branch
        %470 = sbr.rel (%p468) target = $region72
      $region71: #{bisenetv2_forward.11} parent=63 // pred_region
        %p471 = scmp.lt.s32.totalorder %s23, 1
        %s472 = scalar_select %p471, %s23, 1
        %s473 = smul.addr %s472, 8
        %s474 = smul.addr %s473, 4
        %s475 = scalar_lea.vmem %s1, %s474
      $region72: #{bisenetv2_forward.11} parent=63 // pred_fallthru
        _
      // Predicated region
      $region73: #{bisenetv2_forward.11} parent=63 // pred_check
        %p476 = pneg %p95
      $region74: #{bisenetv2_forward.11} parent=63 // pred_check_branch
        %478 = sbr.rel (%p476) target = $region76
      $region75: #{bisenetv2_forward.11} parent=63 // pred_region
        %p479 = scmp.lt.s32.totalorder %s23, 1
        %s480 = scalar_select %p479, %s23, 1
        %s481 = smul.addr %s480, 4
        %s482 = smul.addr %s481, 4
        %s483 = scalar_lea.vmem %s2, %s482
      $region76: #{bisenetv2_forward.11} parent=63 // pred_fallthru
        _
      // Predicated region
      $region77: #{bisenetv2_forward.11} parent=63 // pred_check
        %p484 = pneg %p121
      $region78: #{bisenetv2_forward.11} parent=63 // pred_check_branch
        %486 = sbr.rel (%p484) target = $region80
      $region79: #{bisenetv2_forward.11} parent=63 // pred_region
        %p487 = scmp.lt.s32.totalorder %s23, 1
        %s488 = scalar_select %p487, %s23, 1
        %s489 = smul.addr %s488, 4
        %s490 = smul.addr %s489, 4
        %s491 = scalar_lea.vmem %s3, %s490
      $region80: #{bisenetv2_forward.11} parent=63 // pred_fallthru
        _
    $region64: #{bisenetv2_forward.11} parent=5 // pred_fallthru
      _
    %p492 = scmp.le.s32.totalorder 1, %s23
    %p493 = scmp.lt.s32.totalorder %s23, 3
    %p494 = pnand %p492, %p493
    %p495 = pneg %p494
    // Predicated region
    $region81: #{bisenetv2_forward.11} parent=5 // pred_check
      _
    $region82: #{bisenetv2_forward.11} parent=5 // pred_check_branch
      %497 = sbr.rel (%p494) target = $region84
    $region83: #{bisenetv2_forward.11} parent=5 // pred_region
      %s498 = ssub.s32 %s23, 1
      %p499 = scmp.lt.s32.totalorder %s28, 1
      %s500 = scalar_select %p499, %s28, 1
      %s501 = smul.addr %s500, 16
      %s502 = smul.addr %s501, 4
      %s503 = scalar_lea.vmem %s0, %s502
      %p504 = pneg %p49
      %p505 = pneg %p46
      %p506 = scmp.lt.s32.totalorder %s28, 1
      %s507 = scalar_select %p506, %s28, 1
      %s508 = smul.addr %s507, 8
      %s509 = smul.addr %s508, 4
      %s510 = scalar_lea.vmem %s1, %s509
      %p511 = pneg %p75
      %p512 = pneg %p72
      %p513 = scmp.lt.s32.totalorder %s28, 1
      %s514 = scalar_select %p513, %s28, 1
      %s515 = smul.addr %s514, 4
      %s516 = smul.addr %s515, 4
      %s517 = scalar_lea.vmem %s2, %s516
      %p518 = pneg %p101
      %p519 = pneg %p98
      %p520 = scmp.lt.s32.totalorder %s28, 1
      %s521 = scalar_select %p520, %s28, 1
      %s522 = smul.addr %s521, 4
      %s523 = smul.addr %s522, 4
      %s524 = scalar_lea.vmem %s3, %s523
      %p525 = pneg %p127
      %p526 = pneg %p124
      %p527 = pneg %p148
      %p528 = pneg %p145
      %p529 = pneg %p169
      %p530 = pneg %p166
      %p531 = pneg %p190
      %p532 = pneg %p187
      %p533 = pneg %p211
      %p534 = pneg %p208
      %p535 = pneg %p232
      %p536 = pneg %p229
      %p537 = pneg %p253
      %p538 = pneg %p250
      %p539 = pneg %p274
      %p540 = pneg %p271
      %p541 = pneg %p295
      %p542 = pneg %p292
      %p543 = pneg %p316
      %p544 = pneg %p313
      %p545 = pneg %p337
      %p546 = pneg %p334
      %p547 = pneg %p358
      %p548 = pneg %p355
      %p549 = pneg %p379
      %p550 = pneg %p376
      %p551 = pneg %p405
      %p552 = pneg %p402
      %p553 = scmp.lt.s32.totalorder %s28, 1
      %s554 = scalar_select %p553, %s28, 1
      %s555 = smul.addr %s554, 8
      %s556 = scalar_lea.vmem %s16, %s555
      %p557 = scmp.lt.s32.totalorder %s28, 1
      %s558 = scalar_select %p557, %s28, 1
      %s559 = smul.addr %s558, 16
      %s560 = smul.addr %s559, 4
      %s561 = scalar_lea.vmem %s0, %s560
      %p562 = scmp.lt.s32.totalorder %s28, 1
      %s563 = scalar_select %p562, %s28, 1
      %s564 = smul.addr %s563, 8
      %s565 = smul.addr %s564, 4
      %s566 = scalar_lea.vmem %s1, %s565
      %p567 = scmp.lt.s32.totalorder %s28, 1
      %s568 = scalar_select %p567, %s28, 1
      %s569 = smul.addr %s568, 4
      %s570 = smul.addr %s569, 4
      %s571 = scalar_lea.vmem %s2, %s570
      %p572 = scmp.lt.s32.totalorder %s28, 1
      %s573 = scalar_select %p572, %s28, 1
      %s574 = smul.addr %s573, 4
      %s575 = smul.addr %s574, 4
      %s576 = scalar_lea.vmem %s3, %s575
      %p577 = scmp.lt.s32.totalorder %s28, 1
      %s578 = scalar_select %p577, %s28, 1
      %s579 = smul.addr %s578, 8
      %s580 = scalar_lea.vmem %s16, %s579
      %v582 = vld [vmem:[%s561] sm:$0xf]
      %v583 = vld [vmem:[%s561 + $0x4] sm:$0xf]
      %v584 = vld [vmem:[%s561 + $0x8] sm:$0xf]
      %v585 = vld [vmem:[%s561 + $0xc] sm:$0xf]
      %v586 = vld [vmem:[%s561 + $0x10] sm:$0xf]
      %v587 = vld [vmem:[%s561 + $0x14] sm:$0xf]
      %v588 = vld [vmem:[%s561 + $0x18] sm:$0xf]
      %v589 = vld [vmem:[%s561 + $0x1c] sm:$0xf]
      %v590 = vld [vmem:[%s561 + $0x20] sm:$0xf]
      %v591 = vld [vmem:[%s561 + $0x24] sm:$0xf]
      %v592 = vld [vmem:[%s561 + $0x28] sm:$0xf]
      %v593 = vld [vmem:[%s561 + $0x2c] sm:$0xf]
      %v594 = vld [vmem:[%s561 + $0x30] sm:$0xf]
      %v595 = vld [vmem:[%s561 + $0x34] sm:$0xf]
      %v596 = vld [vmem:[%s561 + $0x38] sm:$0xf]
      %v597 = vld [vmem:[%s561 + $0x3c] sm:$0xf]
      %v598 = vld [vmem:[%s4] sm:$0xf]
      %v599 = vld [vmem:[%s4 + $0x4] sm:$0xf]
      %v600 = vld [vmem:[%s4 + $0x8] sm:$0xf]
      %v601 = vld [vmem:[%s4 + $0xc] sm:$0xf]
      %v602 = vld [vmem:[%s4 + $0x10] sm:$0xf]
      %v603 = vld [vmem:[%s4 + $0x14] sm:$0xf]
      %v604 = vld [vmem:[%s4 + $0x18] sm:$0xf]
      %v605 = vld [vmem:[%s4 + $0x1c] sm:$0xf]
      %v606 = vld [vmem:[%s8] sm:$0xff]
      %v607 = vld [vmem:[%s8 + $0x8] sm:$0xff]
      %v608 = vld [vmem:[%s8 + $0x10] sm:$0xff]
      %v609 = vld [vmem:[%s8 + $0x18] sm:$0xff]
      %v610 = vld [vmem:[%s8 + $0x20] sm:$0xff]
      %v611 = vld [vmem:[%s8 + $0x28] sm:$0xff]
      %v612 = vld [vmem:[%s8 + $0x30] sm:$0xff]
      %v613 = vld [vmem:[%s8 + $0x38] sm:$0xff]
      %615 = vset.pattern.permute.xlu0 0
      %616 = vperm.xlu0 %615, %v606
      %v617 = vpop.permute.xlu0 %616
      %620 = vset.pattern.permute.xlu0 0
      %621 = vperm.xlu0 %620, %v607
      %v622 = vpop.permute.xlu0 %621
      %625 = vset.pattern.permute.xlu0 0
      %626 = vperm.xlu0 %625, %v608
      %v627 = vpop.permute.xlu0 %626
      %630 = vset.pattern.permute.xlu0 0
      %631 = vperm.xlu0 %630, %v609
      %v632 = vpop.permute.xlu0 %631
      %635 = vset.pattern.permute.xlu0 0
      %636 = vperm.xlu0 %635, %v610
      %v637 = vpop.permute.xlu0 %636
      %640 = vset.pattern.permute.xlu0 0
      %641 = vperm.xlu0 %640, %v611
      %v642 = vpop.permute.xlu0 %641
      %645 = vset.pattern.permute.xlu0 0
      %646 = vperm.xlu0 %645, %v612
      %v647 = vpop.permute.xlu0 %646
      %650 = vset.pattern.permute.xlu0 0
      %651 = vperm.xlu0 %650, %v613
      %v652 = vpop.permute.xlu0 %651
      %v662 = vunpack.c.l.b16 %v598
      %v663 = vunpack.c.l.b16 %v599
      %v664 = vunpack.c.l.b16 %v600
      %v665 = vunpack.c.l.b16 %v601
      %v666 = vunpack.c.l.b16 %v602
      %v667 = vunpack.c.l.b16 %v603
      %v668 = vunpack.c.l.b16 %v604
      %v669 = vunpack.c.l.b16 %v605
      %v670 = vpack.c.b16 %v663, %v662
      %v671 = vpack.c.b16 %v665, %v664
      %v672 = vpack.c.b16 %v667, %v666
      %v673 = vpack.c.b16 %v669, %v668
      %v694 = vunpack.c.l.b16 %v582
      %v695 = vunpack.c.l.b16 %v583
      %v696 = vunpack.c.l.b16 %v584
      %v697 = vunpack.c.l.b16 %v585
      %v698 = vunpack.c.l.b16 %v586
      %v699 = vunpack.c.l.b16 %v587
      %v700 = vunpack.c.l.b16 %v588
      %v701 = vunpack.c.l.b16 %v589
      %v702 = vunpack.c.l.b16 %v590
      %v703 = vunpack.c.l.b16 %v591
      %v704 = vunpack.c.l.b16 %v592
      %v705 = vunpack.c.l.b16 %v593
      %v706 = vunpack.c.l.b16 %v594
      %v707 = vunpack.c.l.b16 %v595
      %v708 = vunpack.c.l.b16 %v596
      %v709 = vunpack.c.l.b16 %v597
      %v710 = vpack.c.b16 %v695, %v694
      %v711 = vpack.c.b16 %v697, %v696
      %v712 = vpack.c.b16 %v699, %v698
      %v713 = vpack.c.b16 %v701, %v700
      %v714 = vpack.c.b16 %v703, %v702
      %v715 = vpack.c.b16 %v705, %v704
      %v716 = vpack.c.b16 %v707, %v706
      %v717 = vpack.c.b16 %v709, %v708
      %726 = vmatprep.subr.bf16.mxu0 0
      %727 = vmatpush1.bf16.msra.mxu0 %v710
      %728 = vmatprep.subr.bf16.mxu0 0
      %729 = vmatpush1.bf16.msra.mxu0 %v711
      %730 = vmatprep.subr.bf16.mxu0 0
      %731 = vmatpush1.bf16.msra.mxu0 %v712
      %732 = vmatprep.subr.bf16.mxu0 0
      %733 = vmatpush1.bf16.msra.mxu0 %v713
      %734 = vmatprep.subr.bf16.mxu0 0
      %735 = vmatpush1.bf16.msra.mxu0 %v714
      %736 = vmatprep.subr.bf16.mxu0 0
      %737 = vmatpush1.bf16.msra.mxu0 %v715
      %738 = vmatprep.subr.bf16.mxu0 0
      %739 = vmatpush1.bf16.msra.mxu0 %v716
      %740 = vmatprep.subr.bf16.mxu0 0
      %741 = vmatpush1.bf16.msra.mxu0 %v717
      %742 = vmatprep.subr.bf16.mxu0 0
      %743 = vmatpush1.bf16.msra.mxu0 0
      %744 = vmatprep.subr.bf16.mxu0 0
      %745 = vmatpush1.bf16.msra.mxu0 0
      %746 = vmatprep.subr.bf16.mxu0 0
      %747 = vmatpush1.bf16.msra.mxu0 0
      %748 = vmatprep.subr.bf16.mxu0 0
      %749 = vmatpush1.bf16.msra.mxu0 0
      %750 = vmatprep.subr.bf16.mxu0 0
      %751 = vmatpush1.bf16.msra.mxu0 0
      %752 = vmatprep.subr.bf16.mxu0 0
      %753 = vmatpush1.bf16.msra.mxu0 0
      %754 = vmatprep.subr.bf16.mxu0 0
      %755 = vmatpush1.bf16.msra.mxu0 0
      %756 = vmatprep.subr.bf16.mxu0 0
      %757 = vmatpush1.bf16.msra.mxu0 0
      %758 = vmatprep.mubr.bf16.mxu0 0
      %759 = vmatmul.mubr.bf16.gmra.mrb[0].mxu0 %v670
      %v760 = vpop.f32.mrb[0].mxu0
      %v761 = vadd.f32 %v617, %v760
      %v762 = vpop.f32.mrb[0].mxu0
      %v763 = vpop.f32.mrb[0].mxu0
      %v764 = vadd.f32 %v622, %v763
      %v765 = vpop.f32.mrb[0].mxu0
      %766 = vmatprep.mubr.bf16.mxu0 0
      %767 = vmatmul.mubr.bf16.gmra.mrb[0].mxu0 %v671
      %v768 = vpop.f32.mrb[0].mxu0
      %v769 = vadd.f32 %v627, %v768
      %v770 = vpop.f32.mrb[0].mxu0
      %v771 = vpop.f32.mrb[0].mxu0
      %v772 = vadd.f32 %v632, %v771
      %v773 = vpop.f32.mrb[0].mxu0
      %774 = vmatprep.mubr.bf16.mxu0 0
      %775 = vmatmul.mubr.bf16.gmra.mrb[0].mxu0 %v672
      %v776 = vpop.f32.mrb[0].mxu0
      %v777 = vadd.f32 %v637, %v776
      %v778 = vpop.f32.mrb[0].mxu0
      %v779 = vpop.f32.mrb[0].mxu0
      %v780 = vadd.f32 %v642, %v779
      %v781 = vpop.f32.mrb[0].mxu0
      %782 = vmatprep.mubr.bf16.mxu0 0
      %783 = vmatmul.mubr.bf16.gmra.mrb[0].mxu0 %v673
      %v784 = vpop.f32.mrb[0].mxu0
      %v785 = vadd.f32 %v647, %v784
      %v786 = vpop.f32.mrb[0].mxu0
      %v787 = vpop.f32.mrb[0].mxu0
      %v788 = vadd.f32 %v652, %v787
      %v789 = vpop.f32.mrb[0].mxu0
      %790 = vdwg.mxu0
      %v791 = vpack.c.bf16 %v764, %v761
      %v792 = vpack.c.bf16 %v772, %v769
      %v793 = vpack.c.bf16 %v780, %v777
      %v794 = vpack.c.bf16 %v788, %v785
      %v795 = vld [vmem:[%s12] sm:$0x3]
      %v796 = vld [vmem:[%s566] sm:$0xf]
      %v797 = vld [vmem:[%s566 + $0x4] sm:$0xf]
      %v798 = vld [vmem:[%s566 + $0x8] sm:$0xf]
      %v799 = vld [vmem:[%s566 + $0xc] sm:$0xf]
      %v800 = vld [vmem:[%s566 + $0x10] sm:$0xf]
      %v801 = vld [vmem:[%s566 + $0x14] sm:$0xf]
      %v802 = vld [vmem:[%s566 + $0x18] sm:$0xf]
      %v803 = vld [vmem:[%s566 + $0x1c] sm:$0xf]
      %v804 = vunpack.c.l.bf16 %v796
      %v805 = vunpack.c.l.bf16 %v797
      %v806 = vunpack.c.l.bf16 %v798
      %v807 = vunpack.c.l.bf16 %v799
      %v808 = vunpack.c.l.bf16 %v800
      %v809 = vunpack.c.l.bf16 %v801
      %v810 = vunpack.c.l.bf16 %v802
      %v811 = vunpack.c.l.bf16 %v803
      %vm812 = vcmask 31744
      %v814 = vsel %vm812, %v791, 0
      %v817 = vsel %vm812, %v792, 0
      %v820 = vsel %vm812, %v793, 0
      %v823 = vsel %vm812, %v794, 0
      %vm825 = vcmask 1041408
      %v827 = vsel %vm825, %v795, 0
      %829 = vmatprep.subr.bf16.mxu0 0
      %830 = vmatpush1.bf16.msra.mxu0 %v827
      %831 = vmatprep.subr.bf16.mxu0 0
      %832 = vmatpush1.bf16.msra.mxu0 0
      %833 = vmatprep.subr.bf16.mxu0 0
      %834 = vmatpush1.bf16.msra.mxu0 0
      %835 = vmatprep.subr.bf16.mxu0 0
      %836 = vmatpush1.bf16.msra.mxu0 0
      %837 = vmatprep.subr.bf16.mxu0 0
      %838 = vmatpush1.bf16.msra.mxu0 0
      %839 = vmatprep.subr.bf16.mxu0 0
      %840 = vmatpush1.bf16.msra.mxu0 0
      %841 = vmatprep.subr.bf16.mxu0 0
      %842 = vmatpush1.bf16.msra.mxu0 0
      %843 = vmatprep.subr.bf16.mxu0 0
      %844 = vmatpush1.bf16.msra.mxu0 0
      %845 = vmatprep.subr.bf16.mxu0 0
      %846 = vmatpush1.bf16.msra.mxu0 0
      %847 = vmatprep.subr.bf16.mxu0 0
      %848 = vmatpush1.bf16.msra.mxu0 0
      %849 = vmatprep.subr.bf16.mxu0 0
      %850 = vmatpush1.bf16.msra.mxu0 0
      %851 = vmatprep.subr.bf16.mxu0 0
      %852 = vmatpush1.bf16.msra.mxu0 0
      %853 = vmatprep.subr.bf16.mxu0 0
      %854 = vmatpush1.bf16.msra.mxu0 0
      %855 = vmatprep.subr.bf16.mxu0 0
      %856 = vmatpush1.bf16.msra.mxu0 0
      %857 = vmatprep.subr.bf16.mxu0 0
      %858 = vmatpush1.bf16.msra.mxu0 0
      %859 = vmatprep.subr.bf16.mxu0 0
      %860 = vmatpush1.bf16.msra.mxu0 0
      %861 = vmatprep.mubr.bf16.mxu0 0
      %862 = vmatmul.mubr.bf16.gmra.mrb[0].mxu0 %v814
      %v863 = vpop.f32.mrb[0].mxu0
      %v864 = vadd.f32 %v804, %v863
      %v865 = vpop.f32.mrb[0].mxu0
      %v866 = vpop.f32.mrb[0].mxu0
      %v867 = vadd.f32 %v805, %v866
      %v868 = vpop.f32.mrb[0].mxu0
      %869 = vmatprep.mubr.bf16.mxu0 0
      %870 = vmatmul.mubr.bf16.gmra.mrb[0].mxu0 %v817
      %v871 = vpop.f32.mrb[0].mxu0
      %v872 = vadd.f32 %v806, %v871
      %v873 = vpop.f32.mrb[0].mxu0
      %v874 = vpop.f32.mrb[0].mxu0
      %v875 = vadd.f32 %v807, %v874
      %v876 = vpop.f32.mrb[0].mxu0
      %877 = vmatprep.mubr.bf16.mxu0 0
      %878 = vmatmul.mubr.bf16.gmra.mrb[0].mxu0 %v820
      %v879 = vpop.f32.mrb[0].mxu0
      %v880 = vadd.f32 %v808, %v879
      %v881 = vpop.f32.mrb[0].mxu0
      %v882 = vpop.f32.mrb[0].mxu0
      %v883 = vadd.f32 %v809, %v882
      %v884 = vpop.f32.mrb[0].mxu0
      %885 = vmatprep.mubr.bf16.mxu0 0
      %886 = vmatmul.mubr.bf16.gmra.mrb[0].mxu0 %v823
      %v887 = vpop.f32.mrb[0].mxu0
      %v888 = vadd.f32 %v810, %v887
      %v889 = vpop.f32.mrb[0].mxu0
      %v890 = vpop.f32.mrb[0].mxu0
      %v891 = vadd.f32 %v811, %v890
      %v892 = vpop.f32.mrb[0].mxu0
      %893 = vdwg.mxu0
      %v894 = vpack.c.bf16 %v867, %v864
      %v895 = vpack.c.bf16 %v875, %v872
      %v896 = vpack.c.bf16 %v883, %v880
      %v897 = vpack.c.bf16 %v891, %v888
      %v898 = vld [vmem:[%s5] sm:$0xf]
      %v899 = vld [vmem:[%s5 + $0x4] sm:$0xf]
      %v900 = vld [vmem:[%s5 + $0x8] sm:$0xf]
      %v901 = vld [vmem:[%s5 + $0xc] sm:$0xf]
      %v902 = vld [vmem:[%s9] sm:$0xff]
      %v903 = vld [vmem:[%s9 + $0x8] sm:$0xff]
      %v904 = vld [vmem:[%s9 + $0x10] sm:$0xff]
      %v905 = vld [vmem:[%s9 + $0x18] sm:$0xff]
      %907 = vset.pattern.permute.xlu0 0
      %908 = vperm.xlu0 %907, %v902
      %v909 = vpop.permute.xlu0 %908
      %912 = vset.pattern.permute.xlu0 0
      %913 = vperm.xlu0 %912, %v903
      %v914 = vpop.permute.xlu0 %913
      %917 = vset.pattern.permute.xlu0 0
      %918 = vperm.xlu0 %917, %v904
      %v919 = vpop.permute.xlu0 %918
      %922 = vset.pattern.permute.xlu0 0
      %923 = vperm.xlu0 %922, %v905
      %v924 = vpop.permute.xlu0 %923
      %v930 = vunpack.c.l.b16 %v898
      %v931 = vunpack.c.l.b16 %v899
      %v932 = vunpack.c.l.b16 %v900
      %v933 = vunpack.c.l.b16 %v901
      %v934 = vpack.c.b16 %v931, %v930
      %v935 = vpack.c.b16 %v933, %v932
      %vm936 = vcmask 523264
      %v938 = vsel %vm936, %v934, 0
      %v941 = vsel %vm936, %v935, 0
      %943 = vmatprep.subr.bf16.mxu0 0
      %944 = vmatpush1.bf16.msra.mxu0 %v894
      %945 = vmatprep.subr.bf16.mxu0 0
      %946 = vmatpush1.bf16.msra.mxu0 %v895
      %947 = vmatprep.subr.bf16.mxu0 0
      %948 = vmatpush1.bf16.msra.mxu0 %v896
      %949 = vmatprep.subr.bf16.mxu0 0
      %950 = vmatpush1.bf16.msra.mxu0 %v897
      %951 = vmatprep.subr.bf16.mxu0 0
      %952 = vmatpush1.bf16.msra.mxu0 0
      %953 = vmatprep.subr.bf16.mxu0 0
      %954 = vmatpush1.bf16.msra.mxu0 0
      %955 = vmatprep.subr.bf16.mxu0 0
      %956 = vmatpush1.bf16.msra.mxu0 0
      %957 = vmatprep.subr.bf16.mxu0 0
      %958 = vmatpush1.bf16.msra.mxu0 0
      %959 = vmatprep.subr.bf16.mxu0 0
      %960 = vmatpush1.bf16.msra.mxu0 0
      %961 = vmatprep.subr.bf16.mxu0 0
      %962 = vmatpush1.bf16.msra.mxu0 0
      %963 = vmatprep.subr.bf16.mxu0 0
      %964 = vmatpush1.bf16.msra.mxu0 0
      %965 = vmatprep.subr.bf16.mxu0 0
      %966 = vmatpush1.bf16.msra.mxu0 0
      %967 = vmatprep.subr.bf16.mxu0 0
      %968 = vmatpush1.bf16.msra.mxu0 0
      %969 = vmatprep.subr.bf16.mxu0 0
      %970 = vmatpush1.bf16.msra.mxu0 0
      %971 = vmatprep.subr.bf16.mxu0 0
      %972 = vmatpush1.bf16.msra.mxu0 0
      %973 = vmatprep.subr.bf16.mxu0 0
      %974 = vmatpush1.bf16.msra.mxu0 0
      %975 = vmatprep.mubr.bf16.mxu0 0
      %976 = vmatmul.mubr.bf16.gmra.mrb[0].mxu0 %v938
      %v977 = vpop.f32.mrb[0].mxu0
      %v978 = vadd.f32 %v909, %v977
      %v979 = vpop.f32.mrb[0].mxu0
      %v980 = vpop.f32.mrb[0].mxu0
      %v981 = vadd.f32 %v914, %v980
      %v982 = vpop.f32.mrb[0].mxu0
      %983 = vmatprep.mubr.bf16.mxu0 0
      %984 = vmatmul.mubr.bf16.gmra.mrb[0].mxu0 %v941
      %v985 = vpop.f32.mrb[0].mxu0
      %v986 = vadd.f32 %v919, %v985
      %v987 = vpop.f32.mrb[0].mxu0
      %v988 = vpop.f32.mrb[0].mxu0
      %v989 = vadd.f32 %v924, %v988
      %v990 = vpop.f32.mrb[0].mxu0
      %991 = vdwg.mxu0
      %v992 = vpack.c.bf16 %v981, %v978
      %v993 = vpack.c.bf16 %v989, %v986
      %v994 = vld [vmem:[%s13] sm:$0xf]
      %v995 = vld [vmem:[%s13 + $0x4] sm:$0xf]
      %v996 = vld [vmem:[%s571] sm:$0xf]
      %v997 = vld [vmem:[%s571 + $0x4] sm:$0xf]
      %v998 = vld [vmem:[%s571 + $0x8] sm:$0xf]
      %v999 = vld [vmem:[%s571 + $0xc] sm:$0xf]
      %v1000 = vunpack.c.l.bf16 %v996
      %v1001 = vunpack.c.l.bf16 %v997
      %v1002 = vunpack.c.l.bf16 %v998
      %v1003 = vunpack.c.l.bf16 %v999
      %v1006 = vunpack.c.l.b16 %v994
      %v1007 = vunpack.c.l.b16 %v995
      %v1008 = vpack.c.b16 %v1007, %v1006
      %vm1010 = vcmask 130048
      %v1012 = vsel %vm1010, %v992, 0
      %v1015 = vsel %vm1010, %v993, 0
      %1017 = vmatprep.subr.bf16.mxu0 0
      %1018 = vmatpush1.bf16.msra.mxu0 %v1008
      %1019 = vmatprep.subr.bf16.mxu0 0
      %1020 = vmatpush1.bf16.msra.mxu0 0
      %1021 = vmatprep.subr.bf16.mxu0 0
      %1022 = vmatpush1.bf16.msra.mxu0 0
      %1023 = vmatprep.subr.bf16.mxu0 0
      %1024 = vmatpush1.bf16.msra.mxu0 0
      %1025 = vmatprep.subr.bf16.mxu0 0
      %1026 = vmatpush1.bf16.msra.mxu0 0
      %1027 = vmatprep.subr.bf16.mxu0 0
      %1028 = vmatpush1.bf16.msra.mxu0 0
      %1029 = vmatprep.subr.bf16.mxu0 0
      %1030 = vmatpush1.bf16.msra.mxu0 0
      %1031 = vmatprep.subr.bf16.mxu0 0
      %1032 = vmatpush1.bf16.msra.mxu0 0
      %1033 = vmatprep.subr.bf16.mxu0 0
      %1034 = vmatpush1.bf16.msra.mxu0 0
      %1035 = vmatprep.subr.bf16.mxu0 0
      %1036 = vmatpush1.bf16.msra.mxu0 0
      %1037 = vmatprep.subr.bf16.mxu0 0
      %1038 = vmatpush1.bf16.msra.mxu0 0
      %1039 = vmatprep.subr.bf16.mxu0 0
      %1040 = vmatpush1.bf16.msra.mxu0 0
      %1041 = vmatprep.subr.bf16.mxu0 0
      %1042 = vmatpush1.bf16.msra.mxu0 0
      %1043 = vmatprep.subr.bf16.mxu0 0
      %1044 = vmatpush1.bf16.msra.mxu0 0
      %1045 = vmatprep.subr.bf16.mxu0 0
      %1046 = vmatpush1.bf16.msra.mxu0 0
      %1047 = vmatprep.subr.bf16.mxu0 0
      %1048 = vmatpush1.bf16.msra.mxu0 0
      %1049 = vmatprep.mubr.bf16.mxu0 0
      %1050 = vmatmul.mubr.bf16.gmra.mrb[0].mxu0 %v1012
      %v1051 = vpop.f32.mrb[0].mxu0
      %v1052 = vadd.f32 %v1000, %v1051
      %v1053 = vpop.f32.mrb[0].mxu0
      %v1054 = vpop.f32.mrb[0].mxu0
      %v1055 = vadd.f32 %v1001, %v1054
      %v1056 = vpop.f32.mrb[0].mxu0
      %1057 = vmatprep.mubr.bf16.mxu0 0
      %1058 = vmatmul.mubr.bf16.gmra.mrb[0].mxu0 %v1015
      %v1059 = vpop.f32.mrb[0].mxu0
      %v1060 = vadd.f32 %v1002, %v1059
      %v1061 = vpop.f32.mrb[0].mxu0
      %v1062 = vpop.f32.mrb[0].mxu0
      %v1063 = vadd.f32 %v1003, %v1062
      %v1064 = vpop.f32.mrb[0].mxu0
      %1065 = vdwg.mxu0
      %v1066 = vpack.c.bf16 %v1055, %v1052
      %v1067 = vpack.c.bf16 %v1063, %v1060
      %v1068 = vld [vmem:[%s6] sm:$0xf]
      %v1069 = vld [vmem:[%s6 + $0x4] sm:$0xf]
      %v1070 = vld [vmem:[%s10] sm:$0xff]
      %v1071 = vld [vmem:[%s10 + $0x8] sm:$0xff]
      %1073 = vset.pattern.permute.xlu0 0
      %1074 = vperm.xlu0 %1073, %v1070
      %v1075 = vpop.permute.xlu0 %1074
      %1078 = vset.pattern.permute.xlu0 0
      %1079 = vperm.xlu0 %1078, %v1071
      %v1080 = vpop.permute.xlu0 %1079
      %v1084 = vunpack.c.l.b16 %v1068
      %v1085 = vunpack.c.l.b16 %v1069
      %v1086 = vpack.c.b16 %v1085, %v1084
      %vm1087 = vcmask 261120
      %v1089 = vsel %vm1087, %v1086, 0
      %1091 = vmatprep.subr.bf16.mxu0 0
      %1092 = vmatpush1.bf16.msra.mxu0 %v1066
      %1093 = vmatprep.subr.bf16.mxu0 0
      %1094 = vmatpush1.bf16.msra.mxu0 %v1067
      %1095 = vmatprep.subr.bf16.mxu0 0
      %1096 = vmatpush1.bf16.msra.mxu0 0
      %1097 = vmatprep.subr.bf16.mxu0 0
      %1098 = vmatpush1.bf16.msra.mxu0 0
      %1099 = vmatprep.subr.bf16.mxu0 0
      %1100 = vmatpush1.bf16.msra.mxu0 0
      %1101 = vmatprep.subr.bf16.mxu0 0
      %1102 = vmatpush1.bf16.msra.mxu0 0
      %1103 = vmatprep.subr.bf16.mxu0 0
      %1104 = vmatpush1.bf16.msra.mxu0 0
      %1105 = vmatprep.subr.bf16.mxu0 0
      %1106 = vmatpush1.bf16.msra.mxu0 0
      %1107 = vmatprep.subr.bf16.mxu0 0
      %1108 = vmatpush1.bf16.msra.mxu0 0
      %1109 = vmatprep.subr.bf16.mxu0 0
      %1110 = vmatpush1.bf16.msra.mxu0 0
      %1111 = vmatprep.subr.bf16.mxu0 0
      %1112 = vmatpush1.bf16.msra.mxu0 0
      %1113 = vmatprep.subr.bf16.mxu0 0
      %1114 = vmatpush1.bf16.msra.mxu0 0
      %1115 = vmatprep.subr.bf16.mxu0 0
      %1116 = vmatpush1.bf16.msra.mxu0 0
      %1117 = vmatprep.subr.bf16.mxu0 0
      %1118 = vmatpush1.bf16.msra.mxu0 0
      %1119 = vmatprep.subr.bf16.mxu0 0
      %1120 = vmatpush1.bf16.msra.mxu0 0
      %1121 = vmatprep.subr.bf16.mxu0 0
      %1122 = vmatpush1.bf16.msra.mxu0 0
      %1123 = vmatprep.mubr.bf16.mxu0 0
      %1124 = vmatmul.mubr.bf16.gmra.mrb[0].mxu0 %v1089
      %v1125 = vpop.f32.mrb[0].mxu0
      %v1126 = vadd.f32 %v1075, %v1125
      %v1127 = vpop.f32.mrb[0].mxu0
      %v1128 = vpop.f32.mrb[0].mxu0
      %v1129 = vadd.f32 %v1080, %v1128
      %v1130 = vpop.f32.mrb[0].mxu0
      %1131 = vdwg.mxu0
      %v1132 = vpack.c.bf16 %v1129, %v1126
      %v1133 = vld [vmem:[%s14] sm:$0xff]
      %v1134 = vld [vmem:[%s14 + $0x8] sm:$0xff]
      %v1135 = vld [vmem:[%s14 + $0x10] sm:$0xff]
      %v1136 = vld [vmem:[%s14 + $0x18] sm:$0xff]
      %v1137 = vld [vmem:[%s14 + $0x20] sm:$0xff]
      %v1138 = vld [vmem:[%s14 + $0x28] sm:$0xff]
      %v1139 = vld [vmem:[%s14 + $0x30] sm:$0xff]
      %v1140 = vld [vmem:[%s14 + $0x38] sm:$0xff]
      %v1141 = vld [vmem:[%s576] sm:$0xff]
      %v1142 = vld [vmem:[%s576 + $0x8] sm:$0xff]
      %v1143 = vunpack.c.l.bf16 %v1141
      %v1144 = vunpack.c.h.bf16 %v1141
      %v1145 = vunpack.c.l.bf16 %v1142
      %v1146 = vunpack.c.h.bf16 %v1142
      %v1155 = vunpack.c.l.b16 %v1133
      %v1156 = vunpack.c.h.b16 %v1133
      %v1157 = vunpack.c.l.b16 %v1134
      %v1158 = vunpack.c.h.b16 %v1134
      %v1159 = vunpack.c.l.b16 %v1135
      %v1160 = vunpack.c.h.b16 %v1135
      %v1161 = vunpack.c.l.b16 %v1136
      %v1162 = vunpack.c.h.b16 %v1136
      %v1163 = vunpack.c.l.b16 %v1137
      %v1164 = vunpack.c.h.b16 %v1137
      %v1165 = vunpack.c.l.b16 %v1138
      %v1166 = vunpack.c.h.b16 %v1138
      %v1167 = vunpack.c.l.b16 %v1139
      %v1168 = vunpack.c.h.b16 %v1139
      %v1169 = vunpack.c.l.b16 %v1140
      %v1170 = vunpack.c.h.b16 %v1140
      %v1171 = vpack.c.b16 %v1157, %v1155
      %v1172 = vpack.c.b16 %v1158, %v1156
      %v1173 = vpack.c.b16 %v1161, %v1159
      %v1174 = vpack.c.b16 %v1162, %v1160
      %v1175 = vpack.c.b16 %v1165, %v1163
      %v1176 = vpack.c.b16 %v1166, %v1164
      %v1177 = vpack.c.b16 %v1169, %v1167
      %v1178 = vpack.c.b16 %v1170, %v1168
      %v1188 = vsel %vm936, %v1132, 0
      %1190 = vmatprep.subr.bf16.mxu0 %v1172
      %1191 = vmatpush1.bf16.msra.mxu0 %v1171
      %1192 = vmatprep.subr.bf16.mxu0 %v1174
      %1193 = vmatpush1.bf16.msra.mxu0 %v1173
      %1194 = vmatprep.subr.bf16.mxu0 %v1176
      %1195 = vmatpush1.bf16.msra.mxu0 %v1175
      %1196 = vmatprep.subr.bf16.mxu0 %v1178
      %1197 = vmatpush1.bf16.msra.mxu0 %v1177
      %1198 = vmatprep.subr.bf16.mxu0 0
      %1199 = vmatpush1.bf16.msra.mxu0 0
      %1200 = vmatprep.subr.bf16.mxu0 0
      %1201 = vmatpush1.bf16.msra.mxu0 0
      %1202 = vmatprep.subr.bf16.mxu0 0
      %1203 = vmatpush1.bf16.msra.mxu0 0
      %1204 = vmatprep.subr.bf16.mxu0 0
      %1205 = vmatpush1.bf16.msra.mxu0 0
      %1206 = vmatprep.subr.bf16.mxu0 0
      %1207 = vmatpush1.bf16.msra.mxu0 0
      %1208 = vmatprep.subr.bf16.mxu0 0
      %1209 = vmatpush1.bf16.msra.mxu0 0
      %1210 = vmatprep.subr.bf16.mxu0 0
      %1211 = vmatpush1.bf16.msra.mxu0 0
      %1212 = vmatprep.subr.bf16.mxu0 0
      %1213 = vmatpush1.bf16.msra.mxu0 0
      %1214 = vmatprep.subr.bf16.mxu0 0
      %1215 = vmatpush1.bf16.msra.mxu0 0
      %1216 = vmatprep.subr.bf16.mxu0 0
      %1217 = vmatpush1.bf16.msra.mxu0 0
      %1218 = vmatprep.subr.bf16.mxu0 0
      %1219 = vmatpush1.bf16.msra.mxu0 0
      %1220 = vmatprep.subr.bf16.mxu0 0
      %1221 = vmatpush1.bf16.msra.mxu0 0
      %1222 = vmatprep.mubr.bf16.mxu0 0
      %1223 = vmatmul.mubr.bf16.gmra.mrb[0].mxu0 %v1188
      %v1224 = vpop.f32.mrb[0].mxu0
      %v1225 = vadd.f32 %v1143, %v1224
      %v1226 = vpop.f32.mrb[0].mxu0
      %v1227 = vadd.f32 %v1144, %v1226
      %v1228 = vpop.f32.mrb[0].mxu0
      %v1229 = vadd.f32 %v1145, %v1228
      %v1230 = vpop.f32.mrb[0].mxu0
      %v1231 = vadd.f32 %v1146, %v1230
      %1232 = vdwg.mxu0
      %v1233 = vld [vmem:[%s7] sm:$0x1]
      %v1234 = vpack.c.bf16 %v1229, %v1225
      %v1235 = vpack.c.bf16 %v1231, %v1227
      %s1236 = sld [smem:[#allocation2]]
      %v1237 = vstv %s1236
      %v1239 = vsel %vm1010, %v1233, 0
      %1241 = vmatprep.subr.bf16.mxu0 %v1235
      %1242 = vmatpush1.bf16.msra.mxu0 %v1234
      %1243 = vmatprep.subr.bf16.mxu0 0
      %1244 = vmatpush1.bf16.msra.mxu0 0
      %1245 = vmatprep.subr.bf16.mxu0 0
      %1246 = vmatpush1.bf16.msra.mxu0 0
      %1247 = vmatprep.subr.bf16.mxu0 0
      %1248 = vmatpush1.bf16.msra.mxu0 0
      %1249 = vmatprep.subr.bf16.mxu0 0
      %1250 = vmatpush1.bf16.msra.mxu0 0
      %1251 = vmatprep.subr.bf16.mxu0 0
      %1252 = vmatpush1.bf16.msra.mxu0 0
      %1253 = vmatprep.subr.bf16.mxu0 0
      %1254 = vmatpush1.bf16.msra.mxu0 0
      %1255 = vmatprep.subr.bf16.mxu0 0
      %1256 = vmatpush1.bf16.msra.mxu0 0
      %1257 = vmatprep.subr.bf16.mxu0 0
      %1258 = vmatpush1.bf16.msra.mxu0 0
      %1259 = vmatprep.subr.bf16.mxu0 0
      %1260 = vmatpush1.bf16.msra.mxu0 0
      %1261 = vmatprep.subr.bf16.mxu0 0
      %1262 = vmatpush1.bf16.msra.mxu0 0
      %1263 = vmatprep.subr.bf16.mxu0 0
      %1264 = vmatpush1.bf16.msra.mxu0 0
      %1265 = vmatprep.subr.bf16.mxu0 0
      %1266 = vmatpush1.bf16.msra.mxu0 0
      %1267 = vmatprep.subr.bf16.mxu0 0
      %1268 = vmatpush1.bf16.msra.mxu0 0
      %1269 = vmatprep.subr.bf16.mxu0 0
      %1270 = vmatpush1.bf16.msra.mxu0 0
      %1271 = vmatprep.subr.bf16.mxu0 0
      %1272 = vmatpush1.bf16.msra.mxu0 0
      %1273 = vmatprep.mubr.bf16.mxu0 0
      %1274 = vmatmul.mubr.bf16.gmra.mrb[0].mxu0 %v1239
      %v1275 = vpop.f32.mrb[0].mxu0
      %v1276 = vadd.f32 %v1237, %v1275
      %v1277 = vpop.f32.mrb[0].mxu0
      %v1278 = vadd.f32 %v1237, %v1277
      %v1279 = vpop.f32.mrb[0].mxu0
      %v1280 = vpop.f32.mrb[0].mxu0
      %1281 = vdwg.mxu0
      %v1282 = vpack.c.bf16 %v1276, %v1276
      %v1283 = vpack.c.bf16 %v1278, %v1278
      %v1284 = vld [vmem:[%s15] sm:$0xff]
      %v1285 = vld [vmem:[%s15 + $0x8] sm:$0xff]
      %v1286 = vld [vmem:[%s15 + $0x10] sm:$0xff]
      %v1287 = vld [vmem:[%s15 + $0x18] sm:$0xff]
      %v1288 = vld [vmem:[%s15 + $0x20] sm:$0xff]
      %v1289 = vld [vmem:[%s15 + $0x28] sm:$0xff]
      %v1290 = vld [vmem:[%s15 + $0x30] sm:$0xff]
      %v1291 = vld [vmem:[%s15 + $0x38] sm:$0xff]
      %v1292 = vld [vmem:[%s15 + $0x40] sm:$0xff]
      %v1293 = vld [vmem:[%s15 + $0x48] sm:$0xff]
      %v1294 = vld [vmem:[%s15 + $0x50] sm:$0xff]
      %v1295 = vld [vmem:[%s15 + $0x58] sm:$0xff]
      %v1296 = vld [vmem:[%s15 + $0x60] sm:$0xff]
      %v1297 = vld [vmem:[%s15 + $0x68] sm:$0xff]
      %v1298 = vld [vmem:[%s15 + $0x70] sm:$0xff]
      %v1299 = vld [vmem:[%s15 + $0x78] sm:$0xff]
      %v1300 = vld [vmem:[%s15 + $0x80] sm:$0xff]
      %v1301 = vld [vmem:[%s15 + $0x88] sm:$0xff]
      %v1302 = vld [vmem:[%s15 + $0x90] sm:$0xff]
      %v1303 = vld [vmem:[%s15 + $0x98] sm:$0xff]
      %v1304 = vld [vmem:[%s15 + $0xa0] sm:$0xff]
      %v1305 = vld [vmem:[%s15 + $0xa8] sm:$0xff]
      %v1306 = vld [vmem:[%s15 + $0xb0] sm:$0xff]
      %v1307 = vld [vmem:[%s15 + $0xb8] sm:$0xff]
      %v1308 = vld [vmem:[%s15 + $0xc0] sm:$0xff]
      %v1309 = vld [vmem:[%s15 + $0xc8] sm:$0xff]
      %v1310 = vld [vmem:[%s15 + $0xd0] sm:$0xff]
      %v1311 = vld [vmem:[%s15 + $0xd8] sm:$0xff]
      %v1312 = vld [vmem:[%s15 + $0xe0] sm:$0xff]
      %v1313 = vld [vmem:[%s15 + $0xe8] sm:$0xff]
      %v1314 = vld [vmem:[%s15 + $0xf0] sm:$0xff]
      %v1315 = vld [vmem:[%s15 + $0xf8] sm:$0xff]
      %v1316 = vld [vmem:[%s15 + $0x100] sm:$0xff]
      %v1317 = vld [vmem:[%s15 + $0x108] sm:$0xff]
      %v1318 = vld [vmem:[%s15 + $0x110] sm:$0xff]
      %v1319 = vld [vmem:[%s15 + $0x118] sm:$0xff]
      %v1320 = vld [vmem:[%s15 + $0x120] sm:$0xff]
      %v1321 = vld [vmem:[%s15 + $0x128] sm:$0xff]
      %v1322 = vld [vmem:[%s15 + $0x130] sm:$0xff]
      %v1323 = vld [vmem:[%s15 + $0x138] sm:$0xff]
      %v1324 = vld [vmem:[%s15 + $0x140] sm:$0xff]
      %v1325 = vld [vmem:[%s15 + $0x148] sm:$0xff]
      %v1326 = vld [vmem:[%s15 + $0x150] sm:$0xff]
      %v1327 = vld [vmem:[%s15 + $0x158] sm:$0xff]
      %v1328 = vld [vmem:[%s15 + $0x160] sm:$0xff]
      %v1329 = vld [vmem:[%s15 + $0x168] sm:$0xff]
      %v1330 = vld [vmem:[%s15 + $0x170] sm:$0xff]
      %v1331 = vld [vmem:[%s15 + $0x178] sm:$0xff]
      %v1332 = vld [vmem:[%s15 + $0x180] sm:$0xff]
      %v1333 = vld [vmem:[%s15 + $0x188] sm:$0xff]
      %v1334 = vld [vmem:[%s15 + $0x190] sm:$0xff]
      %v1335 = vld [vmem:[%s15 + $0x198] sm:$0xff]
      %v1336 = vld [vmem:[%s15 + $0x1a0] sm:$0xff]
      %v1337 = vld [vmem:[%s15 + $0x1a8] sm:$0xff]
      %v1338 = vld [vmem:[%s15 + $0x1b0] sm:$0xff]
      %v1339 = vld [vmem:[%s15 + $0x1b8] sm:$0xff]
      %v1340 = vld [vmem:[%s15 + $0x1c0] sm:$0xff]
      %v1341 = vld [vmem:[%s15 + $0x1c8] sm:$0xff]
      %v1342 = vld [vmem:[%s15 + $0x1d0] sm:$0xff]
      %v1343 = vld [vmem:[%s15 + $0x1d8] sm:$0xff]
      %v1344 = vld [vmem:[%s15 + $0x1e0] sm:$0xff]
      %v1345 = vld [vmem:[%s15 + $0x1e8] sm:$0xff]
      %v1346 = vld [vmem:[%s15 + $0x1f0] sm:$0xff]
      %v1347 = vld [vmem:[%s15 + $0x1f8] sm:$0xff]
      %v1348 = vld [vmem:[%s15 + $0x200] sm:$0xff]
      %v1349 = vld [vmem:[%s15 + $0x208] sm:$0xff]
      %v1350 = vld [vmem:[%s15 + $0x210] sm:$0xff]
      %v1351 = vld [vmem:[%s15 + $0x218] sm:$0xff]
      %v1352 = vld [vmem:[%s15 + $0x220] sm:$0xff]
      %v1353 = vld [vmem:[%s15 + $0x228] sm:$0xff]
      %v1354 = vld [vmem:[%s15 + $0x230] sm:$0xff]
      %v1355 = vld [vmem:[%s15 + $0x238] sm:$0xff]
      %v1356 = vld [vmem:[%s15 + $0x240] sm:$0xff]
      %v1357 = vld [vmem:[%s15 + $0x248] sm:$0xff]
      %v1358 = vld [vmem:[%s15 + $0x250] sm:$0xff]
      %v1359 = vld [vmem:[%s15 + $0x258] sm:$0xff]
      %v1360 = vld [vmem:[%s15 + $0x260] sm:$0xff]
      %v1361 = vld [vmem:[%s15 + $0x268] sm:$0xff]
      %v1362 = vld [vmem:[%s15 + $0x270] sm:$0xff]
      %v1363 = vld [vmem:[%s15 + $0x278] sm:$0xff]
      %v1364 = vld [vmem:[%s15 + $0x280] sm:$0xff]
      %v1365 = vld [vmem:[%s15 + $0x288] sm:$0xff]
      %v1366 = vld [vmem:[%s15 + $0x290] sm:$0xff]
      %v1367 = vld [vmem:[%s15 + $0x298] sm:$0xff]
      %v1368 = vld [vmem:[%s15 + $0x2a0] sm:$0xff]
      %v1369 = vld [vmem:[%s15 + $0x2a8] sm:$0xff]
      %v1370 = vld [vmem:[%s15 + $0x2b0] sm:$0xff]
      %v1371 = vld [vmem:[%s15 + $0x2b8] sm:$0xff]
      %v1372 = vld [vmem:[%s15 + $0x2c0] sm:$0xff]
      %v1373 = vld [vmem:[%s15 + $0x2c8] sm:$0xff]
      %v1374 = vld [vmem:[%s15 + $0x2d0] sm:$0xff]
      %v1375 = vld [vmem:[%s15 + $0x2d8] sm:$0xff]
      %v1376 = vld [vmem:[%s15 + $0x2e0] sm:$0xff]
      %v1377 = vld [vmem:[%s15 + $0x2e8] sm:$0xff]
      %v1378 = vld [vmem:[%s15 + $0x2f0] sm:$0xff]
      %v1379 = vld [vmem:[%s15 + $0x2f8] sm:$0xff]
      %v1380 = vld [vmem:[%s15 + $0x300] sm:$0xff]
      %v1381 = vld [vmem:[%s15 + $0x308] sm:$0xff]
      %v1382 = vld [vmem:[%s15 + $0x310] sm:$0xff]
      %v1383 = vld [vmem:[%s15 + $0x318] sm:$0xff]
      %v1384 = vld [vmem:[%s15 + $0x320] sm:$0xff]
      %v1385 = vld [vmem:[%s15 + $0x328] sm:$0xff]
      %v1386 = vld [vmem:[%s15 + $0x330] sm:$0xff]
      %v1387 = vld [vmem:[%s15 + $0x338] sm:$0xff]
      %v1388 = vld [vmem:[%s15 + $0x340] sm:$0xff]
      %v1389 = vld [vmem:[%s15 + $0x348] sm:$0xff]
      %v1390 = vld [vmem:[%s15 + $0x350] sm:$0xff]
      %v1391 = vld [vmem:[%s15 + $0x358] sm:$0xff]
      %v1392 = vld [vmem:[%s15 + $0x360] sm:$0xff]
      %v1393 = vld [vmem:[%s15 + $0x368] sm:$0xff]
      %v1394 = vld [vmem:[%s15 + $0x370] sm:$0xff]
      %v1395 = vld [vmem:[%s15 + $0x378] sm:$0xff]
      %v1396 = vld [vmem:[%s15 + $0x380] sm:$0xff]
      %v1397 = vld [vmem:[%s15 + $0x388] sm:$0xff]
      %v1398 = vld [vmem:[%s15 + $0x390] sm:$0xff]
      %v1399 = vld [vmem:[%s15 + $0x398] sm:$0xff]
      %v1400 = vld [vmem:[%s15 + $0x3a0] sm:$0xff]
      %v1401 = vld [vmem:[%s15 + $0x3a8] sm:$0xff]
      %v1402 = vld [vmem:[%s15 + $0x3b0] sm:$0xff]
      %v1403 = vld [vmem:[%s15 + $0x3b8] sm:$0xff]
      %v1404 = vld [vmem:[%s15 + $0x3c0] sm:$0xff]
      %v1405 = vld [vmem:[%s15 + $0x3c8] sm:$0xff]
      %v1406 = vld [vmem:[%s15 + $0x3d0] sm:$0xff]
      %v1407 = vld [vmem:[%s15 + $0x3d8] sm:$0xff]
      %v1408 = vld [vmem:[%s15 + $0x3e0] sm:$0xff]
      %v1409 = vld [vmem:[%s15 + $0x3e8] sm:$0xff]
      %v1410 = vld [vmem:[%s15 + $0x3f0] sm:$0xff]
      %v1411 = vld [vmem:[%s15 + $0x3f8] sm:$0xff]
      %v1540 = vunpack.c.l.b16 %v1284
      %v1541 = vunpack.c.h.b16 %v1284
      %v1542 = vunpack.c.l.b16 %v1285
      %v1543 = vunpack.c.h.b16 %v1285
      %v1544 = vunpack.c.l.b16 %v1286
      %v1545 = vunpack.c.h.b16 %v1286
      %v1546 = vunpack.c.l.b16 %v1287
      %v1547 = vunpack.c.h.b16 %v1287
      %v1548 = vunpack.c.l.b16 %v1288
      %v1549 = vunpack.c.h.b16 %v1288
      %v1550 = vunpack.c.l.b16 %v1289
      %v1551 = vunpack.c.h.b16 %v1289
      %v1552 = vunpack.c.l.b16 %v1290
      %v1553 = vunpack.c.h.b16 %v1290
      %v1554 = vunpack.c.l.b16 %v1291
      %v1555 = vunpack.c.h.b16 %v1291
      %v1556 = vunpack.c.l.b16 %v1292
      %v1557 = vunpack.c.h.b16 %v1292
      %v1558 = vunpack.c.l.b16 %v1293
      %v1559 = vunpack.c.h.b16 %v1293
      %v1560 = vunpack.c.l.b16 %v1294
      %v1561 = vunpack.c.h.b16 %v1294
      %v1562 = vunpack.c.l.b16 %v1295
      %v1563 = vunpack.c.h.b16 %v1295
      %v1564 = vunpack.c.l.b16 %v1296
      %v1565 = vunpack.c.h.b16 %v1296
      %v1566 = vunpack.c.l.b16 %v1297
      %v1567 = vunpack.c.h.b16 %v1297
      %v1568 = vunpack.c.l.b16 %v1298
      %v1569 = vunpack.c.h.b16 %v1298
      %v1570 = vunpack.c.l.b16 %v1299
      %v1571 = vunpack.c.h.b16 %v1299
      %v1572 = vunpack.c.l.b16 %v1300
      %v1573 = vunpack.c.h.b16 %v1300
      %v1574 = vunpack.c.l.b16 %v1301
      %v1575 = vunpack.c.h.b16 %v1301
      %v1576 = vunpack.c.l.b16 %v1302
      %v1577 = vunpack.c.h.b16 %v1302
      %v1578 = vunpack.c.l.b16 %v1303
      %v1579 = vunpack.c.h.b16 %v1303
      %v1580 = vunpack.c.l.b16 %v1304
      %v1581 = vunpack.c.h.b16 %v1304
      %v1582 = vunpack.c.l.b16 %v1305
      %v1583 = vunpack.c.h.b16 %v1305
      %v1584 = vunpack.c.l.b16 %v1306
      %v1585 = vunpack.c.h.b16 %v1306
      %v1586 = vunpack.c.l.b16 %v1307
      %v1587 = vunpack.c.h.b16 %v1307
      %v1588 = vunpack.c.l.b16 %v1308
      %v1589 = vunpack.c.h.b16 %v1308
      %v1590 = vunpack.c.l.b16 %v1309
      %v1591 = vunpack.c.h.b16 %v1309
      %v1592 = vunpack.c.l.b16 %v1310
      %v1593 = vunpack.c.h.b16 %v1310
      %v1594 = vunpack.c.l.b16 %v1311
      %v1595 = vunpack.c.h.b16 %v1311
      %v1596 = vunpack.c.l.b16 %v1312
      %v1597 = vunpack.c.h.b16 %v1312
      %v1598 = vunpack.c.l.b16 %v1313
      %v1599 = vunpack.c.h.b16 %v1313
      %v1600 = vunpack.c.l.b16 %v1314
      %v1601 = vunpack.c.h.b16 %v1314
      %v1602 = vunpack.c.l.b16 %v1315
      %v1603 = vunpack.c.h.b16 %v1315
      %v1604 = vunpack.c.l.b16 %v1316
      %v1605 = vunpack.c.h.b16 %v1316
      %v1606 = vunpack.c.l.b16 %v1317
      %v1607 = vunpack.c.h.b16 %v1317
      %v1608 = vunpack.c.l.b16 %v1318
      %v1609 = vunpack.c.h.b16 %v1318
      %v1610 = vunpack.c.l.b16 %v1319
      %v1611 = vunpack.c.h.b16 %v1319
      %v1612 = vunpack.c.l.b16 %v1320
      %v1613 = vunpack.c.h.b16 %v1320
      %v1614 = vunpack.c.l.b16 %v1321
      %v1615 = vunpack.c.h.b16 %v1321
      %v1616 = vunpack.c.l.b16 %v1322
      %v1617 = vunpack.c.h.b16 %v1322
      %v1618 = vunpack.c.l.b16 %v1323
      %v1619 = vunpack.c.h.b16 %v1323
      %v1620 = vunpack.c.l.b16 %v1324
      %v1621 = vunpack.c.h.b16 %v1324
      %v1622 = vunpack.c.l.b16 %v1325
      %v1623 = vunpack.c.h.b16 %v1325
      %v1624 = vunpack.c.l.b16 %v1326
      %v1625 = vunpack.c.h.b16 %v1326
      %v1626 = vunpack.c.l.b16 %v1327
      %v1627 = vunpack.c.h.b16 %v1327
      %v1628 = vunpack.c.l.b16 %v1328
      %v1629 = vunpack.c.h.b16 %v1328
      %v1630 = vunpack.c.l.b16 %v1329
      %v1631 = vunpack.c.h.b16 %v1329
      %v1632 = vunpack.c.l.b16 %v1330
      %v1633 = vunpack.c.h.b16 %v1330
      %v1634 = vunpack.c.l.b16 %v1331
      %v1635 = vunpack.c.h.b16 %v1331
      %v1636 = vunpack.c.l.b16 %v1332
      %v1637 = vunpack.c.h.b16 %v1332
      %v1638 = vunpack.c.l.b16 %v1333
      %v1639 = vunpack.c.h.b16 %v1333
      %v1640 = vunpack.c.l.b16 %v1334
      %v1641 = vunpack.c.h.b16 %v1334
      %v1642 = vunpack.c.l.b16 %v1335
      %v1643 = vunpack.c.h.b16 %v1335
      %v1644 = vunpack.c.l.b16 %v1336
      %v1645 = vunpack.c.h.b16 %v1336
      %v1646 = vunpack.c.l.b16 %v1337
      %v1647 = vunpack.c.h.b16 %v1337
      %v1648 = vunpack.c.l.b16 %v1338
      %v1649 = vunpack.c.h.b16 %v1338
      %v1650 = vunpack.c.l.b16 %v1339
      %v1651 = vunpack.c.h.b16 %v1339
      %v1652 = vunpack.c.l.b16 %v1340
      %v1653 = vunpack.c.h.b16 %v1340
      %v1654 = vunpack.c.l.b16 %v1341
      %v1655 = vunpack.c.h.b16 %v1341
      %v1656 = vunpack.c.l.b16 %v1342
      %v1657 = vunpack.c.h.b16 %v1342
      %v1658 = vunpack.c.l.b16 %v1343
      %v1659 = vunpack.c.h.b16 %v1343
      %v1660 = vunpack.c.l.b16 %v1344
      %v1661 = vunpack.c.h.b16 %v1344
      %v1662 = vunpack.c.l.b16 %v1345
      %v1663 = vunpack.c.h.b16 %v1345
      %v1664 = vunpack.c.l.b16 %v1346
      %v1665 = vunpack.c.h.b16 %v1346
      %v1666 = vunpack.c.l.b16 %v1347
      %v1667 = vunpack.c.h.b16 %v1347
      %v1668 = vunpack.c.l.b16 %v1348
      %v1669 = vunpack.c.h.b16 %v1348
      %v1670 = vunpack.c.l.b16 %v1349
      %v1671 = vunpack.c.h.b16 %v1349
      %v1672 = vunpack.c.l.b16 %v1350
      %v1673 = vunpack.c.h.b16 %v1350
      %v1674 = vunpack.c.l.b16 %v1351
      %v1675 = vunpack.c.h.b16 %v1351
      %v1676 = vunpack.c.l.b16 %v1352
      %v1677 = vunpack.c.h.b16 %v1352
      %v1678 = vunpack.c.l.b16 %v1353
      %v1679 = vunpack.c.h.b16 %v1353
      %v1680 = vunpack.c.l.b16 %v1354
      %v1681 = vunpack.c.h.b16 %v1354
      %v1682 = vunpack.c.l.b16 %v1355
      %v1683 = vunpack.c.h.b16 %v1355
      %v1684 = vunpack.c.l.b16 %v1356
      %v1685 = vunpack.c.h.b16 %v1356
      %v1686 = vunpack.c.l.b16 %v1357
      %v1687 = vunpack.c.h.b16 %v1357
      %v1688 = vunpack.c.l.b16 %v1358
      %v1689 = vunpack.c.h.b16 %v1358
      %v1690 = vunpack.c.l.b16 %v1359
      %v1691 = vunpack.c.h.b16 %v1359
      %v1692 = vunpack.c.l.b16 %v1360
      %v1693 = vunpack.c.h.b16 %v1360
      %v1694 = vunpack.c.l.b16 %v1361
      %v1695 = vunpack.c.h.b16 %v1361
      %v1696 = vunpack.c.l.b16 %v1362
      %v1697 = vunpack.c.h.b16 %v1362
      %v1698 = vunpack.c.l.b16 %v1363
      %v1699 = vunpack.c.h.b16 %v1363
      %v1700 = vunpack.c.l.b16 %v1364
      %v1701 = vunpack.c.h.b16 %v1364
      %v1702 = vunpack.c.l.b16 %v1365
      %v1703 = vunpack.c.h.b16 %v1365
      %v1704 = vunpack.c.l.b16 %v1366
      %v1705 = vunpack.c.h.b16 %v1366
      %v1706 = vunpack.c.l.b16 %v1367
      %v1707 = vunpack.c.h.b16 %v1367
      %v1708 = vunpack.c.l.b16 %v1368
      %v1709 = vunpack.c.h.b16 %v1368
      %v1710 = vunpack.c.l.b16 %v1369
      %v1711 = vunpack.c.h.b16 %v1369
      %v1712 = vunpack.c.l.b16 %v1370
      %v1713 = vunpack.c.h.b16 %v1370
      %v1714 = vunpack.c.l.b16 %v1371
      %v1715 = vunpack.c.h.b16 %v1371
      %v1716 = vunpack.c.l.b16 %v1372
      %v1717 = vunpack.c.h.b16 %v1372
      %v1718 = vunpack.c.l.b16 %v1373
      %v1719 = vunpack.c.h.b16 %v1373
      %v1720 = vunpack.c.l.b16 %v1374
      %v1721 = vunpack.c.h.b16 %v1374
      %v1722 = vunpack.c.l.b16 %v1375
      %v1723 = vunpack.c.h.b16 %v1375
      %v1724 = vunpack.c.l.b16 %v1376
      %v1725 = vunpack.c.h.b16 %v1376
      %v1726 = vunpack.c.l.b16 %v1377
      %v1727 = vunpack.c.h.b16 %v1377
      %v1728 = vunpack.c.l.b16 %v1378
      %v1729 = vunpack.c.h.b16 %v1378
      %v1730 = vunpack.c.l.b16 %v1379
      %v1731 = vunpack.c.h.b16 %v1379
      %v1732 = vunpack.c.l.b16 %v1380
      %v1733 = vunpack.c.h.b16 %v1380
      %v1734 = vunpack.c.l.b16 %v1381
      %v1735 = vunpack.c.h.b16 %v1381
      %v1736 = vunpack.c.l.b16 %v1382
      %v1737 = vunpack.c.h.b16 %v1382
      %v1738 = vunpack.c.l.b16 %v1383
      %v1739 = vunpack.c.h.b16 %v1383
      %v1740 = vunpack.c.l.b16 %v1384
      %v1741 = vunpack.c.h.b16 %v1384
      %v1742 = vunpack.c.l.b16 %v1385
      %v1743 = vunpack.c.h.b16 %v1385
      %v1744 = vunpack.c.l.b16 %v1386
      %v1745 = vunpack.c.h.b16 %v1386
      %v1746 = vunpack.c.l.b16 %v1387
      %v1747 = vunpack.c.h.b16 %v1387
      %v1748 = vunpack.c.l.b16 %v1388
      %v1749 = vunpack.c.h.b16 %v1388
      %v1750 = vunpack.c.l.b16 %v1389
      %v1751 = vunpack.c.h.b16 %v1389
      %v1752 = vunpack.c.l.b16 %v1390
      %v1753 = vunpack.c.h.b16 %v1390
      %v1754 = vunpack.c.l.b16 %v1391
      %v1755 = vunpack.c.h.b16 %v1391
      %v1756 = vunpack.c.l.b16 %v1392
      %v1757 = vunpack.c.h.b16 %v1392
      %v1758 = vunpack.c.l.b16 %v1393
      %v1759 = vunpack.c.h.b16 %v1393
      %v1760 = vunpack.c.l.b16 %v1394
      %v1761 = vunpack.c.h.b16 %v1394
      %v1762 = vunpack.c.l.b16 %v1395
      %v1763 = vunpack.c.h.b16 %v1395
      %v1764 = vunpack.c.l.b16 %v1396
      %v1765 = vunpack.c.h.b16 %v1396
      %v1766 = vunpack.c.l.b16 %v1397
      %v1767 = vunpack.c.h.b16 %v1397
      %v1768 = vunpack.c.l.b16 %v1398
      %v1769 = vunpack.c.h.b16 %v1398
      %v1770 = vunpack.c.l.b16 %v1399
      %v1771 = vunpack.c.h.b16 %v1399
      %v1772 = vunpack.c.l.b16 %v1400
      %v1773 = vunpack.c.h.b16 %v1400
      %v1774 = vunpack.c.l.b16 %v1401
      %v1775 = vunpack.c.h.b16 %v1401
      %v1776 = vunpack.c.l.b16 %v1402
      %v1777 = vunpack.c.h.b16 %v1402
      %v1778 = vunpack.c.l.b16 %v1403
      %v1779 = vunpack.c.h.b16 %v1403
      %v1780 = vunpack.c.l.b16 %v1404
      %v1781 = vunpack.c.h.b16 %v1404
      %v1782 = vunpack.c.l.b16 %v1405
      %v1783 = vunpack.c.h.b16 %v1405
      %v1784 = vunpack.c.l.b16 %v1406
      %v1785 = vunpack.c.h.b16 %v1406
      %v1786 = vunpack.c.l.b16 %v1407
      %v1787 = vunpack.c.h.b16 %v1407
      %v1788 = vunpack.c.l.b16 %v1408
      %v1789 = vunpack.c.h.b16 %v1408
      %v1790 = vunpack.c.l.b16 %v1409
      %v1791 = vunpack.c.h.b16 %v1409
      %v1792 = vunpack.c.l.b16 %v1410
      %v1793 = vunpack.c.h.b16 %v1410
      %v1794 = vunpack.c.l.b16 %v1411
      %v1795 = vunpack.c.h.b16 %v1411
      %v1796 = vpack.c.b16 %v1548, %v1540
      %v1797 = vpack.c.b16 %v1549, %v1541
      %v1798 = vpack.c.b16 %v1550, %v1542
      %v1799 = vpack.c.b16 %v1551, %v1543
      %v1800 = vpack.c.b16 %v1552, %v1544
      %v1801 = vpack.c.b16 %v1553, %v1545
      %v1802 = vpack.c.b16 %v1554, %v1546
      %v1803 = vpack.c.b16 %v1555, %v1547
      %v1804 = vpack.c.b16 %v1564, %v1556
      %v1805 = vpack.c.b16 %v1565, %v1557
      %v1806 = vpack.c.b16 %v1566, %v1558
      %v1807 = vpack.c.b16 %v1567, %v1559
      %v1808 = vpack.c.b16 %v1568, %v1560
      %v1809 = vpack.c.b16 %v1569, %v1561
      %v1810 = vpack.c.b16 %v1570, %v1562
      %v1811 = vpack.c.b16 %v1571, %v1563
      %v1812 = vpack.c.b16 %v1580, %v1572
      %v1813 = vpack.c.b16 %v1581, %v1573
      %v1814 = vpack.c.b16 %v1582, %v1574
      %v1815 = vpack.c.b16 %v1583, %v1575
      %v1816 = vpack.c.b16 %v1584, %v1576
      %v1817 = vpack.c.b16 %v1585, %v1577
      %v1818 = vpack.c.b16 %v1586, %v1578
      %v1819 = vpack.c.b16 %v1587, %v1579
      %v1820 = vpack.c.b16 %v1596, %v1588
      %v1821 = vpack.c.b16 %v1597, %v1589
      %v1822 = vpack.c.b16 %v1598, %v1590
      %v1823 = vpack.c.b16 %v1599, %v1591
      %v1824 = vpack.c.b16 %v1600, %v1592
      %v1825 = vpack.c.b16 %v1601, %v1593
      %v1826 = vpack.c.b16 %v1602, %v1594
      %v1827 = vpack.c.b16 %v1603, %v1595
      %v1828 = vpack.c.b16 %v1612, %v1604
      %v1829 = vpack.c.b16 %v1613, %v1605
      %v1830 = vpack.c.b16 %v1614, %v1606
      %v1831 = vpack.c.b16 %v1615, %v1607
      %v1832 = vpack.c.b16 %v1616, %v1608
      %v1833 = vpack.c.b16 %v1617, %v1609
      %v1834 = vpack.c.b16 %v1618, %v1610
      %v1835 = vpack.c.b16 %v1619, %v1611
      %v1836 = vpack.c.b16 %v1628, %v1620
      %v1837 = vpack.c.b16 %v1629, %v1621
      %v1838 = vpack.c.b16 %v1630, %v1622
      %v1839 = vpack.c.b16 %v1631, %v1623
      %v1840 = vpack.c.b16 %v1632, %v1624
      %v1841 = vpack.c.b16 %v1633, %v1625
      %v1842 = vpack.c.b16 %v1634, %v1626
      %v1843 = vpack.c.b16 %v1635, %v1627
      %v1844 = vpack.c.b16 %v1644, %v1636
      %v1845 = vpack.c.b16 %v1645, %v1637
      %v1846 = vpack.c.b16 %v1646, %v1638
      %v1847 = vpack.c.b16 %v1647, %v1639
      %v1848 = vpack.c.b16 %v1648, %v1640
      %v1849 = vpack.c.b16 %v1649, %v1641
      %v1850 = vpack.c.b16 %v1650, %v1642
      %v1851 = vpack.c.b16 %v1651, %v1643
      %v1852 = vpack.c.b16 %v1660, %v1652
      %v1853 = vpack.c.b16 %v1661, %v1653
      %v1854 = vpack.c.b16 %v1662, %v1654
      %v1855 = vpack.c.b16 %v1663, %v1655
      %v1856 = vpack.c.b16 %v1664, %v1656
      %v1857 = vpack.c.b16 %v1665, %v1657
      %v1858 = vpack.c.b16 %v1666, %v1658
      %v1859 = vpack.c.b16 %v1667, %v1659
      %v1860 = vpack.c.b16 %v1676, %v1668
      %v1861 = vpack.c.b16 %v1677, %v1669
      %v1862 = vpack.c.b16 %v1678, %v1670
      %v1863 = vpack.c.b16 %v1679, %v1671
      %v1864 = vpack.c.b16 %v1680, %v1672
      %v1865 = vpack.c.b16 %v1681, %v1673
      %v1866 = vpack.c.b16 %v1682, %v1674
      %v1867 = vpack.c.b16 %v1683, %v1675
      %v1868 = vpack.c.b16 %v1692, %v1684
      %v1869 = vpack.c.b16 %v1693, %v1685
      %v1870 = vpack.c.b16 %v1694, %v1686
      %v1871 = vpack.c.b16 %v1695, %v1687
      %v1872 = vpack.c.b16 %v1696, %v1688
      %v1873 = vpack.c.b16 %v1697, %v1689
      %v1874 = vpack.c.b16 %v1698, %v1690
      %v1875 = vpack.c.b16 %v1699, %v1691
      %v1876 = vpack.c.b16 %v1708, %v1700
      %v1877 = vpack.c.b16 %v1709, %v1701
      %v1878 = vpack.c.b16 %v1710, %v1702
      %v1879 = vpack.c.b16 %v1711, %v1703
      %v1880 = vpack.c.b16 %v1712, %v1704
      %v1881 = vpack.c.b16 %v1713, %v1705
      %v1882 = vpack.c.b16 %v1714, %v1706
      %v1883 = vpack.c.b16 %v1715, %v1707
      %v1884 = vpack.c.b16 %v1724, %v1716
      %v1885 = vpack.c.b16 %v1725, %v1717
      %v1886 = vpack.c.b16 %v1726, %v1718
      %v1887 = vpack.c.b16 %v1727, %v1719
      %v1888 = vpack.c.b16 %v1728, %v1720
      %v1889 = vpack.c.b16 %v1729, %v1721
      %v1890 = vpack.c.b16 %v1730, %v1722
      %v1891 = vpack.c.b16 %v1731, %v1723
      %v1892 = vpack.c.b16 %v1740, %v1732
      %v1893 = vpack.c.b16 %v1741, %v1733
      %v1894 = vpack.c.b16 %v1742, %v1734
      %v1895 = vpack.c.b16 %v1743, %v1735
      %v1896 = vpack.c.b16 %v1744, %v1736
      %v1897 = vpack.c.b16 %v1745, %v1737
      %v1898 = vpack.c.b16 %v1746, %v1738
      %v1899 = vpack.c.b16 %v1747, %v1739
      %v1900 = vpack.c.b16 %v1756, %v1748
      %v1901 = vpack.c.b16 %v1757, %v1749
      %v1902 = vpack.c.b16 %v1758, %v1750
      %v1903 = vpack.c.b16 %v1759, %v1751
      %v1904 = vpack.c.b16 %v1760, %v1752
      %v1905 = vpack.c.b16 %v1761, %v1753
      %v1906 = vpack.c.b16 %v1762, %v1754
      %v1907 = vpack.c.b16 %v1763, %v1755
      %v1908 = vpack.c.b16 %v1772, %v1764
      %v1909 = vpack.c.b16 %v1773, %v1765
      %v1910 = vpack.c.b16 %v1774, %v1766
      %v1911 = vpack.c.b16 %v1775, %v1767
      %v1912 = vpack.c.b16 %v1776, %v1768
      %v1913 = vpack.c.b16 %v1777, %v1769
      %v1914 = vpack.c.b16 %v1778, %v1770
      %v1915 = vpack.c.b16 %v1779, %v1771
      %v1916 = vpack.c.b16 %v1788, %v1780
      %v1917 = vpack.c.b16 %v1789, %v1781
      %v1918 = vpack.c.b16 %v1790, %v1782
      %v1919 = vpack.c.b16 %v1791, %v1783
      %v1920 = vpack.c.b16 %v1792, %v1784
      %v1921 = vpack.c.b16 %v1793, %v1785
      %v1922 = vpack.c.b16 %v1794, %v1786
      %v1923 = vpack.c.b16 %v1795, %v1787
      %2052 = vmatprep.subr.bf16.mxu0 %v1797
      %2053 = vmatpush1.bf16.msra.mxu0 %v1796
      %2054 = vmatprep.subr.bf16.mxu0 %v1805
      %2055 = vmatpush1.bf16.msra.mxu0 %v1804
      %2056 = vmatprep.subr.bf16.mxu0 %v1813
      %2057 = vmatpush1.bf16.msra.mxu0 %v1812
      %2058 = vmatprep.subr.bf16.mxu0 %v1821
      %2059 = vmatpush1.bf16.msra.mxu0 %v1820
      %2060 = vmatprep.subr.bf16.mxu0 %v1829
      %2061 = vmatpush1.bf16.msra.mxu0 %v1828
      %2062 = vmatprep.subr.bf16.mxu0 %v1837
      %2063 = vmatpush1.bf16.msra.mxu0 %v1836
      %2064 = vmatprep.subr.bf16.mxu0 %v1845
      %2065 = vmatpush1.bf16.msra.mxu0 %v1844
      %2066 = vmatprep.subr.bf16.mxu0 %v1853
      %2067 = vmatpush1.bf16.msra.mxu0 %v1852
      %2068 = vmatprep.subr.bf16.mxu0 %v1861
      %2069 = vmatpush1.bf16.msra.mxu0 %v1860
      %2070 = vmatprep.subr.bf16.mxu0 %v1869
      %2071 = vmatpush1.bf16.msra.mxu0 %v1868
      %2072 = vmatprep.subr.bf16.mxu0 %v1877
      %2073 = vmatpush1.bf16.msra.mxu0 %v1876
      %2074 = vmatprep.subr.bf16.mxu0 %v1885
      %2075 = vmatpush1.bf16.msra.mxu0 %v1884
      %2076 = vmatprep.subr.bf16.mxu0 %v1893
      %2077 = vmatpush1.bf16.msra.mxu0 %v1892
      %2078 = vmatprep.subr.bf16.mxu0 %v1901
      %2079 = vmatpush1.bf16.msra.mxu0 %v1900
      %2080 = vmatprep.subr.bf16.mxu0 %v1909
      %2081 = vmatpush1.bf16.msra.mxu0 %v1908
      %2082 = vmatprep.subr.bf16.mxu0 %v1917
      %2083 = vmatpush1.bf16.msra.mxu0 %v1916
      %2084 = vmatprep.mubr.bf16.mxu0 %v1283
      %2085 = vmatmul.mubr.bf16.gmra.mrb[0].mxu0 %v1282
      %v2086 = vpop.f32.mrb[0].mxu0
      %v2087 = vadd.f32 0.0, %v2086
      %v2088 = vpop.f32.mrb[0].mxu0
      %v2089 = vadd.f32 0.0, %v2088
      %v2090 = vpop.f32.mrb[0].mxu0
      %v2091 = vpop.f32.mrb[0].mxu0
      %2092 = vdwg.mxu0
      %2093 = vmatprep.subr.bf16.mxu0 %v1799
      %2094 = vmatpush1.bf16.msra.mxu0 %v1798
      %2095 = vmatprep.subr.bf16.mxu0 %v1807
      %2096 = vmatpush1.bf16.msra.mxu0 %v1806
      %2097 = vmatprep.subr.bf16.mxu0 %v1815
      %2098 = vmatpush1.bf16.msra.mxu0 %v1814
      %2099 = vmatprep.subr.bf16.mxu0 %v1823
      %2100 = vmatpush1.bf16.msra.mxu0 %v1822
      %2101 = vmatprep.subr.bf16.mxu0 %v1831
      %2102 = vmatpush1.bf16.msra.mxu0 %v1830
      %2103 = vmatprep.subr.bf16.mxu0 %v1839
      %2104 = vmatpush1.bf16.msra.mxu0 %v1838
      %2105 = vmatprep.subr.bf16.mxu0 %v1847
      %2106 = vmatpush1.bf16.msra.mxu0 %v1846
      %2107 = vmatprep.subr.bf16.mxu0 %v1855
      %2108 = vmatpush1.bf16.msra.mxu0 %v1854
      %2109 = vmatprep.subr.bf16.mxu0 %v1863
      %2110 = vmatpush1.bf16.msra.mxu0 %v1862
      %2111 = vmatprep.subr.bf16.mxu0 %v1871
      %2112 = vmatpush1.bf16.msra.mxu0 %v1870
      %2113 = vmatprep.subr.bf16.mxu0 %v1879
      %2114 = vmatpush1.bf16.msra.mxu0 %v1878
      %2115 = vmatprep.subr.bf16.mxu0 %v1887
      %2116 = vmatpush1.bf16.msra.mxu0 %v1886
      %2117 = vmatprep.subr.bf16.mxu0 %v1895
      %2118 = vmatpush1.bf16.msra.mxu0 %v1894
      %2119 = vmatprep.subr.bf16.mxu0 %v1903
      %2120 = vmatpush1.bf16.msra.mxu0 %v1902
      %2121 = vmatprep.subr.bf16.mxu0 %v1911
      %2122 = vmatpush1.bf16.msra.mxu0 %v1910
      %2123 = vmatprep.subr.bf16.mxu0 %v1919
      %2124 = vmatpush1.bf16.msra.mxu0 %v1918
      %2125 = vmatprep.mubr.bf16.mxu0 %v1283
      %2126 = vmatmul.mubr.bf16.gmra.mrb[0].mxu0 %v1282
      %v2127 = vpop.f32.mrb[0].mxu0
      %v2128 = vadd.f32 0.0, %v2127
      %v2129 = vpop.f32.mrb[0].mxu0
      %v2130 = vadd.f32 0.0, %v2129
      %v2131 = vpop.f32.mrb[0].mxu0
      %v2132 = vpop.f32.mrb[0].mxu0
      %2133 = vdwg.mxu0
      %2134 = vmatprep.subr.bf16.mxu0 %v1801
      %2135 = vmatpush1.bf16.msra.mxu0 %v1800
      %2136 = vmatprep.subr.bf16.mxu0 %v1809
      %2137 = vmatpush1.bf16.msra.mxu0 %v1808
      %2138 = vmatprep.subr.bf16.mxu0 %v1817
      %2139 = vmatpush1.bf16.msra.mxu0 %v1816
      %2140 = vmatprep.subr.bf16.mxu0 %v1825
      %2141 = vmatpush1.bf16.msra.mxu0 %v1824
      %2142 = vmatprep.subr.bf16.mxu0 %v1833
      %2143 = vmatpush1.bf16.msra.mxu0 %v1832
      %2144 = vmatprep.subr.bf16.mxu0 %v1841
      %2145 = vmatpush1.bf16.msra.mxu0 %v1840
      %2146 = vmatprep.subr.bf16.mxu0 %v1849
      %2147 = vmatpush1.bf16.msra.mxu0 %v1848
      %2148 = vmatprep.subr.bf16.mxu0 %v1857
      %2149 = vmatpush1.bf16.msra.mxu0 %v1856
      %2150 = vmatprep.subr.bf16.mxu0 %v1865
      %2151 = vmatpush1.bf16.msra.mxu0 %v1864
      %2152 = vmatprep.subr.bf16.mxu0 %v1873
      %2153 = vmatpush1.bf16.msra.mxu0 %v1872
      %2154 = vmatprep.subr.bf16.mxu0 %v1881
      %2155 = vmatpush1.bf16.msra.mxu0 %v1880
      %2156 = vmatprep.subr.bf16.mxu0 %v1889
      %2157 = vmatpush1.bf16.msra.mxu0 %v1888
      %2158 = vmatprep.subr.bf16.mxu0 %v1897
      %2159 = vmatpush1.bf16.msra.mxu0 %v1896
      %2160 = vmatprep.subr.bf16.mxu0 %v1905
      %2161 = vmatpush1.bf16.msra.mxu0 %v1904
      %2162 = vmatprep.subr.bf16.mxu0 %v1913
      %2163 = vmatpush1.bf16.msra.mxu0 %v1912
      %2164 = vmatprep.subr.bf16.mxu0 %v1921
      %2165 = vmatpush1.bf16.msra.mxu0 %v1920
      %2166 = vmatprep.mubr.bf16.mxu0 %v1283
      %2167 = vmatmul.mubr.bf16.gmra.mrb[0].mxu0 %v1282
      %v2168 = vpop.f32.mrb[0].mxu0
      %v2169 = vadd.f32 0.0, %v2168
      %v2170 = vpop.f32.mrb[0].mxu0
      %v2171 = vadd.f32 0.0, %v2170
      %v2172 = vpop.f32.mrb[0].mxu0
      %v2173 = vpop.f32.mrb[0].mxu0
      %2174 = vdwg.mxu0
      %2175 = vmatprep.subr.bf16.mxu0 %v1803
      %2176 = vmatpush1.bf16.msra.mxu0 %v1802
      %2177 = vmatprep.subr.bf16.mxu0 %v1811
      %2178 = vmatpush1.bf16.msra.mxu0 %v1810
      %2179 = vmatprep.subr.bf16.mxu0 %v1819
      %2180 = vmatpush1.bf16.msra.mxu0 %v1818
      %2181 = vmatprep.subr.bf16.mxu0 %v1827
      %2182 = vmatpush1.bf16.msra.mxu0 %v1826
      %2183 = vmatprep.subr.bf16.mxu0 %v1835
      %2184 = vmatpush1.bf16.msra.mxu0 %v1834
      %2185 = vmatprep.subr.bf16.mxu0 %v1843
      %2186 = vmatpush1.bf16.msra.mxu0 %v1842
      %2187 = vmatprep.subr.bf16.mxu0 %v1851
      %2188 = vmatpush1.bf16.msra.mxu0 %v1850
      %2189 = vmatprep.subr.bf16.mxu0 %v1859
      %2190 = vmatpush1.bf16.msra.mxu0 %v1858
      %2191 = vmatprep.subr.bf16.mxu0 %v1867
      %2192 = vmatpush1.bf16.msra.mxu0 %v1866
      %2193 = vmatprep.subr.bf16.mxu0 %v1875
      %2194 = vmatpush1.bf16.msra.mxu0 %v1874
      %2195 = vmatprep.subr.bf16.mxu0 %v1883
      %2196 = vmatpush1.bf16.msra.mxu0 %v1882
      %2197 = vmatprep.subr.bf16.mxu0 %v1891
      %2198 = vmatpush1.bf16.msra.mxu0 %v1890
      %2199 = vmatprep.subr.bf16.mxu0 %v1899
      %2200 = vmatpush1.bf16.msra.mxu0 %v1898
      %2201 = vmatprep.subr.bf16.mxu0 %v1907
      %2202 = vmatpush1.bf16.msra.mxu0 %v1906
      %2203 = vmatprep.subr.bf16.mxu0 %v1915
      %2204 = vmatpush1.bf16.msra.mxu0 %v1914
      %2205 = vmatprep.subr.bf16.mxu0 %v1923
      %2206 = vmatpush1.bf16.msra.mxu0 %v1922
      %2207 = vmatprep.mubr.bf16.mxu0 %v1283
      %2208 = vmatmul.mubr.bf16.gmra.mrb[0].mxu0 %v1282
      %v2209 = vpop.f32.mrb[0].mxu0
      %v2210 = vadd.f32 0.0, %v2209
      %v2211 = vpop.f32.mrb[0].mxu0
      %v2212 = vadd.f32 0.0, %v2211
      %v2213 = vpop.f32.mrb[0].mxu0
      %v2214 = vpop.f32.mrb[0].mxu0
      %2215 = vdwg.mxu0
      %v2216 = vsub.f32 0.0, %v2087
      %v2217 = vsub.f32 0.0, %v2089
      %v2218 = vsub.f32 0.0, %v2128
      %v2219 = vsub.f32 0.0, %v2130
      %v2220 = vsub.f32 0.0, %v2169
      %v2221 = vsub.f32 0.0, %v2171
      %v2222 = vsub.f32 0.0, %v2210
      %v2223 = vsub.f32 0.0, %v2212
      %v2224 = vmul.f32 %v2216, 1.442695
      %v2225 = vpow.pop %v2224
      %v2226 = vmul.f32 %v2217, 1.442695
      %v2227 = vpow.pop %v2226
      %v2228 = vmul.f32 %v2218, 1.442695
      %v2229 = vpow.pop %v2228
      %v2230 = vmul.f32 %v2219, 1.442695
      %v2231 = vpow.pop %v2230
      %v2232 = vmul.f32 %v2220, 1.442695
      %v2233 = vpow.pop %v2232
      %v2234 = vmul.f32 %v2221, 1.442695
      %v2235 = vpow.pop %v2234
      %v2236 = vmul.f32 %v2222, 1.442695
      %v2237 = vpow.pop %v2236
      %v2238 = vmul.f32 %v2223, 1.442695
      %v2239 = vpow.pop %v2238
      %v2240 = vadd.f32 %v2225, 1.0
      %v2241 = vadd.f32 %v2227, 1.0
      %v2242 = vadd.f32 %v2229, 1.0
      %v2243 = vadd.f32 %v2231, 1.0
      %v2244 = vadd.f32 %v2233, 1.0
      %v2245 = vadd.f32 %v2235, 1.0
      %v2246 = vadd.f32 %v2237, 1.0
      %v2247 = vadd.f32 %v2239, 1.0
      %v2248 = vrcp.pop %v2240
      %v2249 = vmul.f32 1.0, %v2248
      %v2250 = vrcp.pop %v2241
      %v2251 = vmul.f32 1.0, %v2250
      %v2252 = vrcp.pop %v2242
      %v2253 = vmul.f32 1.0, %v2252
      %v2254 = vrcp.pop %v2243
      %v2255 = vmul.f32 1.0, %v2254
      %v2256 = vrcp.pop %v2244
      %v2257 = vmul.f32 1.0, %v2256
      %v2258 = vrcp.pop %v2245
      %v2259 = vmul.f32 1.0, %v2258
      %v2260 = vrcp.pop %v2246
      %v2261 = vmul.f32 1.0, %v2260
      %v2262 = vrcp.pop %v2247
      %v2263 = vmul.f32 1.0, %v2262
      %v2272 = vcombine.low %v2249, %v2251
      %v2273 = vcombine.low %v2253, %v2255
      %v2274 = vcombine.low %v2257, %v2259
      %v2275 = vcombine.low %v2261, %v2263
      %v2277 = vunpack.c.l.s4 1966171168
      %v2278 = vunpack.c.0.s8 %v2277
      %v2279 = vlaneseq
      %v2280 = vshrl.u32 %v2279, 7
      %v2281 = vsub.s32 %v2278, %v2280
      %v2282 = vrot.slane %v2272, %v2281
      %v2284 = vunpack.c.l.s4 1966171168
      %v2285 = vunpack.c.0.s8 %v2284
      %v2286 = vlaneseq
      %v2287 = vshrl.u32 %v2286, 7
      %v2288 = vsub.s32 %v2285, %v2287
      %v2289 = vrot.slane %v2273, %v2288
      %v2291 = vunpack.c.l.s4 1966171168
      %v2292 = vunpack.c.0.s8 %v2291
      %v2293 = vlaneseq
      %v2294 = vshrl.u32 %v2293, 7
      %v2295 = vsub.s32 %v2292, %v2294
      %v2296 = vrot.slane %v2274, %v2295
      %v2298 = vunpack.c.l.s4 1966171168
      %v2299 = vunpack.c.0.s8 %v2298
      %v2300 = vlaneseq
      %v2301 = vshrl.u32 %v2300, 7
      %v2302 = vsub.s32 %v2299, %v2301
      %v2303 = vrot.slane %v2275, %v2302
      %v2304 = vcombine.low %v2282, %v2289
      %v2305 = vcombine.low %v2296, %v2303
      %v2307 = vunpack.c.l.s4 1966171168
      %v2308 = vunpack.c.0.s8 %v2307
      %v2309 = vlaneseq
      %v2310 = vshrl.u32 %v2309, 7
      %v2311 = vsub.s32 %v2308, %v2310
      %v2312 = vrot.slane %v2304, %v2311
      %v2314 = vunpack.c.l.s4 1966171168
      %v2315 = vunpack.c.0.s8 %v2314
      %v2316 = vlaneseq
      %v2317 = vshrl.u32 %v2316, 7
      %v2318 = vsub.s32 %v2315, %v2317
      %v2319 = vrot.slane %v2305, %v2318
      %v2320 = vcombine.low %v2312, %v2319
      %2322 = vst [vmem:[%s580] sm:$0xff] %v2320
      %p2323 = scmp.lt.s32.totalorder %s28, 1
      %s2324 = scalar_select %p2323, %s28, 1
      %s2325 = smul.addr %s2324, 8
      %s2326 = scalar_lea.vmem %s16, %s2325
      // Predicated region
      $region85: #{bisenetv2_forward.11} parent=83 // pred_check
        %p2327 = pneg %p402
      $region86: #{bisenetv2_forward.11} parent=83 // pred_check_branch
        %2329 = sbr.rel (%p2327) target = $region88
      $region87: #{bisenetv2_forward.11} parent=83 // pred_region
        _
      $region88: #{bisenetv2_forward.11} parent=83 // pred_fallthru
        _
    $region84: #{bisenetv2_forward.11} parent=5 // pred_fallthru
      _
    %p2330 = scmp.le.s32.totalorder 2, %s23
    // Predicated region
    $region89: #{bisenetv2_forward.11} parent=5 // pred_check
      %p2331 = pneg %p2330
    $region90: #{bisenetv2_forward.11} parent=5 // pred_check_branch
      %2333 = sbr.rel (%p2331) target = $region92
    $region91: #{bisenetv2_forward.11} parent=5 // pred_region
      %s2334 = ssub.s32 %s23, 2
      // Predicated region
      $region93: #{bisenetv2_forward.11} parent=91 // pred_check
        %p2335 = pneg %p408
      $region94: #{bisenetv2_forward.11} parent=91 // pred_check_branch
        %2337 = sbr.rel (%p2335) target = $region96
      $region95: #{bisenetv2_forward.11} parent=91 // pred_region
        %p2338 = scmp.lt.s32.totalorder %s29, 1
        %s2339 = scalar_select %p2338, %s29, 1
        %s2340 = smul.addr %s2339, 8
        %s2341 = scalar_lea.vmem %s16, %s2340
      $region96: #{bisenetv2_forward.11} parent=91 // pred_fallthru
        _
    $region92: #{bisenetv2_forward.11} parent=5 // pred_fallthru
      _
  $region6: #{bisenetv2_forward.11} parent=0 // loop_footer
    %s27 = sadd.s32 1, %s23
  $region7: #{bisenetv2_forward.11} parent=0 // loop_footer_branch
    %22 = sbr.rel target = $region3
  $region8: #{bisenetv2_forward.11} parent=0 // loop_exit
    _

</llo_original>
